<compile_context>
chip_gen: v7x
topology: tpu7x:2x2x1
jax: 0.10.0
libtpu: 0.0.40
codegen_flags: <defaults>
</compile_context>

<pallas_src>
import functools

import jax
import jax.numpy as jnp
from jax import lax
from jax.experimental import pallas as pl
from jax.experimental.pallas import tpu as pltpu


_TM = 512   # row tile for the (stride>1) conv3+shortcut kernel
_TN = 512   # output-channel tile for the (stride>1) conv3+shortcut kernel


def _round_up(x, m):
    return ((x + m - 1) // m) * m


@functools.lru_cache(maxsize=None)
def _vmem_limit_bytes():
    """Generation-dependent VMEM budget (~100 MiB on v5e/v6e, ~48 MiB on v7x)."""
    phys = 64 * 1024 * 1024
    try:
        info = pltpu.get_tpu_info()
        for name in ("vmem_capacity_bytes", "vmem_bytes", "vmem_size_bytes"):
            v = getattr(info, name, None)
            if v:
                phys = int(v)
                break
    except Exception:
        pass
    return int(max(32 * 1024 * 1024,
                   min(phys - 16 * 1024 * 1024, 100 * 1024 * 1024)))


# ----------------------------- in-kernel compute -----------------------------


def _conv12_compute(xp, mask, w1, b1, w2_ref, b2, *, Wp8, Lout):
    """conv1(1x1)+bn1+relu followed by a dense (stride-1) conv2(3x3)+bn2+relu.

    xp    : (Lpad, Cin) bf16  zero-padded image, flat = row*Wp8 + col,
                              Lpad = (H+3)*Wp8, Wp8 = round_up(W+2, 8)
    mask  : (Lpad, 1)   bf16  1 on interior pixels, 0 on padding
    w1    : (Cin, P)    bf16  conv1 weight with bn1 scale folded
    b1    : (1, P)      f32   folded bn1 bias
    w2_ref: (3, 3P, P)  bf16  conv2 taps, kh indexed, kw concatenated along K
    b2    : (1, P)      f32   folded bn2 bias
    returns dense y2 (Lout, P) f32, Lout = H*Wp8 (junk columns included).
    """
    y1 = jnp.dot(xp, w1, preferred_element_type=jnp.float32)
    # Single f32->bf16 cast; border mask folded in (re-zeros relu(b1) on pads).
    y1 = jnp.maximum(y1 + b1, 0.0).astype(jnp.bfloat16) * mask
    P = y1.shape[1]
    Lcat = Lout + 2 * Wp8
    # kw-outer restructure: kw=0 is free, kw=1,2 are the only misaligned
    # slices; concatenating the three kw copies along channels turns the nine
    # K=P matmuls into three K=3P matmuls whose kh*Wp8 row offsets are
    # sublane-aligned.
    y1cat = jnp.concatenate(
        [lax.slice(y1, (kw, 0), (kw + Lcat, P)) for kw in range(3)], axis=1)
    acc = jnp.dot(lax.slice(y1cat, (0, 0), (Lout, 3 * P)), w2_ref[0],
                  preferred_element_type=jnp.float32)
    acc = acc + jnp.dot(lax.slice(y1cat, (Wp8, 0), (Wp8 + Lout, 3 * P)),
                        w2_ref[1], preferred_element_type=jnp.float32)
    acc = acc + jnp.dot(lax.slice(y1cat, (2 * Wp8, 0), (2 * Wp8 + Lout, 3 * P)),
                        w2_ref[2], preferred_element_type=jnp.float32)
    return jnp.maximum(acc + b2, 0.0)


def _strip_cols(y2, *, H, W, Wp8):
    """(H*Wp8, P) dense padded-row layout -> (H*W, P); stays in VMEM."""
    P = y2.shape[1]
    return y2.reshape(H, Wp8, P)[:, :W, :].reshape(H * W, P)


# --------------------------------- kernels -----------------------------------


def _bneck_proj_kernel(x_ref, xv_ref, m_ref, w1_ref, b1_ref, w2_ref, b2_ref,
                       w3_ref, ws_ref, b_ref, o_ref, *, H, W, Wp8):
    """Fully fused bottleneck, projection shortcut, stride 1 (one image/step)."""
    y2 = _conv12_compute(x_ref[0], m_ref[...], w1_ref[...], b1_ref[...],
                         w2_ref, b2_ref[...], Wp8=Wp8, Lout=H * Wp8)
    y2v = _strip_cols(y2, H=H, W=W, Wp8=Wp8).astype(jnp.bfloat16)
    acc = jnp.dot(y2v, w3_ref[...], preferred_element_type=jnp.float32)
    acc = acc + jnp.dot(xv_ref[0], ws_ref[...], preferred_element_type=jnp.float32)
    o_ref[0] = jnp.maximum(acc + b_ref[...], 0.0).astype(o_ref.dtype)


def _bneck_ident_kernel(x_ref, xv_ref, m_ref, w1_ref, b1_ref, w2_ref, b2_ref,
                        w3_ref, b_ref, o_ref, *, H, W, Wp8):
    """Fully fused bottleneck, identity shortcut (vector add), stride 1."""
    y2 = _conv12_compute(x_ref[0], m_ref[...], w1_ref[...], b1_ref[...],
                         w2_ref, b2_ref[...], Wp8=Wp8, Lout=H * Wp8)
    y2v = _strip_cols(y2, H=H, W=W, Wp8=Wp8).astype(jnp.bfloat16)
    acc = jnp.dot(y2v, w3_ref[...], preferred_element_type=jnp.float32)
    o_ref[0] = jnp.maximum(acc + b_ref[...] + xv_ref[0].astype(jnp.float32),
                           0.0).astype(o_ref.dtype)


def _conv12_kernel(x_ref, m_ref, w1_ref, b1_ref, w2_ref, b2_ref, o_ref, *, Wp8, Lout):
    """conv1+bn1+relu -> dense conv2+bn2+relu only (stride>1 two-kernel path)."""
    y2 = _conv12_compute(x_ref[0], m_ref[...], w1_ref[...], b1_ref[...],
                         w2_ref, b2_ref[...], Wp8=Wp8, Lout=Lout)
    o_ref[0] = y2.astype(o_ref.dtype)


def _conv3_proj_kernel(y_ref, w3_ref, s_ref, ws_ref, b_ref, o_ref):
    """out = relu(y @ w3s + s @ wss + (b3 + bs)) -- stride>1 projection tail."""
    acc = jnp.dot(y_ref[...], w3_ref[...], preferred_element_type=jnp.float32)
    acc = acc + jnp.dot(s_ref[...], ws_ref[...], preferred_element_type=jnp.float32)
    o_ref[...] = jnp.maximum(acc + b_ref[...], 0.0).astype(o_ref.dtype)


# ------------------------------ kernel wrappers -------------------------------


def _fused_call(xp_flat, xv_flat, mask, p, *, H, W, Wp8, out_dtype):
    N, Lpad, Cin = xp_flat.shape
    planes = p["w1s"].shape[1]
    Cout = p["w3s"].shape[1]
    L = H * W
    has_proj = "wss" in p

    common = [
        pl.BlockSpec((1, Lpad, Cin), lambda n: (n, 0, 0)),            # padded x
        pl.BlockSpec((1, L, Cin), lambda n: (n, 0, 0)),               # valid x (shortcut)
        pl.BlockSpec((Lpad, 1), lambda n: (0, 0)),                    # border mask (bf16)
        pl.BlockSpec((Cin, planes), lambda n: (0, 0)),                # w1s
        pl.BlockSpec((1, planes), lambda n: (0, 0)),                  # b1
        pl.BlockSpec((3, 3 * planes, planes), lambda n: (0, 0, 0)),   # w2s (K-concat)
        pl.BlockSpec((1, planes), lambda n: (0, 0)),                  # b2
        pl.BlockSpec((planes, Cout), lambda n: (0, 0)),               # w3s
    ]
    if has_proj:
        kernel = functools.partial(_bneck_proj_kernel, H=H, W=W, Wp8=Wp8)
        in_specs = common + [pl.BlockSpec((Cin, Cout), lambda n: (0, 0)),   # wss
                             pl.BlockSpec((1, Cout), lambda n: (0, 0))]     # b3+bss
        args = (xp_flat, xv_flat, mask, p["w1s"], p["b1"], p["w2s"], p["b2"],
                p["w3s"], p["wss"], p["b3"] + p["bss"])
    else:
        kernel = functools.partial(_bneck_ident_kernel, H=H, W=W, Wp8=Wp8)
        in_specs = common + [pl.BlockSpec((1, Cout), lambda n: (0, 0))]     # b3
        args = (xp_flat, xv_flat, mask, p["w1s"], p["b1"], p["w2s"], p["b2"],
                p["w3s"], p["b3"])

    return pl.pallas_call(
        kernel,
        out_shape=jax.ShapeDtypeStruct((N, L, Cout), out_dtype),
        grid_spec=pltpu.PrefetchScalarGridSpec(
            num_scalar_prefetch=0,
            grid=(N,),
            in_specs=in_specs,
            out_specs=pl.BlockSpec((1, L, Cout), lambda n: (n, 0, 0)),
        ),
        compiler_params=pltpu.CompilerParams(
            dimension_semantics=("parallel",),
            vmem_limit_bytes=_vmem_limit_bytes()),
    )(*args)


def _conv12_call(xp_flat, mask, w1s, b1, w2s, b2, *, H, Wp8):
    N, Lpad, Cin = xp_flat.shape
    planes = w1s.shape[1]
    Lout = H * Wp8
    kernel = functools.partial(_conv12_kernel, Wp8=Wp8, Lout=Lout)
    return pl.pallas_call(
        kernel,
        out_shape=jax.ShapeDtypeStruct((N, Lout, planes), jnp.bfloat16),
        grid_spec=pltpu.PrefetchScalarGridSpec(
            num_scalar_prefetch=0,
            grid=(N,),
            in_specs=[
                pl.BlockSpec((1, Lpad, Cin), lambda n: (n, 0, 0)),
                pl.BlockSpec((Lpad, 1), lambda n: (0, 0)),
                pl.BlockSpec((Cin, planes), lambda n: (0, 0)),
                pl.BlockSpec((1, planes), lambda n: (0, 0)),
                pl.BlockSpec((3, 3 * planes, planes), lambda n: (0, 0, 0)),
                pl.BlockSpec((1, planes), lambda n: (0, 0)),
            ],
            out_specs=pl.BlockSpec((1, Lout, planes), lambda n: (n, 0, 0)),
        ),
        compiler_params=pltpu.CompilerParams(
            dimension_semantics=("parallel",),
            vmem_limit_bytes=_vmem_limit_bytes()),
    )(xp_flat, mask, w1s, b1, w2s, b2)


def _conv3_shortcut_call(y2, w3s, bias, xs, wss, out_dtype):
    """Fused conv3+bn3 + projection conv+bn + add + relu (stride>1 path)."""
    P, Kp = y2.shape
    Cout = w3s.shape[1]
    Ks = xs.shape[1]
    tm = _TM if P >= _TM else _round_up(P, 8)
    tn = _TN if Cout > _TN else Cout
    grid = (pl.cdiv(P, tm), pl.cdiv(Cout, tn))
    return pl.pallas_call(
        _conv3_proj_kernel,
        out_shape=jax.ShapeDtypeStruct((P, Cout), out_dtype),
        grid_spec=pltpu.PrefetchScalarGridSpec(
            num_scalar_prefetch=0,
            grid=grid,
            in_specs=[pl.BlockSpec((tm, Kp), lambda i, j: (i, 0)),
                      pl.BlockSpec((Kp, tn), lambda i, j: (0, j)),
                      pl.BlockSpec((tm, Ks), lambda i, j: (i, 0)),
                      pl.BlockSpec((Ks, tn), lambda i, j: (0, j)),
                      pl.BlockSpec((1, tn), lambda i, j: (0, j))],
            out_specs=pl.BlockSpec((tm, tn), lambda i, j: (i, j)),
        ),
        compiler_params=pltpu.CompilerParams(
            dimension_semantics=("parallel", "parallel"),
            vmem_limit_bytes=_vmem_limit_bytes()),
    )(y2, w3s, xs, wss, bias)


# ------------------------------ glue (plain JAX) ------------------------------


def _fold_bn(gamma, beta, mean, var, eps=1e-5):
    scale = gamma * lax.rsqrt(var + eps)
    bias = beta - mean * scale
    return scale.astype(jnp.float32), bias.astype(jnp.float32)


def _border_mask(H, W, Hp, Wp8):
    row_ok = (jnp.arange(Hp) >= 1) & (jnp.arange(Hp) <= H)
    col_ok = (jnp.arange(Wp8) >= 1) & (jnp.arange(Wp8) <= W)
    m = (row_ok[:, None] & col_ok[None, :]).astype(jnp.bfloat16)
    return m.reshape(Hp * Wp8, 1)


def init_bottleneck_params(key, in_planes, planes, stride, expansion=4):
    """Deterministic synthetic parameters matching the PyTorch module shapes."""
    out_planes = expansion * planes
    ks = jax.random.split(key, 8)

    def _bn(k, c):
        k0, k1, k2, k3 = jax.random.split(k, 4)
        gamma = jax.random.uniform(k0, (c,), jnp.float32, 0.5, 1.5)
        beta = 0.1 * jax.random.normal(k1, (c,), jnp.float32)
        mean = 0.1 * jax.random.normal(k2, (c,), jnp.float32)
        var = jax.random.uniform(k3, (c,), jnp.float32, 0.5, 1.5)
        return _fold_bn(gamma, beta, mean, var)

    # conv weights in PyTorch layout (Cout, Cin, kH, kW), then re-laid-out.
    w1_t = 0.1 * jax.random.normal(ks[0], (planes, in_planes, 1, 1), jnp.float32)
    w2_t = 0.1 * jax.random.normal(ks[1], (planes, planes, 3, 3), jnp.float32)
    w3_t = 0.1 * jax.random.normal(ks[2], (out_planes, planes, 1, 1), jnp.float32)
    s1, b1 = _bn(ks[3], planes)
    s2, b2 = _bn(ks[4], planes)
    s3, b3 = _bn(ks[5], out_planes)

    p = {}
    w1 = jnp.transpose(w1_t[:, :, 0, 0], (1, 0))                       # (Cin, planes)
    p["w1s"] = (w1 * s1[None, :]).astype(jnp.bfloat16)                 # BN scale folded
    p["b1"] = b1.reshape(1, -1)
    w2 = jnp.transpose(w2_t, (2, 3, 1, 0))                             # (kh, kw, Cin, Cout)
    # kw concatenated along the contraction axis: (3, 3*planes, planes)
    p["w2s"] = (w2 * s2[None, None, None, :]).reshape(3, 3 * planes, planes).astype(jnp.bfloat16)
    p["b2"] = b2.reshape(1, -1)
    w3 = jnp.transpose(w3_t[:, :, 0, 0], (1, 0))                       # (planes, out_planes)
    p["w3s"] = (w3 * s3[None, :]).astype(jnp.bfloat16)
    p["b3"] = b3.reshape(1, -1)

    has_proj = (stride != 1) or (in_planes != out_planes)
    if has_proj:
        ws_t = 0.1 * jax.random.normal(ks[6], (out_planes, in_planes, 1, 1), jnp.float32)
        ss, bs = _bn(ks[7], out_planes)
        ws = jnp.transpose(ws_t[:, :, 0, 0], (1, 0))                   # (Cin, out_planes)
        p["wss"] = (ws * ss[None, :]).astype(jnp.bfloat16)
        p["bss"] = bs.reshape(1, -1)
    return p


def bottleneck_forward(x_nchw, params, stride, out_dtype=jnp.float32):
    """Bottleneck forward pass.  Input/output NCHW (PyTorch layout).

    out_dtype=jnp.bfloat16 halves output writeback when chaining blocks (keep
    NHWC and drop the final transpose in that case); f32 matches the module.
    """
    N, Cin, H, W = x_nchw.shape
    planes = params["w1s"].shape[1]
    Cout = params["w3s"].shape[1]
    Wp8 = _round_up(W + 2, 8)          # padded row stride, sublane aligned
    Hp = H + 3                         # 1 top + 2 bottom pad rows
    Lpad = Hp * Wp8

    x = jnp.transpose(x_nchw, (0, 2, 3, 1)).astype(jnp.bfloat16)       # NHWC bf16
    xp = jnp.pad(x, ((0, 0), (1, 2), (1, Wp8 - W - 1), (0, 0)))
    xp_flat = xp.reshape(N, Lpad, Cin)
    mask = _border_mask(H, W, Hp, Wp8)

    if stride == 1:
        # Single fully-fused kernel: y2 never leaves VMEM, no strip pass.
        xv_flat = x.reshape(N, H * W, Cin)
        out = _fused_call(xp_flat, xv_flat, mask, params,
                          H=H, W=W, Wp8=Wp8, out_dtype=out_dtype)
        Ho, Wo = H, W
    else:
        # Two-kernel path: dense conv1+conv2, wrapper subsample, conv3+proj.
        y2_dense = _conv12_call(xp_flat, mask, params["w1s"], params["b1"],
                                params["w2s"], params["b2"], H=H, Wp8=Wp8)
        Ho = (H - 1) // stride + 1
        Wo = (W - 1) // stride + 1
        y2 = y2_dense.reshape(N, H, Wp8, planes)[:, ::stride, 0:W:stride, :]
        y2 = y2.reshape(N * Ho * Wo, planes)
        xs = x[:, ::stride, ::stride, :].reshape(N * Ho * Wo, Cin)
        out = _conv3_shortcut_call(y2, params["w3s"],
                                   params["b3"] + params["bss"], xs,
                                   params["wss"], out_dtype)

    out = out.reshape(N, Ho, Wo, Cout)
    return jnp.transpose(out, (0, 3, 1, 2))                            # back to NCHW


# ------------------------------ reference (JAX) -------------------------------


def bottleneck_reference(x_nchw, params, stride):
    """Pure-JAX reference with the same folded-BN / bf16-boundary semantics."""
    N, Cin, H, W = x_nchw.shape
    x = jnp.transpose(x_nchw, (0, 2, 3, 1)).astype(jnp.bfloat16).astype(jnp.float32)
    dn = ("NHWC", "HWIO", "NHWC")
    hi = lax.Precision.HIGHEST
    planes = params["w1s"].shape[1]
    Cout = params["w3s"].shape[1]

    def conv(v, w, strides, pad):
        return lax.conv_general_dilated(v, w, strides, pad,
                                        dimension_numbers=dn, precision=hi)

    w1 = params["w1s"].astype(jnp.float32).reshape(1, 1, Cin, planes)
    w2 = params["w2s"].astype(jnp.float32).reshape(3, 3, planes, planes)
    w3 = params["w3s"].astype(jnp.float32).reshape(1, 1, planes, Cout)

    y1 = jax.nn.relu(conv(x, w1, (1, 1), "VALID") + params["b1"])
    y1 = y1.astype(jnp.bfloat16).astype(jnp.float32)
    y2 = jax.nn.relu(conv(y1, w2, (stride, stride), [(1, 1), (1, 1)]) + params["b2"])
    y2 = y2.astype(jnp.bfloat16).astype(jnp.float32)
    main = conv(y2, w3, (1, 1), "VALID") + params["b3"]
    if "wss" in params:
        ws = params["wss"].astype(jnp.float32).reshape(1, 1, Cin, Cout)
        sc = conv(x, ws, (stride, stride), "VALID") + params["bss"]
    else:
        sc = x
    out = jax.nn.relu(main + sc)
    return jnp.transpose(out, (0, 3, 1, 2))


# ---------------------------------- main --------------------------------------

if __name__ == "__main__":
    # (in_planes, planes, stride) with expansion = 4
    configs = [
        (4, 4, 1),    # projection shortcut, stride 1  -> fused projection kernel
        (16, 4, 1),   # identity shortcut              -> fused identity kernel
        (8, 4, 2),    # projection shortcut, stride 2  -> two-kernel path
    ]
    N, H, W = 2, 16, 16
    key = jax.random.PRNGKey(0)

    for (cin, planes, stride) in configs:
        key, kx, kp = jax.random.split(key, 3)
        x = jax.random.normal(kx, (N, cin, H, W), jnp.float32)         # NCHW, like PyTorch
        params = init_bottleneck_params(kp, cin, planes, stride)

        fwd = jax.jit(functools.partial(bottleneck_forward, stride=stride))
        out = jax.block_until_ready(fwd(x, params))
        ref = jax.block_until_ready(bottleneck_reference(x, params, stride))

        Ho = (H - 1) // stride + 1
        Wo = (W - 1) // stride + 1
        assert out.shape == (N, 4 * planes, Ho, Wo), out.shape
        err = float(jnp.max(jnp.abs(out - ref)))
        assert jnp.allclose(out, ref, atol=2e-2, rtol=2e-2), err

    print("KERNEL_OK")
</pallas_src>

<mosaic_0001>
module attributes {stable_mosaic.version = 11 : i64} {
  func.func @_bneck_proj_kernel(%arg0: i32, %arg1: memref<1x456x4xbf16, #tpu.memory_space<vmem>>, %arg2: memref<1x256x4xbf16, #tpu.memory_space<vmem>>, %arg3: memref<456x1xbf16, #tpu.memory_space<vmem>>, %arg4: memref<4x4xbf16, #tpu.memory_space<vmem>>, %arg5: memref<1x4xf32, #tpu.memory_space<vmem>>, %arg6: memref<3x12x4xbf16, #tpu.memory_space<vmem>>, %arg7: memref<1x4xf32, #tpu.memory_space<vmem>>, %arg8: memref<4x16xbf16, #tpu.memory_space<vmem>>, %arg9: memref<4x16xbf16, #tpu.memory_space<vmem>>, %arg10: memref<1x16xf32, #tpu.memory_space<vmem>>, %arg11: memref<1x256x16xf32, #tpu.memory_space<vmem>>) attributes {dimension_semantics = [#tpu.dimension_semantics<parallel>], iteration_bounds = array<i64: 2>, scalar_prefetch = 0 : i64, scratch_operands = 0 : i64, tpu.core_type = #tpu.core_type<tc>, window_params = [{transform_indices = @transform_0, window_bounds = array<i64: 1, 456, 4>}, {transform_indices = @transform_1, window_bounds = array<i64: 1, 256, 4>}, {pipeline_mode = #tpu.pipeline_mode<synchronous>, transform_indices = @transform_2, window_bounds = array<i64: 456, 1>}, {pipeline_mode = #tpu.pipeline_mode<synchronous>, transform_indices = @transform_3, window_bounds = array<i64: 4, 4>}, {pipeline_mode = #tpu.pipeline_mode<synchronous>, transform_indices = @transform_4, window_bounds = array<i64: 1, 4>}, {pipeline_mode = #tpu.pipeline_mode<synchronous>, transform_indices = @transform_5, window_bounds = array<i64: 3, 12, 4>}, {pipeline_mode = #tpu.pipeline_mode<synchronous>, transform_indices = @transform_6, window_bounds = array<i64: 1, 4>}, {pipeline_mode = #tpu.pipeline_mode<synchronous>, transform_indices = @transform_7, window_bounds = array<i64: 4, 16>}, {pipeline_mode = #tpu.pipeline_mode<synchronous>, transform_indices = @transform_8, window_bounds = array<i64: 4, 16>}, {pipeline_mode = #tpu.pipeline_mode<synchronous>, transform_indices = @transform_9, window_bounds = array<i64: 1, 16>}, {transform_indices = @transform_10, window_bounds = array<i64: 1, 256, 16>}]} {
    %c0 = arith.constant 0 : index
    %c0_0 = arith.constant 0 : index
    %c0_1 = arith.constant 0 : index
    %0 = vector.load %arg1[%c0, %c0_0, %c0_1] : memref<1x456x4xbf16, #tpu.memory_space<vmem>>, vector<1x456x4xbf16>
    %1 = vector.shape_cast %0 : vector<1x456x4xbf16> to vector<456x4xbf16>
    %c0_2 = arith.constant 0 : index
    %c0_3 = arith.constant 0 : index
    %2 = vector.load %arg3[%c0_2, %c0_3] : memref<456x1xbf16, #tpu.memory_space<vmem>>, vector<456x1xbf16>
    %c0_4 = arith.constant 0 : index
    %c0_5 = arith.constant 0 : index
    %3 = vector.load %arg4[%c0_4, %c0_5] : memref<4x4xbf16, #tpu.memory_space<vmem>>, vector<4x4xbf16>
    %c0_6 = arith.constant 0 : index
    %c0_7 = arith.constant 0 : index
    %4 = vector.load %arg5[%c0_6, %c0_7] : memref<1x4xf32, #tpu.memory_space<vmem>>, vector<1x4xf32>
    %c0_8 = arith.constant 0 : index
    %c0_9 = arith.constant 0 : index
    %5 = vector.load %arg7[%c0_8, %c0_9] : memref<1x4xf32, #tpu.memory_space<vmem>>, vector<1x4xf32>
    %cst = arith.constant dense<0.000000e+00> : vector<456x4xf32>
    %6 = tpu.matmul %1, %3, %cst {dimension_numbers = #tpu.dot_dimension_numbers<[1], [0], [0], [1], [0, 0, 1, 1], [], []>} : vector<456x4xbf16>, vector<4x4xbf16>, vector<456x4xf32> -> vector<456x4xf32>
    %7 = vector.broadcast %4 : vector<1x4xf32> to vector<456x4xf32>
    %8 = arith.addf %6, %7 : vector<456x4xf32>
    %cst_10 = arith.constant 0.000000e+00 : f32
    %9 = vector.broadcast %cst_10 : f32 to vector<456x4xf32>
    %10 = arith.maximumf %8, %9 : vector<456x4xf32>
    %11 = arith.truncf %10 : vector<456x4xf32> to vector<456x4xbf16>
    %12 = vector.broadcast %2 : vector<456x1xbf16> to vector<456x4xbf16>
    %13 = arith.mulf %11, %12 : vector<456x4xbf16>
    %14 = vector.extract_strided_slice %13 {offsets = [0, 0], sizes = [432, 4], strides = [1, 1]} : vector<456x4xbf16> to vector<432x4xbf16>
    %15 = vector.extract_strided_slice %13 {offsets = [1, 0], sizes = [432, 4], strides = [1, 1]} : vector<456x4xbf16> to vector<432x4xbf16>
    %16 = vector.extract_strided_slice %13 {offsets = [2, 0], sizes = [432, 4], strides = [1, 1]} : vector<456x4xbf16> to vector<432x4xbf16>
    %17 = tpu.concatenate %14, %15, %16 in 1 : vector<432x4xbf16>, vector<432x4xbf16>, vector<432x4xbf16> -> vector<432x12xbf16>
    %18 = vector.extract_strided_slice %17 {offsets = [0, 0], sizes = [384, 12], strides = [1, 1]} : vector<432x12xbf16> to vector<384x12xbf16>
    %c0_11 = arith.constant 0 : index
    %c0_12 = arith.constant 0 : index
    %c0_13 = arith.constant 0 : index
    %19 = vector.load %arg6[%c0_11, %c0_12, %c0_13] : memref<3x12x4xbf16, #tpu.memory_space<vmem>>, vector<1x12x4xbf16>
    %20 = vector.shape_cast %19 : vector<1x12x4xbf16> to vector<12x4xbf16>
    %cst_14 = arith.constant dense<0.000000e+00> : vector<384x4xf32>
    %21 = tpu.matmul %18, %20, %cst_14 {dimension_numbers = #tpu.dot_dimension_numbers<[1], [0], [0], [1], [0, 0, 1, 1], [], []>} : vector<384x12xbf16>, vector<12x4xbf16>, vector<384x4xf32> -> vector<384x4xf32>
    %22 = vector.extract_strided_slice %17 {offsets = [24, 0], sizes = [384, 12], strides = [1, 1]} : vector<432x12xbf16> to vector<384x12xbf16>
    %c1 = arith.constant 1 : index
    %c0_15 = arith.constant 0 : index
    %c0_16 = arith.constant 0 : index
    %23 = vector.load %arg6[%c1, %c0_15, %c0_16] : memref<3x12x4xbf16, #tpu.memory_space<vmem>>, vector<1x12x4xbf16>
    %24 = vector.shape_cast %23 : vector<1x12x4xbf16> to vector<12x4xbf16>
    %cst_17 = arith.constant dense<0.000000e+00> : vector<384x4xf32>
    %25 = tpu.matmul %22, %24, %cst_17 {dimension_numbers = #tpu.dot_dimension_numbers<[1], [0], [0], [1], [0, 0, 1, 1], [], []>} : vector<384x12xbf16>, vector<12x4xbf16>, vector<384x4xf32> -> vector<384x4xf32>
    %26 = arith.addf %21, %25 : vector<384x4xf32>
    %27 = vector.extract_strided_slice %17 {offsets = [48, 0], sizes = [384, 12], strides = [1, 1]} : vector<432x12xbf16> to vector<384x12xbf16>
    %c2 = arith.constant 2 : index
    %c0_18 = arith.constant 0 : index
    %c0_19 = arith.constant 0 : index
    %28 = vector.load %arg6[%c2, %c0_18, %c0_19] : memref<3x12x4xbf16, #tpu.memory_space<vmem>>, vector<1x12x4xbf16>
    %29 = vector.shape_cast %28 : vector<1x12x4xbf16> to vector<12x4xbf16>
    %cst_20 = arith.constant dense<0.000000e+00> : vector<384x4xf32>
    %30 = tpu.matmul %27, %29, %cst_20 {dimension_numbers = #tpu.dot_dimension_numbers<[1], [0], [0], [1], [0, 0, 1, 1], [], []>} : vector<384x12xbf16>, vector<12x4xbf16>, vector<384x4xf32> -> vector<384x4xf32>
    %31 = arith.addf %26, %30 : vector<384x4xf32>
    %32 = vector.broadcast %5 : vector<1x4xf32> to vector<384x4xf32>
    %33 = arith.addf %31, %32 : vector<384x4xf32>
    %cst_21 = arith.constant 0.000000e+00 : f32
    %34 = vector.broadcast %cst_21 : f32 to vector<384x4xf32>
    %35 = arith.maximumf %33, %34 : vector<384x4xf32>
    %36 = vector.shape_cast %35 : vector<384x4xf32> to vector<16x24x4xf32>
    %37 = vector.extract_strided_slice %36 {offsets = [0, 0, 0], sizes = [16, 16, 4], strides = [1, 1, 1]} : vector<16x24x4xf32> to vector<16x16x4xf32>
    %38 = vector.shape_cast %37 : vector<16x16x4xf32> to vector<256x4xf32>
    %39 = arith.truncf %38 : vector<256x4xf32> to vector<256x4xbf16>
    %c0_22 = arith.constant 0 : index
    %c0_23 = arith.constant 0 : index
    %40 = vector.load %arg8[%c0_22, %c0_23] : memref<4x16xbf16, #tpu.memory_space<vmem>>, vector<4x16xbf16>
    %cst_24 = arith.constant dense<0.000000e+00> : vector<256x16xf32>
    %41 = tpu.matmul %39, %40, %cst_24 {dimension_numbers = #tpu.dot_dimension_numbers<[1], [0], [0], [1], [0, 0, 1, 1], [], []>} : vector<256x4xbf16>, vector<4x16xbf16>, vector<256x16xf32> -> vector<256x16xf32>
    %c0_25 = arith.constant 0 : index
    %c0_26 = arith.constant 0 : index
    %c0_27 = arith.constant 0 : index
    %42 = vector.load %arg2[%c0_25, %c0_26, %c0_27] : memref<1x256x4xbf16, #tpu.memory_space<vmem>>, vector<1x256x4xbf16>
    %43 = vector.shape_cast %42 : vector<1x256x4xbf16> to vector<256x4xbf16>
    %c0_28 = arith.constant 0 : index
    %c0_29 = arith.constant 0 : index
    %44 = vector.load %arg9[%c0_28, %c0_29] : memref<4x16xbf16, #tpu.memory_space<vmem>>, vector<4x16xbf16>
    %cst_30 = arith.constant dense<0.000000e+00> : vector<256x16xf32>
    %45 = tpu.matmul %43, %44, %cst_30 {dimension_numbers = #tpu.dot_dimension_numbers<[1], [0], [0], [1], [0, 0, 1, 1], [], []>} : vector<256x4xbf16>, vector<4x16xbf16>, vector<256x16xf32> -> vector<256x16xf32>
    %46 = arith.addf %41, %45 : vector<256x16xf32>
    %c0_31 = arith.constant 0 : index
    %c0_32 = arith.constant 0 : index
    %47 = vector.load %arg10[%c0_31, %c0_32] : memref<1x16xf32, #tpu.memory_space<vmem>>, vector<1x16xf32>
    %48 = vector.broadcast %47 : vector<1x16xf32> to vector<256x16xf32>
    %49 = arith.addf %46, %48 : vector<256x16xf32>
    %cst_33 = arith.constant 0.000000e+00 : f32
    %50 = vector.broadcast %cst_33 : f32 to vector<256x16xf32>
    %51 = arith.maximumf %49, %50 : vector<256x16xf32>
    %c0_34 = arith.constant 0 : index
    %c0_35 = arith.constant 0 : index
    %c0_36 = arith.constant 0 : index
    %52 = vector.load %arg11[%c0_34, %c0_35, %c0_36] : memref<1x256x16xf32, #tpu.memory_space<vmem>>, vector<1x256x16xf32>
    %53 = vector.shape_cast %52 : vector<1x256x16xf32> to vector<256x16xf32>
    %54 = vector.shape_cast %51 : vector<256x16xf32> to vector<1x256x16xf32>
    tpu.vector_store %arg11[%c0_34, %c0_35, %c0_36], %54 {strides = array<i32>} : memref<1x256x16xf32, #tpu.memory_space<vmem>>, vector<1x256x16xf32>,
    return
  }
  func.func @transform_0(%arg0: i32) -> (i32, i32, i32) {
    %c0_i32 = arith.constant 0 : i32
    %c0_i32_0 = arith.constant 0 : i32
    %c0_i32_1 = arith.constant 0 : i32
    return %arg0, %c0_i32, %c0_i32_0 : i32, i32, i32
  }
  func.func @transform_1(%arg0: i32) -> (i32, i32, i32) {
    %c0_i32 = arith.constant 0 : i32
    %c0_i32_0 = arith.constant 0 : i32
    %c0_i32_1 = arith.constant 0 : i32
    return %arg0, %c0_i32, %c0_i32_0 : i32, i32, i32
  }
  func.func @transform_2(%arg0: i32) -> (i32, i32) {
    %c0_i32 = arith.constant 0 : i32
    %c0_i32_0 = arith.constant 0 : i32
    %c0_i32_1 = arith.constant 0 : i32
    return %c0_i32, %c0_i32_0 : i32, i32
  }
  func.func @transform_3(%arg0: i32) -> (i32, i32) {
    %c0_i32 = arith.constant 0 : i32
    %c0_i32_0 = arith.constant 0 : i32
    %c0_i32_1 = arith.constant 0 : i32
    return %c0_i32, %c0_i32_0 : i32, i32
  }
  func.func @transform_4(%arg0: i32) -> (i32, i32) {
    %c0_i32 = arith.constant 0 : i32
    %c0_i32_0 = arith.constant 0 : i32
    %c0_i32_1 = arith.constant 0 : i32
    return %c0_i32, %c0_i32_0 : i32, i32
  }
  func.func @transform_5(%arg0: i32) -> (i32, i32, i32) {
    %c0_i32 = arith.constant 0 : i32
    %c0_i32_0 = arith.constant 0 : i32
    %c0_i32_1 = arith.constant 0 : i32
    %c0_i32_2 = arith.constant 0 : i32
    return %c0_i32, %c0_i32_0, %c0_i32_1 : i32, i32, i32
  }
  func.func @transform_6(%arg0: i32) -> (i32, i32) {
    %c0_i32 = arith.constant 0 : i32
    %c0_i32_0 = arith.constant 0 : i32
    %c0_i32_1 = arith.constant 0 : i32
    return %c0_i32, %c0_i32_0 : i32, i32
  }
  func.func @transform_7(%arg0: i32) -> (i32, i32) {
    %c0_i32 = arith.constant 0 : i32
    %c0_i32_0 = arith.constant 0 : i32
    %c0_i32_1 = arith.constant 0 : i32
    return %c0_i32, %c0_i32_0 : i32, i32
  }
  func.func @transform_8(%arg0: i32) -> (i32, i32) {
    %c0_i32 = arith.constant 0 : i32
    %c0_i32_0 = arith.constant 0 : i32
    %c0_i32_1 = arith.constant 0 : i32
    return %c0_i32, %c0_i32_0 : i32, i32
  }
  func.func @transform_9(%arg0: i32) -> (i32, i32) {
    %c0_i32 = arith.constant 0 : i32
    %c0_i32_0 = arith.constant 0 : i32
    %c0_i32_1 = arith.constant 0 : i32
    return %c0_i32, %c0_i32_0 : i32, i32
  }
  func.func @transform_10(%arg0: i32) -> (i32, i32, i32) {
    %c0_i32 = arith.constant 0 : i32
    %c0_i32_0 = arith.constant 0 : i32
    %c0_i32_1 = arith.constant 0 : i32
    return %arg0, %c0_i32, %c0_i32_0 : i32, i32, i32
  }
}

</mosaic_0001>

<llo_original>
// kernel: bottleneck_forward.1
$region0: #{bottleneck_forward.1}
  #allocation0 [shape = 'u32[]', space=smem, size = 0x4, offset = 0x4, fixed_abs, tag = 'smem constant byte address 0x4 - core index']
  #allocation1 [shape = 'u32[144,128]{1,0:T(1,128)}', space=vmem, size = 0x12000, scoped, tag = 'internal scratch']
  %s0 = inlined_call_operand.vmem [shape: bf16[2,456,4], index: 0, kind: input, shape index: {}]
  %s1 = inlined_call_operand.vmem [shape: bf16[2,256,4], index: 1, kind: input, shape index: {}]
  %s2 = inlined_call_operand.vmem [shape: bf16[456,1], index: 2, kind: input, shape index: {}]
  %s3 = inlined_call_operand.vmem [shape: bf16[4,4], index: 3, kind: input, shape index: {}]
  %s4 = inlined_call_operand.vmem [shape: f32[1,4], index: 4, kind: input, shape index: {}]
  %s5 = inlined_call_operand.vmem [shape: bf16[3,12,4], index: 5, kind: input, shape index: {}]
  %s6 = inlined_call_operand.vmem [shape: f32[1,4], index: 6, kind: input, shape index: {}]
  %s7 = inlined_call_operand.vmem [shape: bf16[4,16], index: 7, kind: input, shape index: {}]
  %s8 = inlined_call_operand.vmem [shape: bf16[4,16], index: 8, kind: input, shape index: {}]
  %s9 = inlined_call_operand.vmem [shape: f32[1,16], index: 9, kind: input, shape index: {}]
  %s10 = inlined_call_operand.vmem [shape: f32[2,256,16], index: 10, kind: output, shape index: {}]
  %s11 = sld [smem:[#allocation0]]
  $region73: #{bottleneck_forward.1} parent=0
    _
  %s13 = ssub.s32 1, %s11
  %s14 = scalar_select 0, %s13, %s11
  loop: start=0, step=1, limit=4
  $region2: #{bottleneck_forward.1} parent=0 // loop_pre_header
    _
  $region3: #{bottleneck_forward.1} parent=0 // loop_header
    %s16 = sphi 0, %s20
    %p17 = scmp.ge.s32.totalorder %s16, 4
    %s26 = sphi 0, %s28
    %s29 = sphi 0, %s26
    %s30 = sphi 0, %s29
    %s46 = sphi 0, %s30
    %s52 = sphi 0, %s54
    %s55 = sphi 0, %s52
    %s56 = sphi 0, %s55
    %s72 = sphi 0, %s56
    %s76 = sphi 0, %s76
    %s78 = sphi 0, %s76
    %s79 = sphi 0, %s78
    %s93 = sphi 0, %s79
    %s97 = sphi 0, %s97
    %s99 = sphi 0, %s97
    %s100 = sphi 0, %s99
    %s114 = sphi 0, %s100
    %s118 = sphi 0, %s118
    %s120 = sphi 0, %s118
    %s121 = sphi 0, %s120
    %s135 = sphi 0, %s121
    %s139 = sphi 0, %s139
    %s141 = sphi 0, %s139
    %s142 = sphi 0, %s141
    %s156 = sphi 0, %s142
    %s160 = sphi 0, %s160
    %s162 = sphi 0, %s160
    %s163 = sphi 0, %s162
    %s177 = sphi 0, %s163
    %s181 = sphi 0, %s181
    %s183 = sphi 0, %s181
    %s184 = sphi 0, %s183
    %s198 = sphi 0, %s184
    %s202 = sphi 0, %s202
    %s204 = sphi 0, %s202
    %s205 = sphi 0, %s204
    %s219 = sphi 0, %s205
    %s223 = sphi 0, %s223
    %s225 = sphi 0, %s223
    %s226 = sphi 0, %s225
    %s240 = sphi 0, %s226
    %s246 = sphi 0, %s248
    %s249 = sphi 0, %s246
    %s250 = sphi 0, %s249
    %s266 = sphi 0, %s250
  $region4: #{bottleneck_forward.1} parent=0 // loop_header_branch
    %19 = sbr.rel (%p17) target = $region8
  $region5: #{bottleneck_forward.1} parent=0 // loop_body
    %s21 = ssub.s32 %s16, 1
    %s22 = ssub.s32 %s16, 2
    %s23 = sadd.s32 %s16, 1
    %s24 = ssub.s32 %s16, %s23
    %p25 = scmp.eq.s32.totalorder %s24, 0
    %s27 = sadd.s32 %s26, 1
    %s28 = scalar_select %p25, %s26, %s27
    %p31 = pneg %p25
    %p32 = scmp.eq.s32.totalorder %s16, 1
    %p33 = por %p31, %p32
    %p34 = scmp.ne.s32.totalorder %s26, %s29
    %p35 = scmp.eq.s32.totalorder %s16, 0
    %p36 = por %p34, %p35
    %p37 = scmp.ne.s32.totalorder %s26, %s29
    %p38 = scmp.eq.s32.totalorder %s21, 1
    %p39 = por %p37, %p38
    %p40 = scmp.ne.s32.totalorder %s29, %s30
    %p41 = scmp.eq.s32.totalorder %s21, 0
    %p42 = por %p40, %p41
    %p43 = scmp.ne.s32.totalorder %s29, %s30
    %p44 = scmp.eq.s32.totalorder %s22, 1
    %p45 = por %p43, %p44
    %p47 = scmp.ne.s32.totalorder %s30, %s46
    %p48 = scmp.eq.s32.totalorder %s22, 0
    %p49 = por %p47, %p48
    %s50 = ssub.s32 %s16, %s23
    %p51 = scmp.eq.s32.totalorder %s50, 0
    %s53 = sadd.s32 %s52, 1
    %s54 = scalar_select %p51, %s52, %s53
    %p57 = pneg %p51
    %p58 = scmp.eq.s32.totalorder %s16, 1
    %p59 = por %p57, %p58
    %p60 = scmp.ne.s32.totalorder %s52, %s55
    %p61 = scmp.eq.s32.totalorder %s16, 0
    %p62 = por %p60, %p61
    %p63 = scmp.ne.s32.totalorder %s52, %s55
    %p64 = scmp.eq.s32.totalorder %s21, 1
    %p65 = por %p63, %p64
    %p66 = scmp.ne.s32.totalorder %s55, %s56
    %p67 = scmp.eq.s32.totalorder %s21, 0
    %p68 = por %p66, %p67
    %p69 = scmp.ne.s32.totalorder %s55, %s56
    %p70 = scmp.eq.s32.totalorder %s22, 1
    %p71 = por %p69, %p70
    %p73 = scmp.ne.s32.totalorder %s56, %s72
    %p74 = scmp.eq.s32.totalorder %s22, 0
    %p75 = por %p73, %p74
    %s77 = sadd.s32 %s76, 1
    %p80 = scmp.eq.s32.totalorder %s16, 1
    %p81 = scmp.ne.s32.totalorder %s76, %s78
    %p82 = scmp.eq.s32.totalorder %s16, 0
    %p83 = por %p81, %p82
    %p84 = scmp.ne.s32.totalorder %s76, %s78
    %p85 = scmp.eq.s32.totalorder %s21, 1
    %p86 = por %p84, %p85
    %p87 = scmp.ne.s32.totalorder %s78, %s79
    %p88 = scmp.eq.s32.totalorder %s21, 0
    %p89 = por %p87, %p88
    %p90 = scmp.ne.s32.totalorder %s78, %s79
    %p91 = scmp.eq.s32.totalorder %s22, 1
    %p92 = por %p90, %p91
    %p94 = scmp.ne.s32.totalorder %s79, %s93
    %p95 = scmp.eq.s32.totalorder %s22, 0
    %p96 = por %p94, %p95
    %s98 = sadd.s32 %s97, 1
    %p101 = scmp.eq.s32.totalorder %s16, 1
    %p102 = scmp.ne.s32.totalorder %s97, %s99
    %p103 = scmp.eq.s32.totalorder %s16, 0
    %p104 = por %p102, %p103
    %p105 = scmp.ne.s32.totalorder %s97, %s99
    %p106 = scmp.eq.s32.totalorder %s21, 1
    %p107 = por %p105, %p106
    %p108 = scmp.ne.s32.totalorder %s99, %s100
    %p109 = scmp.eq.s32.totalorder %s21, 0
    %p110 = por %p108, %p109
    %p111 = scmp.ne.s32.totalorder %s99, %s100
    %p112 = scmp.eq.s32.totalorder %s22, 1
    %p113 = por %p111, %p112
    %p115 = scmp.ne.s32.totalorder %s100, %s114
    %p116 = scmp.eq.s32.totalorder %s22, 0
    %p117 = por %p115, %p116
    %s119 = sadd.s32 %s118, 1
    %p122 = scmp.eq.s32.totalorder %s16, 1
    %p123 = scmp.ne.s32.totalorder %s118, %s120
    %p124 = scmp.eq.s32.totalorder %s16, 0
    %p125 = por %p123, %p124
    %p126 = scmp.ne.s32.totalorder %s118, %s120
    %p127 = scmp.eq.s32.totalorder %s21, 1
    %p128 = por %p126, %p127
    %p129 = scmp.ne.s32.totalorder %s120, %s121
    %p130 = scmp.eq.s32.totalorder %s21, 0
    %p131 = por %p129, %p130
    %p132 = scmp.ne.s32.totalorder %s120, %s121
    %p133 = scmp.eq.s32.totalorder %s22, 1
    %p134 = por %p132, %p133
    %p136 = scmp.ne.s32.totalorder %s121, %s135
    %p137 = scmp.eq.s32.totalorder %s22, 0
    %p138 = por %p136, %p137
    %s140 = sadd.s32 %s139, 1
    %p143 = scmp.eq.s32.totalorder %s16, 1
    %p144 = scmp.ne.s32.totalorder %s139, %s141
    %p145 = scmp.eq.s32.totalorder %s16, 0
    %p146 = por %p144, %p145
    %p147 = scmp.ne.s32.totalorder %s139, %s141
    %p148 = scmp.eq.s32.totalorder %s21, 1
    %p149 = por %p147, %p148
    %p150 = scmp.ne.s32.totalorder %s141, %s142
    %p151 = scmp.eq.s32.totalorder %s21, 0
    %p152 = por %p150, %p151
    %p153 = scmp.ne.s32.totalorder %s141, %s142
    %p154 = scmp.eq.s32.totalorder %s22, 1
    %p155 = por %p153, %p154
    %p157 = scmp.ne.s32.totalorder %s142, %s156
    %p158 = scmp.eq.s32.totalorder %s22, 0
    %p159 = por %p157, %p158
    %s161 = sadd.s32 %s160, 1
    %p164 = scmp.eq.s32.totalorder %s16, 1
    %p165 = scmp.ne.s32.totalorder %s160, %s162
    %p166 = scmp.eq.s32.totalorder %s16, 0
    %p167 = por %p165, %p166
    %p168 = scmp.ne.s32.totalorder %s160, %s162
    %p169 = scmp.eq.s32.totalorder %s21, 1
    %p170 = por %p168, %p169
    %p171 = scmp.ne.s32.totalorder %s162, %s163
    %p172 = scmp.eq.s32.totalorder %s21, 0
    %p173 = por %p171, %p172
    %p174 = scmp.ne.s32.totalorder %s162, %s163
    %p175 = scmp.eq.s32.totalorder %s22, 1
    %p176 = por %p174, %p175
    %p178 = scmp.ne.s32.totalorder %s163, %s177
    %p179 = scmp.eq.s32.totalorder %s22, 0
    %p180 = por %p178, %p179
    %s182 = sadd.s32 %s181, 1
    %p185 = scmp.eq.s32.totalorder %s16, 1
    %p186 = scmp.ne.s32.totalorder %s181, %s183
    %p187 = scmp.eq.s32.totalorder %s16, 0
    %p188 = por %p186, %p187
    %p189 = scmp.ne.s32.totalorder %s181, %s183
    %p190 = scmp.eq.s32.totalorder %s21, 1
    %p191 = por %p189, %p190
    %p192 = scmp.ne.s32.totalorder %s183, %s184
    %p193 = scmp.eq.s32.totalorder %s21, 0
    %p194 = por %p192, %p193
    %p195 = scmp.ne.s32.totalorder %s183, %s184
    %p196 = scmp.eq.s32.totalorder %s22, 1
    %p197 = por %p195, %p196
    %p199 = scmp.ne.s32.totalorder %s184, %s198
    %p200 = scmp.eq.s32.totalorder %s22, 0
    %p201 = por %p199, %p200
    %s203 = sadd.s32 %s202, 1
    %p206 = scmp.eq.s32.totalorder %s16, 1
    %p207 = scmp.ne.s32.totalorder %s202, %s204
    %p208 = scmp.eq.s32.totalorder %s16, 0
    %p209 = por %p207, %p208
    %p210 = scmp.ne.s32.totalorder %s202, %s204
    %p211 = scmp.eq.s32.totalorder %s21, 1
    %p212 = por %p210, %p211
    %p213 = scmp.ne.s32.totalorder %s204, %s205
    %p214 = scmp.eq.s32.totalorder %s21, 0
    %p215 = por %p213, %p214
    %p216 = scmp.ne.s32.totalorder %s204, %s205
    %p217 = scmp.eq.s32.totalorder %s22, 1
    %p218 = por %p216, %p217
    %p220 = scmp.ne.s32.totalorder %s205, %s219
    %p221 = scmp.eq.s32.totalorder %s22, 0
    %p222 = por %p220, %p221
    %s224 = sadd.s32 %s223, 1
    %p227 = scmp.eq.s32.totalorder %s16, 1
    %p228 = scmp.ne.s32.totalorder %s223, %s225
    %p229 = scmp.eq.s32.totalorder %s16, 0
    %p230 = por %p228, %p229
    %p231 = scmp.ne.s32.totalorder %s223, %s225
    %p232 = scmp.eq.s32.totalorder %s21, 1
    %p233 = por %p231, %p232
    %p234 = scmp.ne.s32.totalorder %s225, %s226
    %p235 = scmp.eq.s32.totalorder %s21, 0
    %p236 = por %p234, %p235
    %p237 = scmp.ne.s32.totalorder %s225, %s226
    %p238 = scmp.eq.s32.totalorder %s22, 1
    %p239 = por %p237, %p238
    %p241 = scmp.ne.s32.totalorder %s226, %s240
    %p242 = scmp.eq.s32.totalorder %s22, 0
    %p243 = por %p241, %p242
    %s244 = ssub.s32 %s16, %s23
    %p245 = scmp.eq.s32.totalorder %s244, 0
    %s247 = sadd.s32 %s246, 1
    %s248 = scalar_select %p245, %s246, %s247
    %p251 = pneg %p245
    %p252 = scmp.eq.s32.totalorder %s16, 1
    %p253 = por %p251, %p252
    %p254 = scmp.ne.s32.totalorder %s246, %s249
    %p255 = scmp.eq.s32.totalorder %s16, 0
    %p256 = por %p254, %p255
    %p257 = scmp.ne.s32.totalorder %s246, %s249
    %p258 = scmp.eq.s32.totalorder %s21, 1
    %p259 = por %p257, %p258
    %p260 = scmp.ne.s32.totalorder %s249, %s250
    %p261 = scmp.eq.s32.totalorder %s21, 0
    %p262 = por %p260, %p261
    %p263 = scmp.ne.s32.totalorder %s249, %s250
    %p264 = scmp.eq.s32.totalorder %s22, 1
    %p265 = por %p263, %p264
    %p267 = scmp.ne.s32.totalorder %s250, %s266
    %p268 = scmp.eq.s32.totalorder %s22, 0
    %p269 = por %p267, %p268
    %p270 = scmp.le.s32.totalorder 1, %s16
    %p271 = scmp.lt.s32.totalorder %s16, 3
    %p272 = pnand %p270, %p271
    %p273 = pneg %p272
    // Predicated region
    $region9: #{bottleneck_forward.1} parent=5 // pred_check
      _
    $region10: #{bottleneck_forward.1} parent=5 // pred_check_branch
      %275 = sbr.rel (%p272) target = $region12
    $region11: #{bottleneck_forward.1} parent=5 // pred_region
      %s276 = ssub.s32 %s16, 1
      // Predicated region
      $region13: #{bottleneck_forward.1} parent=11 // pred_check
        %p277 = pneg %p89
      $region14: #{bottleneck_forward.1} parent=11 // pred_check_branch
        %279 = sbr.rel (%p277) target = $region16
      $region15: #{bottleneck_forward.1} parent=11 // pred_region
        _
      $region16: #{bottleneck_forward.1} parent=11 // pred_fallthru
        _
      // Predicated region
      $region17: #{bottleneck_forward.1} parent=11 // pred_check
        %p280 = pneg %p110
      $region18: #{bottleneck_forward.1} parent=11 // pred_check_branch
        %282 = sbr.rel (%p280) target = $region20
      $region19: #{bottleneck_forward.1} parent=11 // pred_region
        _
      $region20: #{bottleneck_forward.1} parent=11 // pred_fallthru
        _
      // Predicated region
      $region21: #{bottleneck_forward.1} parent=11 // pred_check
        %p283 = pneg %p131
      $region22: #{bottleneck_forward.1} parent=11 // pred_check_branch
        %285 = sbr.rel (%p283) target = $region24
      $region23: #{bottleneck_forward.1} parent=11 // pred_region
        _
      $region24: #{bottleneck_forward.1} parent=11 // pred_fallthru
        _
      // Predicated region
      $region25: #{bottleneck_forward.1} parent=11 // pred_check
        %p286 = pneg %p152
      $region26: #{bottleneck_forward.1} parent=11 // pred_check_branch
        %288 = sbr.rel (%p286) target = $region28
      $region27: #{bottleneck_forward.1} parent=11 // pred_region
        _
      $region28: #{bottleneck_forward.1} parent=11 // pred_fallthru
        _
      // Predicated region
      $region29: #{bottleneck_forward.1} parent=11 // pred_check
        %p289 = pneg %p173
      $region30: #{bottleneck_forward.1} parent=11 // pred_check_branch
        %291 = sbr.rel (%p289) target = $region32
      $region31: #{bottleneck_forward.1} parent=11 // pred_region
        _
      $region32: #{bottleneck_forward.1} parent=11 // pred_fallthru
        _
      // Predicated region
      $region33: #{bottleneck_forward.1} parent=11 // pred_check
        %p292 = pneg %p194
      $region34: #{bottleneck_forward.1} parent=11 // pred_check_branch
        %294 = sbr.rel (%p292) target = $region36
      $region35: #{bottleneck_forward.1} parent=11 // pred_region
        _
      $region36: #{bottleneck_forward.1} parent=11 // pred_fallthru
        _
      // Predicated region
      $region37: #{bottleneck_forward.1} parent=11 // pred_check
        %p295 = pneg %p215
      $region38: #{bottleneck_forward.1} parent=11 // pred_check_branch
        %297 = sbr.rel (%p295) target = $region40
      $region39: #{bottleneck_forward.1} parent=11 // pred_region
        _
      $region40: #{bottleneck_forward.1} parent=11 // pred_fallthru
        _
      // Predicated region
      $region41: #{bottleneck_forward.1} parent=11 // pred_check
        %p298 = pneg %p236
      $region42: #{bottleneck_forward.1} parent=11 // pred_check_branch
        %300 = sbr.rel (%p298) target = $region44
      $region43: #{bottleneck_forward.1} parent=11 // pred_region
        _
      $region44: #{bottleneck_forward.1} parent=11 // pred_fallthru
        _
    $region12: #{bottleneck_forward.1} parent=5 // pred_fallthru
      _
    %p301 = scmp.lt.s32.totalorder %s16, 2
    // Predicated region
    $region45: #{bottleneck_forward.1} parent=5 // pred_check
      %p302 = pneg %p301
    $region46: #{bottleneck_forward.1} parent=5 // pred_check_branch
      %304 = sbr.rel (%p302) target = $region48
    $region47: #{bottleneck_forward.1} parent=5 // pred_region
      // Predicated region
      $region49: #{bottleneck_forward.1} parent=47 // pred_check
        %p305 = pneg %p36
      $region50: #{bottleneck_forward.1} parent=47 // pred_check_branch
        %307 = sbr.rel (%p305) target = $region52
      $region51: #{bottleneck_forward.1} parent=47 // pred_region
        %p308 = scmp.lt.s32.totalorder %s16, 1
        %s309 = scalar_select %p308, %s16, 1
        %s310 = smul.addr %s309, 57
        %s311 = smul.addr %s310, 4
        %s312 = scalar_lea.vmem %s0, %s311
      $region52: #{bottleneck_forward.1} parent=47 // pred_fallthru
        _
      // Predicated region
      $region53: #{bottleneck_forward.1} parent=47 // pred_check
        %p313 = pneg %p62
      $region54: #{bottleneck_forward.1} parent=47 // pred_check_branch
        %315 = sbr.rel (%p313) target = $region56
      $region55: #{bottleneck_forward.1} parent=47 // pred_region
        %p316 = scmp.lt.s32.totalorder %s16, 1
        %s317 = scalar_select %p316, %s16, 1
        %s318 = smul.addr %s317, 32
        %s319 = smul.addr %s318, 4
        %s320 = scalar_lea.vmem %s1, %s319
      $region56: #{bottleneck_forward.1} parent=47 // pred_fallthru
        _
    $region48: #{bottleneck_forward.1} parent=5 // pred_fallthru
      _
    %p321 = scmp.le.s32.totalorder 1, %s16
    %p322 = scmp.lt.s32.totalorder %s16, 3
    %p323 = pnand %p321, %p322
    %p324 = pneg %p323
    // Predicated region
    $region57: #{bottleneck_forward.1} parent=5 // pred_check
      _
    $region58: #{bottleneck_forward.1} parent=5 // pred_check_branch
      %326 = sbr.rel (%p323) target = $region60
    $region59: #{bottleneck_forward.1} parent=5 // pred_region
      %s327 = ssub.s32 %s16, 1
      %p328 = scmp.lt.s32.totalorder %s21, 1
      %s329 = scalar_select %p328, %s21, 1
      %s330 = smul.addr %s329, 57
      %s331 = smul.addr %s330, 4
      %s332 = scalar_lea.vmem %s0, %s331
      %p333 = pneg %p42
      %p334 = pneg %p39
      %p335 = scmp.lt.s32.totalorder %s21, 1
      %s336 = scalar_select %p335, %s21, 1
      %s337 = smul.addr %s336, 32
      %s338 = smul.addr %s337, 4
      %s339 = scalar_lea.vmem %s1, %s338
      %p340 = pneg %p68
      %p341 = pneg %p65
      %p342 = pneg %p89
      %p343 = pneg %p86
      %p344 = pneg %p110
      %p345 = pneg %p107
      %p346 = pneg %p131
      %p347 = pneg %p128
      %p348 = pneg %p152
      %p349 = pneg %p149
      %p350 = pneg %p173
      %p351 = pneg %p170
      %p352 = pneg %p194
      %p353 = pneg %p191
      %p354 = pneg %p215
      %p355 = pneg %p212
      %p356 = pneg %p236
      %p357 = pneg %p233
      %p358 = pneg %p262
      %p359 = pneg %p259
      %p360 = scmp.lt.s32.totalorder %s21, 1
      %s361 = scalar_select %p360, %s21, 1
      %s362 = smul.addr %s361, 32
      %s363 = smul.addr %s362, 8
      %s364 = scalar_lea.vmem %s10, %s363
      %p365 = scmp.lt.s32.totalorder %s21, 1
      %s366 = scalar_select %p365, %s21, 1
      %s367 = smul.addr %s366, 57
      %s368 = smul.addr %s367, 4
      %s369 = scalar_lea.vmem %s0, %s368
      %p370 = scmp.lt.s32.totalorder %s21, 1
      %s371 = scalar_select %p370, %s21, 1
      %s372 = smul.addr %s371, 32
      %s373 = smul.addr %s372, 4
      %s374 = scalar_lea.vmem %s1, %s373
      %p375 = scmp.lt.s32.totalorder %s21, 1
      %s376 = scalar_select %p375, %s21, 1
      %s377 = smul.addr %s376, 32
      %s378 = smul.addr %s377, 8
      %s379 = scalar_lea.vmem %s10, %s378
      %v381 = vld [vmem:[%s369] sm:$0xf]
      %v382 = vld [vmem:[%s369 + $0x4] sm:$0xf]
      %v383 = vld [vmem:[%s369 + $0x8] sm:$0xf]
      %v384 = vld [vmem:[%s369 + $0xc] sm:$0xf]
      %v385 = vld [vmem:[%s369 + $0x10] sm:$0xf]
      %v386 = vld [vmem:[%s369 + $0x14] sm:$0xf]
      %v387 = vld [vmem:[%s369 + $0x18] sm:$0xf]
      %v388 = vld [vmem:[%s369 + $0x1c] sm:$0xf]
      %v389 = vld [vmem:[%s369 + $0x20] sm:$0xf]
      %v390 = vld [vmem:[%s369 + $0x24] sm:$0xf]
      %v391 = vld [vmem:[%s369 + $0x28] sm:$0xf]
      %v392 = vld [vmem:[%s369 + $0x2c] sm:$0xf]
      %v393 = vld [vmem:[%s369 + $0x30] sm:$0xf]
      %v394 = vld [vmem:[%s369 + $0x34] sm:$0xf]
      %v395 = vld [vmem:[%s369 + $0x38] sm:$0xf]
      %v396 = vld [vmem:[%s369 + $0x3c] sm:$0xf]
      %v397 = vld [vmem:[%s369 + $0x40] sm:$0xf]
      %v398 = vld [vmem:[%s369 + $0x44] sm:$0xf]
      %v399 = vld [vmem:[%s369 + $0x48] sm:$0xf]
      %v400 = vld [vmem:[%s369 + $0x4c] sm:$0xf]
      %v401 = vld [vmem:[%s369 + $0x50] sm:$0xf]
      %v402 = vld [vmem:[%s369 + $0x54] sm:$0xf]
      %v403 = vld [vmem:[%s369 + $0x58] sm:$0xf]
      %v404 = vld [vmem:[%s369 + $0x5c] sm:$0xf]
      %v405 = vld [vmem:[%s369 + $0x60] sm:$0xf]
      %v406 = vld [vmem:[%s369 + $0x64] sm:$0xf]
      %v407 = vld [vmem:[%s369 + $0x68] sm:$0xf]
      %v408 = vld [vmem:[%s369 + $0x6c] sm:$0xf]
      %v409 = vld [vmem:[%s369 + $0x70] sm:$0xf]
      %v410 = vld [vmem:[%s369 + $0x74] sm:$0xf]
      %v411 = vld [vmem:[%s369 + $0x78] sm:$0xf]
      %v412 = vld [vmem:[%s369 + $0x7c] sm:$0xf]
      %v413 = vld [vmem:[%s369 + $0x80] sm:$0xf]
      %v414 = vld [vmem:[%s369 + $0x84] sm:$0xf]
      %v415 = vld [vmem:[%s369 + $0x88] sm:$0xf]
      %v416 = vld [vmem:[%s369 + $0x8c] sm:$0xf]
      %v417 = vld [vmem:[%s369 + $0x90] sm:$0xf]
      %v418 = vld [vmem:[%s369 + $0x94] sm:$0xf]
      %v419 = vld [vmem:[%s369 + $0x98] sm:$0xf]
      %v420 = vld [vmem:[%s369 + $0x9c] sm:$0xf]
      %v421 = vld [vmem:[%s369 + $0xa0] sm:$0xf]
      %v422 = vld [vmem:[%s369 + $0xa4] sm:$0xf]
      %v423 = vld [vmem:[%s369 + $0xa8] sm:$0xf]
      %v424 = vld [vmem:[%s369 + $0xac] sm:$0xf]
      %v425 = vld [vmem:[%s369 + $0xb0] sm:$0xf]
      %v426 = vld [vmem:[%s369 + $0xb4] sm:$0xf]
      %v427 = vld [vmem:[%s369 + $0xb8] sm:$0xf]
      %v428 = vld [vmem:[%s369 + $0xbc] sm:$0xf]
      %v429 = vld [vmem:[%s369 + $0xc0] sm:$0xf]
      %v430 = vld [vmem:[%s369 + $0xc4] sm:$0xf]
      %v431 = vld [vmem:[%s369 + $0xc8] sm:$0xf]
      %v432 = vld [vmem:[%s369 + $0xcc] sm:$0xf]
      %v433 = vld [vmem:[%s369 + $0xd0] sm:$0xf]
      %v434 = vld [vmem:[%s369 + $0xd4] sm:$0xf]
      %v435 = vld [vmem:[%s369 + $0xd8] sm:$0xf]
      %v436 = vld [vmem:[%s369 + $0xdc] sm:$0xf]
      %v437 = vld [vmem:[%s369 + $0xe0] sm:$0xf]
      %v438 = vld [vmem:[%s2] sm:$0xf]
      %v439 = vld [vmem:[%s2 + $0x4] sm:$0xf]
      %v440 = vld [vmem:[%s2 + $0x8] sm:$0xf]
      %v441 = vld [vmem:[%s2 + $0xc] sm:$0xf]
      %v442 = vld [vmem:[%s2 + $0x10] sm:$0xf]
      %v443 = vld [vmem:[%s2 + $0x14] sm:$0xf]
      %v444 = vld [vmem:[%s2 + $0x18] sm:$0xf]
      %v445 = vld [vmem:[%s2 + $0x1c] sm:$0xf]
      %v446 = vld [vmem:[%s2 + $0x20] sm:$0xf]
      %v447 = vld [vmem:[%s2 + $0x24] sm:$0xf]
      %v448 = vld [vmem:[%s2 + $0x28] sm:$0xf]
      %v449 = vld [vmem:[%s2 + $0x2c] sm:$0xf]
      %v450 = vld [vmem:[%s2 + $0x30] sm:$0xf]
      %v451 = vld [vmem:[%s2 + $0x34] sm:$0xf]
      %v452 = vld [vmem:[%s2 + $0x38] sm:$0xf]
      %v453 = vld [vmem:[%s2 + $0x3c] sm:$0xf]
      %v454 = vld [vmem:[%s2 + $0x40] sm:$0xf]
      %v455 = vld [vmem:[%s2 + $0x44] sm:$0xf]
      %v456 = vld [vmem:[%s2 + $0x48] sm:$0xf]
      %v457 = vld [vmem:[%s2 + $0x4c] sm:$0xf]
      %v458 = vld [vmem:[%s2 + $0x50] sm:$0xf]
      %v459 = vld [vmem:[%s2 + $0x54] sm:$0xf]
      %v460 = vld [vmem:[%s2 + $0x58] sm:$0xf]
      %v461 = vld [vmem:[%s2 + $0x5c] sm:$0xf]
      %v462 = vld [vmem:[%s2 + $0x60] sm:$0xf]
      %v463 = vld [vmem:[%s2 + $0x64] sm:$0xf]
      %v464 = vld [vmem:[%s2 + $0x68] sm:$0xf]
      %v465 = vld [vmem:[%s2 + $0x6c] sm:$0xf]
      %v466 = vld [vmem:[%s2 + $0x70] sm:$0xf]
      %v467 = vld [vmem:[%s2 + $0x74] sm:$0xf]
      %v468 = vld [vmem:[%s2 + $0x78] sm:$0xf]
      %v469 = vld [vmem:[%s2 + $0x7c] sm:$0xf]
      %v470 = vld [vmem:[%s2 + $0x80] sm:$0xf]
      %v471 = vld [vmem:[%s2 + $0x84] sm:$0xf]
      %v472 = vld [vmem:[%s2 + $0x88] sm:$0xf]
      %v473 = vld [vmem:[%s2 + $0x8c] sm:$0xf]
      %v474 = vld [vmem:[%s2 + $0x90] sm:$0xf]
      %v475 = vld [vmem:[%s2 + $0x94] sm:$0xf]
      %v476 = vld [vmem:[%s2 + $0x98] sm:$0xf]
      %v477 = vld [vmem:[%s2 + $0x9c] sm:$0xf]
      %v478 = vld [vmem:[%s2 + $0xa0] sm:$0xf]
      %v479 = vld [vmem:[%s2 + $0xa4] sm:$0xf]
      %v480 = vld [vmem:[%s2 + $0xa8] sm:$0xf]
      %v481 = vld [vmem:[%s2 + $0xac] sm:$0xf]
      %v482 = vld [vmem:[%s2 + $0xb0] sm:$0xf]
      %v483 = vld [vmem:[%s2 + $0xb4] sm:$0xf]
      %v484 = vld [vmem:[%s2 + $0xb8] sm:$0xf]
      %v485 = vld [vmem:[%s2 + $0xbc] sm:$0xf]
      %v486 = vld [vmem:[%s2 + $0xc0] sm:$0xf]
      %v487 = vld [vmem:[%s2 + $0xc4] sm:$0xf]
      %v488 = vld [vmem:[%s2 + $0xc8] sm:$0xf]
      %v489 = vld [vmem:[%s2 + $0xcc] sm:$0xf]
      %v490 = vld [vmem:[%s2 + $0xd0] sm:$0xf]
      %v491 = vld [vmem:[%s2 + $0xd4] sm:$0xf]
      %v492 = vld [vmem:[%s2 + $0xd8] sm:$0xf]
      %v493 = vld [vmem:[%s2 + $0xdc] sm:$0xf]
      %v494 = vld [vmem:[%s3] sm:$0x3]
      %v495 = vld [vmem:[%s4] sm:$0x1]
      %v496 = vld [vmem:[%s6] sm:$0x1]
      %v498 = vlaneseq
      %v499 = vshrl.u32 %v498, 7
      %v500 = vsub.s32 0, %v499
      %v501 = vrot.slane %v495, %v500
      %v560 = vunpack.c.l.b16 %v381
      %v561 = vunpack.c.l.b16 %v382
      %v562 = vunpack.c.l.b16 %v383
      %v563 = vunpack.c.l.b16 %v384
      %v564 = vunpack.c.l.b16 %v385
      %v565 = vunpack.c.l.b16 %v386
      %v566 = vunpack.c.l.b16 %v387
      %v567 = vunpack.c.l.b16 %v388
      %v568 = vunpack.c.l.b16 %v389
      %v569 = vunpack.c.l.b16 %v390
      %v570 = vunpack.c.l.b16 %v391
      %v571 = vunpack.c.l.b16 %v392
      %v572 = vunpack.c.l.b16 %v393
      %v573 = vunpack.c.l.b16 %v394
      %v574 = vunpack.c.l.b16 %v395
      %v575 = vunpack.c.l.b16 %v396
      %v576 = vunpack.c.l.b16 %v397
      %v577 = vunpack.c.l.b16 %v398
      %v578 = vunpack.c.l.b16 %v399
      %v579 = vunpack.c.l.b16 %v400
      %v580 = vunpack.c.l.b16 %v401
      %v581 = vunpack.c.l.b16 %v402
      %v582 = vunpack.c.l.b16 %v403
      %v583 = vunpack.c.l.b16 %v404
      %v584 = vunpack.c.l.b16 %v405
      %v585 = vunpack.c.l.b16 %v406
      %v586 = vunpack.c.l.b16 %v407
      %v587 = vunpack.c.l.b16 %v408
      %v588 = vunpack.c.l.b16 %v409
      %v589 = vunpack.c.l.b16 %v410
      %v590 = vunpack.c.l.b16 %v411
      %v591 = vunpack.c.l.b16 %v412
      %v592 = vunpack.c.l.b16 %v413
      %v593 = vunpack.c.l.b16 %v414
      %v594 = vunpack.c.l.b16 %v415
      %v595 = vunpack.c.l.b16 %v416
      %v596 = vunpack.c.l.b16 %v417
      %v597 = vunpack.c.l.b16 %v418
      %v598 = vunpack.c.l.b16 %v419
      %v599 = vunpack.c.l.b16 %v420
      %v600 = vunpack.c.l.b16 %v421
      %v601 = vunpack.c.l.b16 %v422
      %v602 = vunpack.c.l.b16 %v423
      %v603 = vunpack.c.l.b16 %v424
      %v604 = vunpack.c.l.b16 %v425
      %v605 = vunpack.c.l.b16 %v426
      %v606 = vunpack.c.l.b16 %v427
      %v607 = vunpack.c.l.b16 %v428
      %v608 = vunpack.c.l.b16 %v429
      %v609 = vunpack.c.l.b16 %v430
      %v610 = vunpack.c.l.b16 %v431
      %v611 = vunpack.c.l.b16 %v432
      %v612 = vunpack.c.l.b16 %v433
      %v613 = vunpack.c.l.b16 %v434
      %v614 = vunpack.c.l.b16 %v435
      %v615 = vunpack.c.l.b16 %v436
      %v616 = vunpack.c.l.b16 %v437
      %v617 = vpack.c.b16 %v561, %v560
      %v618 = vpack.c.b16 %v563, %v562
      %v619 = vpack.c.b16 %v565, %v564
      %v620 = vpack.c.b16 %v567, %v566
      %v621 = vpack.c.b16 %v569, %v568
      %v622 = vpack.c.b16 %v571, %v570
      %v623 = vpack.c.b16 %v573, %v572
      %v624 = vpack.c.b16 %v575, %v574
      %v625 = vpack.c.b16 %v577, %v576
      %v626 = vpack.c.b16 %v579, %v578
      %v627 = vpack.c.b16 %v581, %v580
      %v628 = vpack.c.b16 %v583, %v582
      %v629 = vpack.c.b16 %v585, %v584
      %v630 = vpack.c.b16 %v587, %v586
      %v631 = vpack.c.b16 %v589, %v588
      %v632 = vpack.c.b16 %v591, %v590
      %v633 = vpack.c.b16 %v593, %v592
      %v634 = vpack.c.b16 %v595, %v594
      %v635 = vpack.c.b16 %v597, %v596
      %v636 = vpack.c.b16 %v599, %v598
      %v637 = vpack.c.b16 %v601, %v600
      %v638 = vpack.c.b16 %v603, %v602
      %v639 = vpack.c.b16 %v605, %v604
      %v640 = vpack.c.b16 %v607, %v606
      %v641 = vpack.c.b16 %v609, %v608
      %v642 = vpack.c.b16 %v611, %v610
      %v643 = vpack.c.b16 %v613, %v612
      %v644 = vpack.c.b16 %v615, %v614
      %v645 = vpack.c.b16 %v616, %v616
      %vm646 = vcmask 31744
      %v648 = vsel %vm646, %v617, 0
      %v651 = vsel %vm646, %v618, 0
      %v654 = vsel %vm646, %v619, 0
      %v657 = vsel %vm646, %v620, 0
      %v660 = vsel %vm646, %v621, 0
      %v663 = vsel %vm646, %v622, 0
      %v666 = vsel %vm646, %v623, 0
      %v669 = vsel %vm646, %v624, 0
      %v672 = vsel %vm646, %v625, 0
      %v675 = vsel %vm646, %v626, 0
      %v678 = vsel %vm646, %v627, 0
      %v681 = vsel %vm646, %v628, 0
      %v684 = vsel %vm646, %v629, 0
      %v687 = vsel %vm646, %v630, 0
      %v690 = vsel %vm646, %v631, 0
      %v693 = vsel %vm646, %v632, 0
      %v696 = vsel %vm646, %v633, 0
      %v699 = vsel %vm646, %v634, 0
      %v702 = vsel %vm646, %v635, 0
      %v705 = vsel %vm646, %v636, 0
      %v708 = vsel %vm646, %v637, 0
      %v711 = vsel %vm646, %v638, 0
      %v714 = vsel %vm646, %v639, 0
      %v717 = vsel %vm646, %v640, 0
      %v720 = vsel %vm646, %v641, 0
      %v723 = vsel %vm646, %v642, 0
      %v726 = vsel %vm646, %v643, 0
      %v729 = vsel %vm646, %v644, 0
      %v732 = vsel %vm646, %v645, 0
      %vm734 = vcmask 1041408
      %v736 = vsel %vm734, %v494, 0
      %738 = vmatprep.subr.bf16.mxu0 0
      %739 = vmatpush1.bf16.msra.mxu0 %v736
      %740 = vmatprep.subr.bf16.mxu0 0
      %741 = vmatpush1.bf16.msra.mxu0 0
      %742 = vmatprep.subr.bf16.mxu0 0
      %743 = vmatpush1.bf16.msra.mxu0 0
      %744 = vmatprep.subr.bf16.mxu0 0
      %745 = vmatpush1.bf16.msra.mxu0 0
      %746 = vmatprep.subr.bf16.mxu0 0
      %747 = vmatpush1.bf16.msra.mxu0 0
      %748 = vmatprep.subr.bf16.mxu0 0
      %749 = vmatpush1.bf16.msra.mxu0 0
      %750 = vmatprep.subr.bf16.mxu0 0
      %751 = vmatpush1.bf16.msra.mxu0 0
      %752 = vmatprep.subr.bf16.mxu0 0
      %753 = vmatpush1.bf16.msra.mxu0 0
      %754 = vmatprep.subr.bf16.mxu0 0
      %755 = vmatpush1.bf16.msra.mxu0 0
      %756 = vmatprep.subr.bf16.mxu0 0
      %757 = vmatpush1.bf16.msra.mxu0 0
      %758 = vmatprep.subr.bf16.mxu0 0
      %759 = vmatpush1.bf16.msra.mxu0 0
      %760 = vmatprep.subr.bf16.mxu0 0
      %761 = vmatpush1.bf16.msra.mxu0 0
      %762 = vmatprep.subr.bf16.mxu0 0
      %763 = vmatpush1.bf16.msra.mxu0 0
      %764 = vmatprep.subr.bf16.mxu0 0
      %765 = vmatpush1.bf16.msra.mxu0 0
      %766 = vmatprep.subr.bf16.mxu0 0
      %767 = vmatpush1.bf16.msra.mxu0 0
      %768 = vmatprep.subr.bf16.mxu0 0
      %769 = vmatpush1.bf16.msra.mxu0 0
      %770 = vmatprep.mubr.bf16.mxu0 0
      %771 = vmatmul.mubr.bf16.gmra.mrb[0].mxu0 %v648
      %v772 = vpop.f32.mrb[0].mxu0
      %v773 = vadd.f32 %v501, %v772
      %v774 = vpop.f32.mrb[0].mxu0
      %v775 = vpop.f32.mrb[0].mxu0
      %v776 = vadd.f32 %v501, %v775
      %v777 = vpop.f32.mrb[0].mxu0
      %778 = vmatprep.mubr.bf16.mxu0 0
      %779 = vmatmul.mubr.bf16.gmra.mrb[0].mxu0 %v651
      %v780 = vpop.f32.mrb[0].mxu0
      %v781 = vadd.f32 %v501, %v780
      %v782 = vpop.f32.mrb[0].mxu0
      %v783 = vpop.f32.mrb[0].mxu0
      %v784 = vadd.f32 %v501, %v783
      %v785 = vpop.f32.mrb[0].mxu0
      %786 = vmatprep.mubr.bf16.mxu0 0
      %787 = vmatmul.mubr.bf16.gmra.mrb[0].mxu0 %v654
      %v788 = vpop.f32.mrb[0].mxu0
      %v789 = vadd.f32 %v501, %v788
      %v790 = vpop.f32.mrb[0].mxu0
      %v791 = vpop.f32.mrb[0].mxu0
      %v792 = vadd.f32 %v501, %v791
      %v793 = vpop.f32.mrb[0].mxu0
      %794 = vmatprep.mubr.bf16.mxu0 0
      %795 = vmatmul.mubr.bf16.gmra.mrb[0].mxu0 %v657
      %v796 = vpop.f32.mrb[0].mxu0
      %v797 = vadd.f32 %v501, %v796
      %v798 = vpop.f32.mrb[0].mxu0
      %v799 = vpop.f32.mrb[0].mxu0
      %v800 = vadd.f32 %v501, %v799
      %v801 = vpop.f32.mrb[0].mxu0
      %802 = vmatprep.mubr.bf16.mxu0 0
      %803 = vmatmul.mubr.bf16.gmra.mrb[0].mxu0 %v660
      %v804 = vpop.f32.mrb[0].mxu0
      %v805 = vadd.f32 %v501, %v804
      %v806 = vpop.f32.mrb[0].mxu0
      %v807 = vpop.f32.mrb[0].mxu0
      %v808 = vadd.f32 %v501, %v807
      %v809 = vpop.f32.mrb[0].mxu0
      %810 = vmatprep.mubr.bf16.mxu0 0
      %811 = vmatmul.mubr.bf16.gmra.mrb[0].mxu0 %v663
      %v812 = vpop.f32.mrb[0].mxu0
      %v813 = vadd.f32 %v501, %v812
      %v814 = vpop.f32.mrb[0].mxu0
      %v815 = vpop.f32.mrb[0].mxu0
      %v816 = vadd.f32 %v501, %v815
      %v817 = vpop.f32.mrb[0].mxu0
      %818 = vmatprep.mubr.bf16.mxu0 0
      %819 = vmatmul.mubr.bf16.gmra.mrb[0].mxu0 %v666
      %v820 = vpop.f32.mrb[0].mxu0
      %v821 = vadd.f32 %v501, %v820
      %v822 = vpop.f32.mrb[0].mxu0
      %v823 = vpop.f32.mrb[0].mxu0
      %v824 = vadd.f32 %v501, %v823
      %v825 = vpop.f32.mrb[0].mxu0
      %826 = vmatprep.mubr.bf16.mxu0 0
      %827 = vmatmul.mubr.bf16.gmra.mrb[0].mxu0 %v669
      %v828 = vpop.f32.mrb[0].mxu0
      %v829 = vadd.f32 %v501, %v828
      %v830 = vpop.f32.mrb[0].mxu0
      %v831 = vpop.f32.mrb[0].mxu0
      %v832 = vadd.f32 %v501, %v831
      %v833 = vpop.f32.mrb[0].mxu0
      %834 = vmatprep.mubr.bf16.mxu0 0
      %835 = vmatmul.mubr.bf16.gmra.mrb[0].mxu0 %v672
      %v836 = vpop.f32.mrb[0].mxu0
      %v837 = vadd.f32 %v501, %v836
      %v838 = vpop.f32.mrb[0].mxu0
      %v839 = vpop.f32.mrb[0].mxu0
      %v840 = vadd.f32 %v501, %v839
      %v841 = vpop.f32.mrb[0].mxu0
      %842 = vmatprep.mubr.bf16.mxu0 0
      %843 = vmatmul.mubr.bf16.gmra.mrb[0].mxu0 %v675
      %v844 = vpop.f32.mrb[0].mxu0
      %v845 = vadd.f32 %v501, %v844
      %v846 = vpop.f32.mrb[0].mxu0
      %v847 = vpop.f32.mrb[0].mxu0
      %v848 = vadd.f32 %v501, %v847
      %v849 = vpop.f32.mrb[0].mxu0
      %850 = vmatprep.mubr.bf16.mxu0 0
      %851 = vmatmul.mubr.bf16.gmra.mrb[0].mxu0 %v678
      %v852 = vpop.f32.mrb[0].mxu0
      %v853 = vadd.f32 %v501, %v852
      %v854 = vpop.f32.mrb[0].mxu0
      %v855 = vpop.f32.mrb[0].mxu0
      %v856 = vadd.f32 %v501, %v855
      %v857 = vpop.f32.mrb[0].mxu0
      %858 = vmatprep.mubr.bf16.mxu0 0
      %859 = vmatmul.mubr.bf16.gmra.mrb[0].mxu0 %v681
      %v860 = vpop.f32.mrb[0].mxu0
      %v861 = vadd.f32 %v501, %v860
      %v862 = vpop.f32.mrb[0].mxu0
      %v863 = vpop.f32.mrb[0].mxu0
      %v864 = vadd.f32 %v501, %v863
      %v865 = vpop.f32.mrb[0].mxu0
      %866 = vmatprep.mubr.bf16.mxu0 0
      %867 = vmatmul.mubr.bf16.gmra.mrb[0].mxu0 %v684
      %v868 = vpop.f32.mrb[0].mxu0
      %v869 = vadd.f32 %v501, %v868
      %v870 = vpop.f32.mrb[0].mxu0
      %v871 = vpop.f32.mrb[0].mxu0
      %v872 = vadd.f32 %v501, %v871
      %v873 = vpop.f32.mrb[0].mxu0
      %874 = vmatprep.mubr.bf16.mxu0 0
      %875 = vmatmul.mubr.bf16.gmra.mrb[0].mxu0 %v687
      %v876 = vpop.f32.mrb[0].mxu0
      %v877 = vadd.f32 %v501, %v876
      %v878 = vpop.f32.mrb[0].mxu0
      %v879 = vpop.f32.mrb[0].mxu0
      %v880 = vadd.f32 %v501, %v879
      %v881 = vpop.f32.mrb[0].mxu0
      %882 = vmatprep.mubr.bf16.mxu0 0
      %883 = vmatmul.mubr.bf16.gmra.mrb[0].mxu0 %v690
      %v884 = vpop.f32.mrb[0].mxu0
      %v885 = vadd.f32 %v501, %v884
      %v886 = vpop.f32.mrb[0].mxu0
      %v887 = vpop.f32.mrb[0].mxu0
      %v888 = vadd.f32 %v501, %v887
      %v889 = vpop.f32.mrb[0].mxu0
      %890 = vmatprep.mubr.bf16.mxu0 0
      %891 = vmatmul.mubr.bf16.gmra.mrb[0].mxu0 %v693
      %v892 = vpop.f32.mrb[0].mxu0
      %v893 = vadd.f32 %v501, %v892
      %v894 = vpop.f32.mrb[0].mxu0
      %v895 = vpop.f32.mrb[0].mxu0
      %v896 = vadd.f32 %v501, %v895
      %v897 = vpop.f32.mrb[0].mxu0
      %898 = vmatprep.mubr.bf16.mxu0 0
      %899 = vmatmul.mubr.bf16.gmra.mrb[0].mxu0 %v696
      %v900 = vpop.f32.mrb[0].mxu0
      %v901 = vadd.f32 %v501, %v900
      %v902 = vpop.f32.mrb[0].mxu0
      %v903 = vpop.f32.mrb[0].mxu0
      %v904 = vadd.f32 %v501, %v903
      %v905 = vpop.f32.mrb[0].mxu0
      %906 = vmatprep.mubr.bf16.mxu0 0
      %907 = vmatmul.mubr.bf16.gmra.mrb[0].mxu0 %v699
      %v908 = vpop.f32.mrb[0].mxu0
      %v909 = vadd.f32 %v501, %v908
      %v910 = vpop.f32.mrb[0].mxu0
      %v911 = vpop.f32.mrb[0].mxu0
      %v912 = vadd.f32 %v501, %v911
      %v913 = vpop.f32.mrb[0].mxu0
      %914 = vmatprep.mubr.bf16.mxu0 0
      %915 = vmatmul.mubr.bf16.gmra.mrb[0].mxu0 %v702
      %v916 = vpop.f32.mrb[0].mxu0
      %v917 = vadd.f32 %v501, %v916
      %v918 = vpop.f32.mrb[0].mxu0
      %v919 = vpop.f32.mrb[0].mxu0
      %v920 = vadd.f32 %v501, %v919
      %v921 = vpop.f32.mrb[0].mxu0
      %922 = vmatprep.mubr.bf16.mxu0 0
      %923 = vmatmul.mubr.bf16.gmra.mrb[0].mxu0 %v705
      %v924 = vpop.f32.mrb[0].mxu0
      %v925 = vadd.f32 %v501, %v924
      %v926 = vpop.f32.mrb[0].mxu0
      %v927 = vpop.f32.mrb[0].mxu0
      %v928 = vadd.f32 %v501, %v927
      %v929 = vpop.f32.mrb[0].mxu0
      %930 = vmatprep.mubr.bf16.mxu0 0
      %931 = vmatmul.mubr.bf16.gmra.mrb[0].mxu0 %v708
      %v932 = vpop.f32.mrb[0].mxu0
      %v933 = vadd.f32 %v501, %v932
      %v934 = vpop.f32.mrb[0].mxu0
      %v935 = vpop.f32.mrb[0].mxu0
      %v936 = vadd.f32 %v501, %v935
      %v937 = vpop.f32.mrb[0].mxu0
      %938 = vmatprep.mubr.bf16.mxu0 0
      %939 = vmatmul.mubr.bf16.gmra.mrb[0].mxu0 %v711
      %v940 = vpop.f32.mrb[0].mxu0
      %v941 = vadd.f32 %v501, %v940
      %v942 = vpop.f32.mrb[0].mxu0
      %v943 = vpop.f32.mrb[0].mxu0
      %v944 = vadd.f32 %v501, %v943
      %v945 = vpop.f32.mrb[0].mxu0
      %946 = vmatprep.mubr.bf16.mxu0 0
      %947 = vmatmul.mubr.bf16.gmra.mrb[0].mxu0 %v714
      %v948 = vpop.f32.mrb[0].mxu0
      %v949 = vadd.f32 %v501, %v948
      %v950 = vpop.f32.mrb[0].mxu0
      %v951 = vpop.f32.mrb[0].mxu0
      %v952 = vadd.f32 %v501, %v951
      %v953 = vpop.f32.mrb[0].mxu0
      %954 = vmatprep.mubr.bf16.mxu0 0
      %955 = vmatmul.mubr.bf16.gmra.mrb[0].mxu0 %v717
      %v956 = vpop.f32.mrb[0].mxu0
      %v957 = vadd.f32 %v501, %v956
      %v958 = vpop.f32.mrb[0].mxu0
      %v959 = vpop.f32.mrb[0].mxu0
      %v960 = vadd.f32 %v501, %v959
      %v961 = vpop.f32.mrb[0].mxu0
      %962 = vmatprep.mubr.bf16.mxu0 0
      %963 = vmatmul.mubr.bf16.gmra.mrb[0].mxu0 %v720
      %v964 = vpop.f32.mrb[0].mxu0
      %v965 = vadd.f32 %v501, %v964
      %v966 = vpop.f32.mrb[0].mxu0
      %v967 = vpop.f32.mrb[0].mxu0
      %v968 = vadd.f32 %v501, %v967
      %v969 = vpop.f32.mrb[0].mxu0
      %970 = vmatprep.mubr.bf16.mxu0 0
      %971 = vmatmul.mubr.bf16.gmra.mrb[0].mxu0 %v723
      %v972 = vpop.f32.mrb[0].mxu0
      %v973 = vadd.f32 %v501, %v972
      %v974 = vpop.f32.mrb[0].mxu0
      %v975 = vpop.f32.mrb[0].mxu0
      %v976 = vadd.f32 %v501, %v975
      %v977 = vpop.f32.mrb[0].mxu0
      %978 = vmatprep.mubr.bf16.mxu0 0
      %979 = vmatmul.mubr.bf16.gmra.mrb[0].mxu0 %v726
      %v980 = vpop.f32.mrb[0].mxu0
      %v981 = vadd.f32 %v501, %v980
      %v982 = vpop.f32.mrb[0].mxu0
      %v983 = vpop.f32.mrb[0].mxu0
      %v984 = vadd.f32 %v501, %v983
      %v985 = vpop.f32.mrb[0].mxu0
      %986 = vmatprep.mubr.bf16.mxu0 0
      %987 = vmatmul.mubr.bf16.gmra.mrb[0].mxu0 %v729
      %v988 = vpop.f32.mrb[0].mxu0
      %v989 = vadd.f32 %v501, %v988
      %v990 = vpop.f32.mrb[0].mxu0
      %v991 = vpop.f32.mrb[0].mxu0
      %v992 = vadd.f32 %v501, %v991
      %v993 = vpop.f32.mrb[0].mxu0
      %994 = vmatprep.mubr.bf16.mxu0 0
      %995 = vmatmul.mubr.bf16.gmra.mrb[0].mxu0 %v732
      %v996 = vpop.f32.mrb[0].mxu0
      %v997 = vpop.f32.mrb[0].mxu0
      %v998 = vpop.f32.mrb[0].mxu0
      %v999 = vpop.f32.mrb[0].mxu0
      %1000 = vdwg.mxu0
      %v1001 = vmax.f32 %v773, 0.0
      %v1002 = vmax.f32 %v776, 0.0
      %v1003 = vmax.f32 %v781, 0.0
      %v1004 = vmax.f32 %v784, 0.0
      %v1005 = vmax.f32 %v789, 0.0
      %v1006 = vmax.f32 %v792, 0.0
      %v1007 = vmax.f32 %v797, 0.0
      %v1008 = vmax.f32 %v800, 0.0
      %v1009 = vmax.f32 %v805, 0.0
      %v1010 = vmax.f32 %v808, 0.0
      %v1011 = vmax.f32 %v813, 0.0
      %v1012 = vmax.f32 %v816, 0.0
      %v1013 = vmax.f32 %v821, 0.0
      %v1014 = vmax.f32 %v824, 0.0
      %v1015 = vmax.f32 %v829, 0.0
      %v1016 = vmax.f32 %v832, 0.0
      %v1017 = vmax.f32 %v837, 0.0
      %v1018 = vmax.f32 %v840, 0.0
      %v1019 = vmax.f32 %v845, 0.0
      %v1020 = vmax.f32 %v848, 0.0
      %v1021 = vmax.f32 %v853, 0.0
      %v1022 = vmax.f32 %v856, 0.0
      %v1023 = vmax.f32 %v861, 0.0
      %v1024 = vmax.f32 %v864, 0.0
      %v1025 = vmax.f32 %v869, 0.0
      %v1026 = vmax.f32 %v872, 0.0
      %v1027 = vmax.f32 %v877, 0.0
      %v1028 = vmax.f32 %v880, 0.0
      %v1029 = vmax.f32 %v885, 0.0
      %v1030 = vmax.f32 %v888, 0.0
      %v1031 = vmax.f32 %v893, 0.0
      %v1032 = vmax.f32 %v896, 0.0
      %v1033 = vmax.f32 %v901, 0.0
      %v1034 = vmax.f32 %v904, 0.0
      %v1035 = vmax.f32 %v909, 0.0
      %v1036 = vmax.f32 %v912, 0.0
      %v1037 = vmax.f32 %v917, 0.0
      %v1038 = vmax.f32 %v920, 0.0
      %v1039 = vmax.f32 %v925, 0.0
      %v1040 = vmax.f32 %v928, 0.0
      %v1041 = vmax.f32 %v933, 0.0
      %v1042 = vmax.f32 %v936, 0.0
      %v1043 = vmax.f32 %v941, 0.0
      %v1044 = vmax.f32 %v944, 0.0
      %v1045 = vmax.f32 %v949, 0.0
      %v1046 = vmax.f32 %v952, 0.0
      %v1047 = vmax.f32 %v957, 0.0
      %v1048 = vmax.f32 %v960, 0.0
      %v1049 = vmax.f32 %v965, 0.0
      %v1050 = vmax.f32 %v968, 0.0
      %v1051 = vmax.f32 %v973, 0.0
      %v1052 = vmax.f32 %v976, 0.0
      %v1053 = vmax.f32 %v981, 0.0
      %v1054 = vmax.f32 %v984, 0.0
      %v1055 = vmax.f32 %v989, 0.0
      %v1056 = vmax.f32 %v992, 0.0
      %v1057 = vpack.c.bf16 %v1002, %v1001
      %v1058 = vpack.c.bf16 %v1004, %v1003
      %v1059 = vpack.c.bf16 %v1006, %v1005
      %v1060 = vpack.c.bf16 %v1008, %v1007
      %v1061 = vpack.c.bf16 %v1010, %v1009
      %v1062 = vpack.c.bf16 %v1012, %v1011
      %v1063 = vpack.c.bf16 %v1014, %v1013
      %v1064 = vpack.c.bf16 %v1016, %v1015
      %v1065 = vpack.c.bf16 %v1018, %v1017
      %v1066 = vpack.c.bf16 %v1020, %v1019
      %v1067 = vpack.c.bf16 %v1022, %v1021
      %v1068 = vpack.c.bf16 %v1024, %v1023
      %v1069 = vpack.c.bf16 %v1026, %v1025
      %v1070 = vpack.c.bf16 %v1028, %v1027
      %v1071 = vpack.c.bf16 %v1030, %v1029
      %v1072 = vpack.c.bf16 %v1032, %v1031
      %v1073 = vpack.c.bf16 %v1034, %v1033
      %v1074 = vpack.c.bf16 %v1036, %v1035
      %v1075 = vpack.c.bf16 %v1038, %v1037
      %v1076 = vpack.c.bf16 %v1040, %v1039
      %v1077 = vpack.c.bf16 %v1042, %v1041
      %v1078 = vpack.c.bf16 %v1044, %v1043
      %v1079 = vpack.c.bf16 %v1046, %v1045
      %v1080 = vpack.c.bf16 %v1048, %v1047
      %v1081 = vpack.c.bf16 %v1050, %v1049
      %v1082 = vpack.c.bf16 %v1052, %v1051
      %v1083 = vpack.c.bf16 %v1054, %v1053
      %v1084 = vpack.c.bf16 %v1056, %v1055
      %1086 = vset.pattern.permute.xlu0 0
      %1087 = vperm.xlu0 %1086, %v438
      %v1088 = vpop.permute.xlu0 %1087
      %v1091 = vunpack.c.l.s4 839922192
      %v1092 = vunpack.c.0.s8 %v1091
      %v1093 = vlaneseq
      %v1094 = vshrl.u32 %v1093, 7
      %v1095 = vsub.s32 %v1092, %v1094
      %v1096 = vrot.slane %v1088, %v1095
      %1098 = vset.pattern.permute.xlu0 0
      %1099 = vperm.xlu0 %1098, %v439
      %v1100 = vpop.permute.xlu0 %1099
      %v1103 = vunpack.c.l.s4 839922192
      %v1104 = vunpack.c.0.s8 %v1103
      %v1105 = vlaneseq
      %v1106 = vshrl.u32 %v1105, 7
      %v1107 = vsub.s32 %v1104, %v1106
      %v1108 = vrot.slane %v1100, %v1107
      %1110 = vset.pattern.permute.xlu0 0
      %1111 = vperm.xlu0 %1110, %v440
      %v1112 = vpop.permute.xlu0 %1111
      %v1115 = vunpack.c.l.s4 839922192
      %v1116 = vunpack.c.0.s8 %v1115
      %v1117 = vlaneseq
      %v1118 = vshrl.u32 %v1117, 7
      %v1119 = vsub.s32 %v1116, %v1118
      %v1120 = vrot.slane %v1112, %v1119
      %1122 = vset.pattern.permute.xlu0 0
      %1123 = vperm.xlu0 %1122, %v441
      %v1124 = vpop.permute.xlu0 %1123
      %v1127 = vunpack.c.l.s4 839922192
      %v1128 = vunpack.c.0.s8 %v1127
      %v1129 = vlaneseq
      %v1130 = vshrl.u32 %v1129, 7
      %v1131 = vsub.s32 %v1128, %v1130
      %v1132 = vrot.slane %v1124, %v1131
      %1134 = vset.pattern.permute.xlu0 0
      %1135 = vperm.xlu0 %1134, %v442
      %v1136 = vpop.permute.xlu0 %1135
      %v1139 = vunpack.c.l.s4 839922192
      %v1140 = vunpack.c.0.s8 %v1139
      %v1141 = vlaneseq
      %v1142 = vshrl.u32 %v1141, 7
      %v1143 = vsub.s32 %v1140, %v1142
      %v1144 = vrot.slane %v1136, %v1143
      %1146 = vset.pattern.permute.xlu0 0
      %1147 = vperm.xlu0 %1146, %v443
      %v1148 = vpop.permute.xlu0 %1147
      %v1151 = vunpack.c.l.s4 839922192
      %v1152 = vunpack.c.0.s8 %v1151
      %v1153 = vlaneseq
      %v1154 = vshrl.u32 %v1153, 7
      %v1155 = vsub.s32 %v1152, %v1154
      %v1156 = vrot.slane %v1148, %v1155
      %1158 = vset.pattern.permute.xlu0 0
      %1159 = vperm.xlu0 %1158, %v444
      %v1160 = vpop.permute.xlu0 %1159
      %v1163 = vunpack.c.l.s4 839922192
      %v1164 = vunpack.c.0.s8 %v1163
      %v1165 = vlaneseq
      %v1166 = vshrl.u32 %v1165, 7
      %v1167 = vsub.s32 %v1164, %v1166
      %v1168 = vrot.slane %v1160, %v1167
      %1170 = vset.pattern.permute.xlu0 0
      %1171 = vperm.xlu0 %1170, %v445
      %v1172 = vpop.permute.xlu0 %1171
      %v1175 = vunpack.c.l.s4 839922192
      %v1176 = vunpack.c.0.s8 %v1175
      %v1177 = vlaneseq
      %v1178 = vshrl.u32 %v1177, 7
      %v1179 = vsub.s32 %v1176, %v1178
      %v1180 = vrot.slane %v1172, %v1179
      %1182 = vset.pattern.permute.xlu0 0
      %1183 = vperm.xlu0 %1182, %v446
      %v1184 = vpop.permute.xlu0 %1183
      %v1187 = vunpack.c.l.s4 839922192
      %v1188 = vunpack.c.0.s8 %v1187
      %v1189 = vlaneseq
      %v1190 = vshrl.u32 %v1189, 7
      %v1191 = vsub.s32 %v1188, %v1190
      %v1192 = vrot.slane %v1184, %v1191
      %1194 = vset.pattern.permute.xlu0 0
      %1195 = vperm.xlu0 %1194, %v447
      %v1196 = vpop.permute.xlu0 %1195
      %v1199 = vunpack.c.l.s4 839922192
      %v1200 = vunpack.c.0.s8 %v1199
      %v1201 = vlaneseq
      %v1202 = vshrl.u32 %v1201, 7
      %v1203 = vsub.s32 %v1200, %v1202
      %v1204 = vrot.slane %v1196, %v1203
      %1206 = vset.pattern.permute.xlu0 0
      %1207 = vperm.xlu0 %1206, %v448
      %v1208 = vpop.permute.xlu0 %1207
      %v1211 = vunpack.c.l.s4 839922192
      %v1212 = vunpack.c.0.s8 %v1211
      %v1213 = vlaneseq
      %v1214 = vshrl.u32 %v1213, 7
      %v1215 = vsub.s32 %v1212, %v1214
      %v1216 = vrot.slane %v1208, %v1215
      %1218 = vset.pattern.permute.xlu0 0
      %1219 = vperm.xlu0 %1218, %v449
      %v1220 = vpop.permute.xlu0 %1219
      %v1223 = vunpack.c.l.s4 839922192
      %v1224 = vunpack.c.0.s8 %v1223
      %v1225 = vlaneseq
      %v1226 = vshrl.u32 %v1225, 7
      %v1227 = vsub.s32 %v1224, %v1226
      %v1228 = vrot.slane %v1220, %v1227
      %1230 = vset.pattern.permute.xlu0 0
      %1231 = vperm.xlu0 %1230, %v450
      %v1232 = vpop.permute.xlu0 %1231
      %v1235 = vunpack.c.l.s4 839922192
      %v1236 = vunpack.c.0.s8 %v1235
      %v1237 = vlaneseq
      %v1238 = vshrl.u32 %v1237, 7
      %v1239 = vsub.s32 %v1236, %v1238
      %v1240 = vrot.slane %v1232, %v1239
      %1242 = vset.pattern.permute.xlu0 0
      %1243 = vperm.xlu0 %1242, %v451
      %v1244 = vpop.permute.xlu0 %1243
      %v1247 = vunpack.c.l.s4 839922192
      %v1248 = vunpack.c.0.s8 %v1247
      %v1249 = vlaneseq
      %v1250 = vshrl.u32 %v1249, 7
      %v1251 = vsub.s32 %v1248, %v1250
      %v1252 = vrot.slane %v1244, %v1251
      %1254 = vset.pattern.permute.xlu0 0
      %1255 = vperm.xlu0 %1254, %v452
      %v1256 = vpop.permute.xlu0 %1255
      %v1259 = vunpack.c.l.s4 839922192
      %v1260 = vunpack.c.0.s8 %v1259
      %v1261 = vlaneseq
      %v1262 = vshrl.u32 %v1261, 7
      %v1263 = vsub.s32 %v1260, %v1262
      %v1264 = vrot.slane %v1256, %v1263
      %1266 = vset.pattern.permute.xlu0 0
      %1267 = vperm.xlu0 %1266, %v453
      %v1268 = vpop.permute.xlu0 %1267
      %v1271 = vunpack.c.l.s4 839922192
      %v1272 = vunpack.c.0.s8 %v1271
      %v1273 = vlaneseq
      %v1274 = vshrl.u32 %v1273, 7
      %v1275 = vsub.s32 %v1272, %v1274
      %v1276 = vrot.slane %v1268, %v1275
      %1278 = vset.pattern.permute.xlu0 0
      %1279 = vperm.xlu0 %1278, %v454
      %v1280 = vpop.permute.xlu0 %1279
      %v1283 = vunpack.c.l.s4 839922192
      %v1284 = vunpack.c.0.s8 %v1283
      %v1285 = vlaneseq
      %v1286 = vshrl.u32 %v1285, 7
      %v1287 = vsub.s32 %v1284, %v1286
      %v1288 = vrot.slane %v1280, %v1287
      %1290 = vset.pattern.permute.xlu0 0
      %1291 = vperm.xlu0 %1290, %v455
      %v1292 = vpop.permute.xlu0 %1291
      %v1295 = vunpack.c.l.s4 839922192
      %v1296 = vunpack.c.0.s8 %v1295
      %v1297 = vlaneseq
      %v1298 = vshrl.u32 %v1297, 7
      %v1299 = vsub.s32 %v1296, %v1298
      %v1300 = vrot.slane %v1292, %v1299
      %1302 = vset.pattern.permute.xlu0 0
      %1303 = vperm.xlu0 %1302, %v456
      %v1304 = vpop.permute.xlu0 %1303
      %v1307 = vunpack.c.l.s4 839922192
      %v1308 = vunpack.c.0.s8 %v1307
      %v1309 = vlaneseq
      %v1310 = vshrl.u32 %v1309, 7
      %v1311 = vsub.s32 %v1308, %v1310
      %v1312 = vrot.slane %v1304, %v1311
      %1314 = vset.pattern.permute.xlu0 0
      %1315 = vperm.xlu0 %1314, %v457
      %v1316 = vpop.permute.xlu0 %1315
      %v1319 = vunpack.c.l.s4 839922192
      %v1320 = vunpack.c.0.s8 %v1319
      %v1321 = vlaneseq
      %v1322 = vshrl.u32 %v1321, 7
      %v1323 = vsub.s32 %v1320, %v1322
      %v1324 = vrot.slane %v1316, %v1323
      %1326 = vset.pattern.permute.xlu0 0
      %1327 = vperm.xlu0 %1326, %v458
      %v1328 = vpop.permute.xlu0 %1327
      %v1331 = vunpack.c.l.s4 839922192
      %v1332 = vunpack.c.0.s8 %v1331
      %v1333 = vlaneseq
      %v1334 = vshrl.u32 %v1333, 7
      %v1335 = vsub.s32 %v1332, %v1334
      %v1336 = vrot.slane %v1328, %v1335
      %1338 = vset.pattern.permute.xlu0 0
      %1339 = vperm.xlu0 %1338, %v459
      %v1340 = vpop.permute.xlu0 %1339
      %v1343 = vunpack.c.l.s4 839922192
      %v1344 = vunpack.c.0.s8 %v1343
      %v1345 = vlaneseq
      %v1346 = vshrl.u32 %v1345, 7
      %v1347 = vsub.s32 %v1344, %v1346
      %v1348 = vrot.slane %v1340, %v1347
      %1350 = vset.pattern.permute.xlu0 0
      %1351 = vperm.xlu0 %1350, %v460
      %v1352 = vpop.permute.xlu0 %1351
      %v1355 = vunpack.c.l.s4 839922192
      %v1356 = vunpack.c.0.s8 %v1355
      %v1357 = vlaneseq
      %v1358 = vshrl.u32 %v1357, 7
      %v1359 = vsub.s32 %v1356, %v1358
      %v1360 = vrot.slane %v1352, %v1359
      %1362 = vset.pattern.permute.xlu0 0
      %1363 = vperm.xlu0 %1362, %v461
      %v1364 = vpop.permute.xlu0 %1363
      %v1367 = vunpack.c.l.s4 839922192
      %v1368 = vunpack.c.0.s8 %v1367
      %v1369 = vlaneseq
      %v1370 = vshrl.u32 %v1369, 7
      %v1371 = vsub.s32 %v1368, %v1370
      %v1372 = vrot.slane %v1364, %v1371
      %1374 = vset.pattern.permute.xlu0 0
      %1375 = vperm.xlu0 %1374, %v462
      %v1376 = vpop.permute.xlu0 %1375
      %v1379 = vunpack.c.l.s4 839922192
      %v1380 = vunpack.c.0.s8 %v1379
      %v1381 = vlaneseq
      %v1382 = vshrl.u32 %v1381, 7
      %v1383 = vsub.s32 %v1380, %v1382
      %v1384 = vrot.slane %v1376, %v1383
      %1386 = vset.pattern.permute.xlu0 0
      %1387 = vperm.xlu0 %1386, %v463
      %v1388 = vpop.permute.xlu0 %1387
      %v1391 = vunpack.c.l.s4 839922192
      %v1392 = vunpack.c.0.s8 %v1391
      %v1393 = vlaneseq
      %v1394 = vshrl.u32 %v1393, 7
      %v1395 = vsub.s32 %v1392, %v1394
      %v1396 = vrot.slane %v1388, %v1395
      %1398 = vset.pattern.permute.xlu0 0
      %1399 = vperm.xlu0 %1398, %v464
      %v1400 = vpop.permute.xlu0 %1399
      %v1403 = vunpack.c.l.s4 839922192
      %v1404 = vunpack.c.0.s8 %v1403
      %v1405 = vlaneseq
      %v1406 = vshrl.u32 %v1405, 7
      %v1407 = vsub.s32 %v1404, %v1406
      %v1408 = vrot.slane %v1400, %v1407
      %1410 = vset.pattern.permute.xlu0 0
      %1411 = vperm.xlu0 %1410, %v465
      %v1412 = vpop.permute.xlu0 %1411
      %v1415 = vunpack.c.l.s4 839922192
      %v1416 = vunpack.c.0.s8 %v1415
      %v1417 = vlaneseq
      %v1418 = vshrl.u32 %v1417, 7
      %v1419 = vsub.s32 %v1416, %v1418
      %v1420 = vrot.slane %v1412, %v1419
      %1422 = vset.pattern.permute.xlu0 0
      %1423 = vperm.xlu0 %1422, %v466
      %v1424 = vpop.permute.xlu0 %1423
      %v1427 = vunpack.c.l.s4 839922192
      %v1428 = vunpack.c.0.s8 %v1427
      %v1429 = vlaneseq
      %v1430 = vshrl.u32 %v1429, 7
      %v1431 = vsub.s32 %v1428, %v1430
      %v1432 = vrot.slane %v1424, %v1431
      %1434 = vset.pattern.permute.xlu0 0
      %1435 = vperm.xlu0 %1434, %v467
      %v1436 = vpop.permute.xlu0 %1435
      %v1439 = vunpack.c.l.s4 839922192
      %v1440 = vunpack.c.0.s8 %v1439
      %v1441 = vlaneseq
      %v1442 = vshrl.u32 %v1441, 7
      %v1443 = vsub.s32 %v1440, %v1442
      %v1444 = vrot.slane %v1436, %v1443
      %1446 = vset.pattern.permute.xlu0 0
      %1447 = vperm.xlu0 %1446, %v468
      %v1448 = vpop.permute.xlu0 %1447
      %v1451 = vunpack.c.l.s4 839922192
      %v1452 = vunpack.c.0.s8 %v1451
      %v1453 = vlaneseq
      %v1454 = vshrl.u32 %v1453, 7
      %v1455 = vsub.s32 %v1452, %v1454
      %v1456 = vrot.slane %v1448, %v1455
      %1458 = vset.pattern.permute.xlu0 0
      %1459 = vperm.xlu0 %1458, %v469
      %v1460 = vpop.permute.xlu0 %1459
      %v1463 = vunpack.c.l.s4 839922192
      %v1464 = vunpack.c.0.s8 %v1463
      %v1465 = vlaneseq
      %v1466 = vshrl.u32 %v1465, 7
      %v1467 = vsub.s32 %v1464, %v1466
      %v1468 = vrot.slane %v1460, %v1467
      %1470 = vset.pattern.permute.xlu0 0
      %1471 = vperm.xlu0 %1470, %v470
      %v1472 = vpop.permute.xlu0 %1471
      %v1475 = vunpack.c.l.s4 839922192
      %v1476 = vunpack.c.0.s8 %v1475
      %v1477 = vlaneseq
      %v1478 = vshrl.u32 %v1477, 7
      %v1479 = vsub.s32 %v1476, %v1478
      %v1480 = vrot.slane %v1472, %v1479
      %1482 = vset.pattern.permute.xlu0 0
      %1483 = vperm.xlu0 %1482, %v471
      %v1484 = vpop.permute.xlu0 %1483
      %v1487 = vunpack.c.l.s4 839922192
      %v1488 = vunpack.c.0.s8 %v1487
      %v1489 = vlaneseq
      %v1490 = vshrl.u32 %v1489, 7
      %v1491 = vsub.s32 %v1488, %v1490
      %v1492 = vrot.slane %v1484, %v1491
      %1494 = vset.pattern.permute.xlu0 0
      %1495 = vperm.xlu0 %1494, %v472
      %v1496 = vpop.permute.xlu0 %1495
      %v1499 = vunpack.c.l.s4 839922192
      %v1500 = vunpack.c.0.s8 %v1499
      %v1501 = vlaneseq
      %v1502 = vshrl.u32 %v1501, 7
      %v1503 = vsub.s32 %v1500, %v1502
      %v1504 = vrot.slane %v1496, %v1503
      %1506 = vset.pattern.permute.xlu0 0
      %1507 = vperm.xlu0 %1506, %v473
      %v1508 = vpop.permute.xlu0 %1507
      %v1511 = vunpack.c.l.s4 839922192
      %v1512 = vunpack.c.0.s8 %v1511
      %v1513 = vlaneseq
      %v1514 = vshrl.u32 %v1513, 7
      %v1515 = vsub.s32 %v1512, %v1514
      %v1516 = vrot.slane %v1508, %v1515
      %1518 = vset.pattern.permute.xlu0 0
      %1519 = vperm.xlu0 %1518, %v474
      %v1520 = vpop.permute.xlu0 %1519
      %v1523 = vunpack.c.l.s4 839922192
      %v1524 = vunpack.c.0.s8 %v1523
      %v1525 = vlaneseq
      %v1526 = vshrl.u32 %v1525, 7
      %v1527 = vsub.s32 %v1524, %v1526
      %v1528 = vrot.slane %v1520, %v1527
      %1530 = vset.pattern.permute.xlu0 0
      %1531 = vperm.xlu0 %1530, %v475
      %v1532 = vpop.permute.xlu0 %1531
      %v1535 = vunpack.c.l.s4 839922192
      %v1536 = vunpack.c.0.s8 %v1535
      %v1537 = vlaneseq
      %v1538 = vshrl.u32 %v1537, 7
      %v1539 = vsub.s32 %v1536, %v1538
      %v1540 = vrot.slane %v1532, %v1539
      %1542 = vset.pattern.permute.xlu0 0
      %1543 = vperm.xlu0 %1542, %v476
      %v1544 = vpop.permute.xlu0 %1543
      %v1547 = vunpack.c.l.s4 839922192
      %v1548 = vunpack.c.0.s8 %v1547
      %v1549 = vlaneseq
      %v1550 = vshrl.u32 %v1549, 7
      %v1551 = vsub.s32 %v1548, %v1550
      %v1552 = vrot.slane %v1544, %v1551
      %1554 = vset.pattern.permute.xlu0 0
      %1555 = vperm.xlu0 %1554, %v477
      %v1556 = vpop.permute.xlu0 %1555
      %v1559 = vunpack.c.l.s4 839922192
      %v1560 = vunpack.c.0.s8 %v1559
      %v1561 = vlaneseq
      %v1562 = vshrl.u32 %v1561, 7
      %v1563 = vsub.s32 %v1560, %v1562
      %v1564 = vrot.slane %v1556, %v1563
      %1566 = vset.pattern.permute.xlu0 0
      %1567 = vperm.xlu0 %1566, %v478
      %v1568 = vpop.permute.xlu0 %1567
      %v1571 = vunpack.c.l.s4 839922192
      %v1572 = vunpack.c.0.s8 %v1571
      %v1573 = vlaneseq
      %v1574 = vshrl.u32 %v1573, 7
      %v1575 = vsub.s32 %v1572, %v1574
      %v1576 = vrot.slane %v1568, %v1575
      %1578 = vset.pattern.permute.xlu0 0
      %1579 = vperm.xlu0 %1578, %v479
      %v1580 = vpop.permute.xlu0 %1579
      %v1583 = vunpack.c.l.s4 839922192
      %v1584 = vunpack.c.0.s8 %v1583
      %v1585 = vlaneseq
      %v1586 = vshrl.u32 %v1585, 7
      %v1587 = vsub.s32 %v1584, %v1586
      %v1588 = vrot.slane %v1580, %v1587
      %1590 = vset.pattern.permute.xlu0 0
      %1591 = vperm.xlu0 %1590, %v480
      %v1592 = vpop.permute.xlu0 %1591
      %v1595 = vunpack.c.l.s4 839922192
      %v1596 = vunpack.c.0.s8 %v1595
      %v1597 = vlaneseq
      %v1598 = vshrl.u32 %v1597, 7
      %v1599 = vsub.s32 %v1596, %v1598
      %v1600 = vrot.slane %v1592, %v1599
      %1602 = vset.pattern.permute.xlu0 0
      %1603 = vperm.xlu0 %1602, %v481
      %v1604 = vpop.permute.xlu0 %1603
      %v1607 = vunpack.c.l.s4 839922192
      %v1608 = vunpack.c.0.s8 %v1607
      %v1609 = vlaneseq
      %v1610 = vshrl.u32 %v1609, 7
      %v1611 = vsub.s32 %v1608, %v1610
      %v1612 = vrot.slane %v1604, %v1611
      %1614 = vset.pattern.permute.xlu0 0
      %1615 = vperm.xlu0 %1614, %v482
      %v1616 = vpop.permute.xlu0 %1615
      %v1619 = vunpack.c.l.s4 839922192
      %v1620 = vunpack.c.0.s8 %v1619
      %v1621 = vlaneseq
      %v1622 = vshrl.u32 %v1621, 7
      %v1623 = vsub.s32 %v1620, %v1622
      %v1624 = vrot.slane %v1616, %v1623
      %1626 = vset.pattern.permute.xlu0 0
      %1627 = vperm.xlu0 %1626, %v483
      %v1628 = vpop.permute.xlu0 %1627
      %v1631 = vunpack.c.l.s4 839922192
      %v1632 = vunpack.c.0.s8 %v1631
      %v1633 = vlaneseq
      %v1634 = vshrl.u32 %v1633, 7
      %v1635 = vsub.s32 %v1632, %v1634
      %v1636 = vrot.slane %v1628, %v1635
      %1638 = vset.pattern.permute.xlu0 0
      %1639 = vperm.xlu0 %1638, %v484
      %v1640 = vpop.permute.xlu0 %1639
      %v1643 = vunpack.c.l.s4 839922192
      %v1644 = vunpack.c.0.s8 %v1643
      %v1645 = vlaneseq
      %v1646 = vshrl.u32 %v1645, 7
      %v1647 = vsub.s32 %v1644, %v1646
      %v1648 = vrot.slane %v1640, %v1647
      %1650 = vset.pattern.permute.xlu0 0
      %1651 = vperm.xlu0 %1650, %v485
      %v1652 = vpop.permute.xlu0 %1651
      %v1655 = vunpack.c.l.s4 839922192
      %v1656 = vunpack.c.0.s8 %v1655
      %v1657 = vlaneseq
      %v1658 = vshrl.u32 %v1657, 7
      %v1659 = vsub.s32 %v1656, %v1658
      %v1660 = vrot.slane %v1652, %v1659
      %1662 = vset.pattern.permute.xlu0 0
      %1663 = vperm.xlu0 %1662, %v486
      %v1664 = vpop.permute.xlu0 %1663
      %v1667 = vunpack.c.l.s4 839922192
      %v1668 = vunpack.c.0.s8 %v1667
      %v1669 = vlaneseq
      %v1670 = vshrl.u32 %v1669, 7
      %v1671 = vsub.s32 %v1668, %v1670
      %v1672 = vrot.slane %v1664, %v1671
      %1674 = vset.pattern.permute.xlu0 0
      %1675 = vperm.xlu0 %1674, %v487
      %v1676 = vpop.permute.xlu0 %1675
      %v1679 = vunpack.c.l.s4 839922192
      %v1680 = vunpack.c.0.s8 %v1679
      %v1681 = vlaneseq
      %v1682 = vshrl.u32 %v1681, 7
      %v1683 = vsub.s32 %v1680, %v1682
      %v1684 = vrot.slane %v1676, %v1683
      %1686 = vset.pattern.permute.xlu0 0
      %1687 = vperm.xlu0 %1686, %v488
      %v1688 = vpop.permute.xlu0 %1687
      %v1691 = vunpack.c.l.s4 839922192
      %v1692 = vunpack.c.0.s8 %v1691
      %v1693 = vlaneseq
      %v1694 = vshrl.u32 %v1693, 7
      %v1695 = vsub.s32 %v1692, %v1694
      %v1696 = vrot.slane %v1688, %v1695
      %1698 = vset.pattern.permute.xlu0 0
      %1699 = vperm.xlu0 %1698, %v489
      %v1700 = vpop.permute.xlu0 %1699
      %v1703 = vunpack.c.l.s4 839922192
      %v1704 = vunpack.c.0.s8 %v1703
      %v1705 = vlaneseq
      %v1706 = vshrl.u32 %v1705, 7
      %v1707 = vsub.s32 %v1704, %v1706
      %v1708 = vrot.slane %v1700, %v1707
      %1710 = vset.pattern.permute.xlu0 0
      %1711 = vperm.xlu0 %1710, %v490
      %v1712 = vpop.permute.xlu0 %1711
      %v1715 = vunpack.c.l.s4 839922192
      %v1716 = vunpack.c.0.s8 %v1715
      %v1717 = vlaneseq
      %v1718 = vshrl.u32 %v1717, 7
      %v1719 = vsub.s32 %v1716, %v1718
      %v1720 = vrot.slane %v1712, %v1719
      %1722 = vset.pattern.permute.xlu0 0
      %1723 = vperm.xlu0 %1722, %v491
      %v1724 = vpop.permute.xlu0 %1723
      %v1727 = vunpack.c.l.s4 839922192
      %v1728 = vunpack.c.0.s8 %v1727
      %v1729 = vlaneseq
      %v1730 = vshrl.u32 %v1729, 7
      %v1731 = vsub.s32 %v1728, %v1730
      %v1732 = vrot.slane %v1724, %v1731
      %1734 = vset.pattern.permute.xlu0 0
      %1735 = vperm.xlu0 %1734, %v492
      %v1736 = vpop.permute.xlu0 %1735
      %v1739 = vunpack.c.l.s4 839922192
      %v1740 = vunpack.c.0.s8 %v1739
      %v1741 = vlaneseq
      %v1742 = vshrl.u32 %v1741, 7
      %v1743 = vsub.s32 %v1740, %v1742
      %v1744 = vrot.slane %v1736, %v1743
      %1746 = vset.pattern.permute.xlu0 0
      %1747 = vperm.xlu0 %1746, %v493
      %v1748 = vpop.permute.xlu0 %1747
      %v1751 = vunpack.c.l.s4 839922192
      %v1752 = vunpack.c.0.s8 %v1751
      %v1753 = vlaneseq
      %v1754 = vshrl.u32 %v1753, 7
      %v1755 = vsub.s32 %v1752, %v1754
      %v1756 = vrot.slane %v1748, %v1755
      %v1813 = vunpack.c.l.b16 %v1096
      %v1814 = vunpack.c.l.b16 %v1108
      %v1815 = vunpack.c.l.b16 %v1120
      %v1816 = vunpack.c.l.b16 %v1132
      %v1817 = vunpack.c.l.b16 %v1144
      %v1818 = vunpack.c.l.b16 %v1156
      %v1819 = vunpack.c.l.b16 %v1168
      %v1820 = vunpack.c.l.b16 %v1180
      %v1821 = vunpack.c.l.b16 %v1192
      %v1822 = vunpack.c.l.b16 %v1204
      %v1823 = vunpack.c.l.b16 %v1216
      %v1824 = vunpack.c.l.b16 %v1228
      %v1825 = vunpack.c.l.b16 %v1240
      %v1826 = vunpack.c.l.b16 %v1252
      %v1827 = vunpack.c.l.b16 %v1264
      %v1828 = vunpack.c.l.b16 %v1276
      %v1829 = vunpack.c.l.b16 %v1288
      %v1830 = vunpack.c.l.b16 %v1300
      %v1831 = vunpack.c.l.b16 %v1312
      %v1832 = vunpack.c.l.b16 %v1324
      %v1833 = vunpack.c.l.b16 %v1336
      %v1834 = vunpack.c.l.b16 %v1348
      %v1835 = vunpack.c.l.b16 %v1360
      %v1836 = vunpack.c.l.b16 %v1372
      %v1837 = vunpack.c.l.b16 %v1384
      %v1838 = vunpack.c.l.b16 %v1396
      %v1839 = vunpack.c.l.b16 %v1408
      %v1840 = vunpack.c.l.b16 %v1420
      %v1841 = vunpack.c.l.b16 %v1432
      %v1842 = vunpack.c.l.b16 %v1444
      %v1843 = vunpack.c.l.b16 %v1456
      %v1844 = vunpack.c.l.b16 %v1468
      %v1845 = vunpack.c.l.b16 %v1480
      %v1846 = vunpack.c.l.b16 %v1492
      %v1847 = vunpack.c.l.b16 %v1504
      %v1848 = vunpack.c.l.b16 %v1516
      %v1849 = vunpack.c.l.b16 %v1528
      %v1850 = vunpack.c.l.b16 %v1540
      %v1851 = vunpack.c.l.b16 %v1552
      %v1852 = vunpack.c.l.b16 %v1564
      %v1853 = vunpack.c.l.b16 %v1576
      %v1854 = vunpack.c.l.b16 %v1588
      %v1855 = vunpack.c.l.b16 %v1600
      %v1856 = vunpack.c.l.b16 %v1612
      %v1857 = vunpack.c.l.b16 %v1624
      %v1858 = vunpack.c.l.b16 %v1636
      %v1859 = vunpack.c.l.b16 %v1648
      %v1860 = vunpack.c.l.b16 %v1660
      %v1861 = vunpack.c.l.b16 %v1672
      %v1862 = vunpack.c.l.b16 %v1684
      %v1863 = vunpack.c.l.b16 %v1696
      %v1864 = vunpack.c.l.b16 %v1708
      %v1865 = vunpack.c.l.b16 %v1720
      %v1866 = vunpack.c.l.b16 %v1732
      %v1867 = vunpack.c.l.b16 %v1744
      %v1868 = vunpack.c.l.b16 %v1756
      %v1869 = vpack.c.b16 %v1814, %v1813
      %v1870 = vpack.c.b16 %v1816, %v1815
      %v1871 = vpack.c.b16 %v1818, %v1817
      %v1872 = vpack.c.b16 %v1820, %v1819
      %v1873 = vpack.c.b16 %v1822, %v1821
      %v1874 = vpack.c.b16 %v1824, %v1823
      %v1875 = vpack.c.b16 %v1826, %v1825
      %v1876 = vpack.c.b16 %v1828, %v1827
      %v1877 = vpack.c.b16 %v1830, %v1829
      %v1878 = vpack.c.b16 %v1832, %v1831
      %v1879 = vpack.c.b16 %v1834, %v1833
      %v1880 = vpack.c.b16 %v1836, %v1835
      %v1881 = vpack.c.b16 %v1838, %v1837
      %v1882 = vpack.c.b16 %v1840, %v1839
      %v1883 = vpack.c.b16 %v1842, %v1841
      %v1884 = vpack.c.b16 %v1844, %v1843
      %v1885 = vpack.c.b16 %v1846, %v1845
      %v1886 = vpack.c.b16 %v1848, %v1847
      %v1887 = vpack.c.b16 %v1850, %v1849
      %v1888 = vpack.c.b16 %v1852, %v1851
      %v1889 = vpack.c.b16 %v1854, %v1853
      %v1890 = vpack.c.b16 %v1856, %v1855
      %v1891 = vpack.c.b16 %v1858, %v1857
      %v1892 = vpack.c.b16 %v1860, %v1859
      %v1893 = vpack.c.b16 %v1862, %v1861
      %v1894 = vpack.c.b16 %v1864, %v1863
      %v1895 = vpack.c.b16 %v1866, %v1865
      %v1896 = vpack.c.b16 %v1868, %v1867
      %v1925 = vmul.bf16 %v1057, %v1869
      %v1926 = vmul.bf16 %v1058, %v1870
      %v1927 = vmul.bf16 %v1059, %v1871
      %v1928 = vmul.bf16 %v1060, %v1872
      %v1929 = vmul.bf16 %v1061, %v1873
      %v1930 = vmul.bf16 %v1062, %v1874
      %v1931 = vmul.bf16 %v1063, %v1875
      %v1932 = vmul.bf16 %v1064, %v1876
      %v1933 = vmul.bf16 %v1065, %v1877
      %v1934 = vmul.bf16 %v1066, %v1878
      %v1935 = vmul.bf16 %v1067, %v1879
      %v1936 = vmul.bf16 %v1068, %v1880
      %v1937 = vmul.bf16 %v1069, %v1881
      %v1938 = vmul.bf16 %v1070, %v1882
      %v1939 = vmul.bf16 %v1071, %v1883
      %v1940 = vmul.bf16 %v1072, %v1884
      %v1941 = vmul.bf16 %v1073, %v1885
      %v1942 = vmul.bf16 %v1074, %v1886
      %v1943 = vmul.bf16 %v1075, %v1887
      %v1944 = vmul.bf16 %v1076, %v1888
      %v1945 = vmul.bf16 %v1077, %v1889
      %v1946 = vmul.bf16 %v1078, %v1890
      %v1947 = vmul.bf16 %v1079, %v1891
      %v1948 = vmul.bf16 %v1080, %v1892
      %v1949 = vmul.bf16 %v1081, %v1893
      %v1950 = vmul.bf16 %v1082, %v1894
      %v1951 = vmul.bf16 %v1083, %v1895
      %v1952 = vmul.bf16 %v1084, %v1896
      %vm1953 = vsmask.f32 7424
      %v1955 = vshrl.u32 %v1925, 16
      %v1957 = vshll.u32 %v1925, 16
      %v1959 = vrot.slane %v1957, 1
      %v1960 = vor.u32 %v1955, %v1959
      %v1962 = vshll.u32 %v1926, 16
      %v1964 = vrot.slane %v1962, 1
      %v1965 = vsel %vm1953, %v1960, %v1964
      %v1966 = vshrl.u32 %v1926, 16
      %v1968 = vor.u32 %v1966, %v1964
      %v1970 = vshll.u32 %v1927, 16
      %v1972 = vrot.slane %v1970, 1
      %v1973 = vsel %vm1953, %v1968, %v1972
      %v1974 = vshrl.u32 %v1927, 16
      %v1976 = vor.u32 %v1974, %v1972
      %v1978 = vshll.u32 %v1928, 16
      %v1980 = vrot.slane %v1978, 1
      %v1981 = vsel %vm1953, %v1976, %v1980
      %v1982 = vshrl.u32 %v1928, 16
      %v1984 = vor.u32 %v1982, %v1980
      %v1986 = vshll.u32 %v1929, 16
      %v1988 = vrot.slane %v1986, 1
      %v1989 = vsel %vm1953, %v1984, %v1988
      %v1990 = vshrl.u32 %v1929, 16
      %v1992 = vor.u32 %v1990, %v1988
      %v1994 = vshll.u32 %v1930, 16
      %v1996 = vrot.slane %v1994, 1
      %v1997 = vsel %vm1953, %v1992, %v1996
      %v1998 = vshrl.u32 %v1930, 16
      %v2000 = vor.u32 %v1998, %v1996
      %v2002 = vshll.u32 %v1931, 16
      %v2004 = vrot.slane %v2002, 1
      %v2005 = vsel %vm1953, %v2000, %v2004
      %v2006 = vshrl.u32 %v1931, 16
      %v2008 = vor.u32 %v2006, %v2004
      %v2010 = vshll.u32 %v1932, 16
      %v2012 = vrot.slane %v2010, 1
      %v2013 = vsel %vm1953, %v2008, %v2012
      %v2014 = vshrl.u32 %v1932, 16
      %v2016 = vor.u32 %v2014, %v2012
      %v2018 = vshll.u32 %v1933, 16
      %v2020 = vrot.slane %v2018, 1
      %v2021 = vsel %vm1953, %v2016, %v2020
      %v2022 = vshrl.u32 %v1933, 16
      %v2024 = vor.u32 %v2022, %v2020
      %v2026 = vshll.u32 %v1934, 16
      %v2028 = vrot.slane %v2026, 1
      %v2029 = vsel %vm1953, %v2024, %v2028
      %v2030 = vshrl.u32 %v1934, 16
      %v2032 = vor.u32 %v2030, %v2028
      %v2034 = vshll.u32 %v1935, 16
      %v2036 = vrot.slane %v2034, 1
      %v2037 = vsel %vm1953, %v2032, %v2036
      %v2038 = vshrl.u32 %v1935, 16
      %v2040 = vor.u32 %v2038, %v2036
      %v2042 = vshll.u32 %v1936, 16
      %v2044 = vrot.slane %v2042, 1
      %v2045 = vsel %vm1953, %v2040, %v2044
      %v2046 = vshrl.u32 %v1936, 16
      %v2048 = vor.u32 %v2046, %v2044
      %v2050 = vshll.u32 %v1937, 16
      %v2052 = vrot.slane %v2050, 1
      %v2053 = vsel %vm1953, %v2048, %v2052
      %v2054 = vshrl.u32 %v1937, 16
      %v2056 = vor.u32 %v2054, %v2052
      %v2058 = vshll.u32 %v1938, 16
      %v2060 = vrot.slane %v2058, 1
      %v2061 = vsel %vm1953, %v2056, %v2060
      %v2062 = vshrl.u32 %v1938, 16
      %v2064 = vor.u32 %v2062, %v2060
      %v2066 = vshll.u32 %v1939, 16
      %v2068 = vrot.slane %v2066, 1
      %v2069 = vsel %vm1953, %v2064, %v2068
      %v2070 = vshrl.u32 %v1939, 16
      %v2072 = vor.u32 %v2070, %v2068
      %v2074 = vshll.u32 %v1940, 16
      %v2076 = vrot.slane %v2074, 1
      %v2077 = vsel %vm1953, %v2072, %v2076
      %v2078 = vshrl.u32 %v1940, 16
      %v2080 = vor.u32 %v2078, %v2076
      %v2082 = vshll.u32 %v1941, 16
      %v2084 = vrot.slane %v2082, 1
      %v2085 = vsel %vm1953, %v2080, %v2084
      %v2086 = vshrl.u32 %v1941, 16
      %v2088 = vor.u32 %v2086, %v2084
      %v2090 = vshll.u32 %v1942, 16
      %v2092 = vrot.slane %v2090, 1
      %v2093 = vsel %vm1953, %v2088, %v2092
      %v2094 = vshrl.u32 %v1942, 16
      %v2096 = vor.u32 %v2094, %v2092
      %v2098 = vshll.u32 %v1943, 16
      %v2100 = vrot.slane %v2098, 1
      %v2101 = vsel %vm1953, %v2096, %v2100
      %v2102 = vshrl.u32 %v1943, 16
      %v2104 = vor.u32 %v2102, %v2100
      %v2106 = vshll.u32 %v1944, 16
      %v2108 = vrot.slane %v2106, 1
      %v2109 = vsel %vm1953, %v2104, %v2108
      %v2110 = vshrl.u32 %v1944, 16
      %v2112 = vor.u32 %v2110, %v2108
      %v2114 = vshll.u32 %v1945, 16
      %v2116 = vrot.slane %v2114, 1
      %v2117 = vsel %vm1953, %v2112, %v2116
      %v2118 = vshrl.u32 %v1945, 16
      %v2120 = vor.u32 %v2118, %v2116
      %v2122 = vshll.u32 %v1946, 16
      %v2124 = vrot.slane %v2122, 1
      %v2125 = vsel %vm1953, %v2120, %v2124
      %v2126 = vshrl.u32 %v1946, 16
      %v2128 = vor.u32 %v2126, %v2124
      %v2130 = vshll.u32 %v1947, 16
      %v2132 = vrot.slane %v2130, 1
      %v2133 = vsel %vm1953, %v2128, %v2132
      %v2134 = vshrl.u32 %v1947, 16
      %v2136 = vor.u32 %v2134, %v2132
      %v2138 = vshll.u32 %v1948, 16
      %v2140 = vrot.slane %v2138, 1
      %v2141 = vsel %vm1953, %v2136, %v2140
      %v2142 = vshrl.u32 %v1948, 16
      %v2144 = vor.u32 %v2142, %v2140
      %v2146 = vshll.u32 %v1949, 16
      %v2148 = vrot.slane %v2146, 1
      %v2149 = vsel %vm1953, %v2144, %v2148
      %v2150 = vshrl.u32 %v1949, 16
      %v2152 = vor.u32 %v2150, %v2148
      %v2154 = vshll.u32 %v1950, 16
      %v2156 = vrot.slane %v2154, 1
      %v2157 = vsel %vm1953, %v2152, %v2156
      %v2158 = vshrl.u32 %v1950, 16
      %v2160 = vor.u32 %v2158, %v2156
      %v2162 = vshll.u32 %v1951, 16
      %v2164 = vrot.slane %v2162, 1
      %v2165 = vsel %vm1953, %v2160, %v2164
      %v2166 = vshrl.u32 %v1951, 16
      %v2168 = vor.u32 %v2166, %v2164
      %v2170 = vshll.u32 %v1952, 16
      %v2172 = vrot.slane %v2170, 1
      %v2173 = vsel %vm1953, %v2168, %v2172
      %2174 = vrot.lane.b32.xlu0 %v1965, 4
      %v2175 = vpop.permute.xlu0 %2174
      %2176 = vrot.lane.b32.xlu0 %v1973, 4
      %v2177 = vpop.permute.xlu0 %2176
      %2178 = vrot.lane.b32.xlu0 %v1981, 4
      %v2179 = vpop.permute.xlu0 %2178
      %2180 = vrot.lane.b32.xlu0 %v1989, 4
      %v2181 = vpop.permute.xlu0 %2180
      %2182 = vrot.lane.b32.xlu0 %v1997, 4
      %v2183 = vpop.permute.xlu0 %2182
      %2184 = vrot.lane.b32.xlu0 %v2005, 4
      %v2185 = vpop.permute.xlu0 %2184
      %2186 = vrot.lane.b32.xlu0 %v2013, 4
      %v2187 = vpop.permute.xlu0 %2186
      %2188 = vrot.lane.b32.xlu0 %v2021, 4
      %v2189 = vpop.permute.xlu0 %2188
      %2190 = vrot.lane.b32.xlu0 %v2029, 4
      %v2191 = vpop.permute.xlu0 %2190
      %2192 = vrot.lane.b32.xlu0 %v2037, 4
      %v2193 = vpop.permute.xlu0 %2192
      %2194 = vrot.lane.b32.xlu0 %v2045, 4
      %v2195 = vpop.permute.xlu0 %2194
      %2196 = vrot.lane.b32.xlu0 %v2053, 4
      %v2197 = vpop.permute.xlu0 %2196
      %2198 = vrot.lane.b32.xlu0 %v2061, 4
      %v2199 = vpop.permute.xlu0 %2198
      %2200 = vrot.lane.b32.xlu0 %v2069, 4
      %v2201 = vpop.permute.xlu0 %2200
      %2202 = vrot.lane.b32.xlu0 %v2077, 4
      %v2203 = vpop.permute.xlu0 %2202
      %2204 = vrot.lane.b32.xlu0 %v2085, 4
      %v2205 = vpop.permute.xlu0 %2204
      %2206 = vrot.lane.b32.xlu0 %v2093, 4
      %v2207 = vpop.permute.xlu0 %2206
      %2208 = vrot.lane.b32.xlu0 %v2101, 4
      %v2209 = vpop.permute.xlu0 %2208
      %2210 = vrot.lane.b32.xlu0 %v2109, 4
      %v2211 = vpop.permute.xlu0 %2210
      %2212 = vrot.lane.b32.xlu0 %v2117, 4
      %v2213 = vpop.permute.xlu0 %2212
      %2214 = vrot.lane.b32.xlu0 %v2125, 4
      %v2215 = vpop.permute.xlu0 %2214
      %2216 = vrot.lane.b32.xlu0 %v2133, 4
      %v2217 = vpop.permute.xlu0 %2216
      %2218 = vrot.lane.b32.xlu0 %v2141, 4
      %v2219 = vpop.permute.xlu0 %2218
      %2220 = vrot.lane.b32.xlu0 %v2149, 4
      %v2221 = vpop.permute.xlu0 %2220
      %2222 = vrot.lane.b32.xlu0 %v2157, 4
      %v2223 = vpop.permute.xlu0 %2222
      %2224 = vrot.lane.b32.xlu0 %v2165, 4
      %v2225 = vpop.permute.xlu0 %2224
      %2226 = vrot.lane.b32.xlu0 %v2173, 4
      %v2227 = vpop.permute.xlu0 %2226
      %vm2256 = vcmask 1046528
      %v2257 = vrot.slane %v1925, 1
      %v2258 = vrot.slane %v1926, 1
      %v2259 = vsel %vm2256, %v2257, %v2258
      %v2260 = vrot.slane %v1927, 1
      %v2261 = vsel %vm2256, %v2258, %v2260
      %v2262 = vrot.slane %v1928, 1
      %v2263 = vsel %vm2256, %v2260, %v2262
      %v2264 = vrot.slane %v1929, 1
      %v2265 = vsel %vm2256, %v2262, %v2264
      %v2266 = vrot.slane %v1930, 1
      %v2267 = vsel %vm2256, %v2264, %v2266
      %v2268 = vrot.slane %v1931, 1
      %v2269 = vsel %vm2256, %v2266, %v2268
      %v2270 = vrot.slane %v1932, 1
      %v2271 = vsel %vm2256, %v2268, %v2270
      %v2272 = vrot.slane %v1933, 1
      %v2273 = vsel %vm2256, %v2270, %v2272
      %v2274 = vrot.slane %v1934, 1
      %v2275 = vsel %vm2256, %v2272, %v2274
      %v2276 = vrot.slane %v1935, 1
      %v2277 = vsel %vm2256, %v2274, %v2276
      %v2278 = vrot.slane %v1936, 1
      %v2279 = vsel %vm2256, %v2276, %v2278
      %v2280 = vrot.slane %v1937, 1
      %v2281 = vsel %vm2256, %v2278, %v2280
      %v2282 = vrot.slane %v1938, 1
      %v2283 = vsel %vm2256, %v2280, %v2282
      %v2284 = vrot.slane %v1939, 1
      %v2285 = vsel %vm2256, %v2282, %v2284
      %v2286 = vrot.slane %v1940, 1
      %v2287 = vsel %vm2256, %v2284, %v2286
      %v2288 = vrot.slane %v1941, 1
      %v2289 = vsel %vm2256, %v2286, %v2288
      %v2290 = vrot.slane %v1942, 1
      %v2291 = vsel %vm2256, %v2288, %v2290
      %v2292 = vrot.slane %v1943, 1
      %v2293 = vsel %vm2256, %v2290, %v2292
      %v2294 = vrot.slane %v1944, 1
      %v2295 = vsel %vm2256, %v2292, %v2294
      %v2296 = vrot.slane %v1945, 1
      %v2297 = vsel %vm2256, %v2294, %v2296
      %v2298 = vrot.slane %v1946, 1
      %v2299 = vsel %vm2256, %v2296, %v2298
      %v2300 = vrot.slane %v1947, 1
      %v2301 = vsel %vm2256, %v2298, %v2300
      %v2302 = vrot.slane %v1948, 1
      %v2303 = vsel %vm2256, %v2300, %v2302
      %v2304 = vrot.slane %v1949, 1
      %v2305 = vsel %vm2256, %v2302, %v2304
      %v2306 = vrot.slane %v1950, 1
      %v2307 = vsel %vm2256, %v2304, %v2306
      %v2308 = vrot.slane %v1951, 1
      %v2309 = vsel %vm2256, %v2306, %v2308
      %v2310 = vrot.slane %v1952, 1
      %v2311 = vsel %vm2256, %v2308, %v2310
      %2312 = vrot.lane.b32.xlu0 %v2259, 8
      %v2313 = vpop.permute.xlu0 %2312
      %2314 = vrot.lane.b32.xlu0 %v2261, 8
      %v2315 = vpop.permute.xlu0 %2314
      %2316 = vrot.lane.b32.xlu0 %v2263, 8
      %v2317 = vpop.permute.xlu0 %2316
      %2318 = vrot.lane.b32.xlu0 %v2265, 8
      %v2319 = vpop.permute.xlu0 %2318
      %2320 = vrot.lane.b32.xlu0 %v2267, 8
      %v2321 = vpop.permute.xlu0 %2320
      %2322 = vrot.lane.b32.xlu0 %v2269, 8
      %v2323 = vpop.permute.xlu0 %2322
      %2324 = vrot.lane.b32.xlu0 %v2271, 8
      %v2325 = vpop.permute.xlu0 %2324
      %2326 = vrot.lane.b32.xlu0 %v2273, 8
      %v2327 = vpop.permute.xlu0 %2326
      %2328 = vrot.lane.b32.xlu0 %v2275, 8
      %v2329 = vpop.permute.xlu0 %2328
      %2330 = vrot.lane.b32.xlu0 %v2277, 8
      %v2331 = vpop.permute.xlu0 %2330
      %2332 = vrot.lane.b32.xlu0 %v2279, 8
      %v2333 = vpop.permute.xlu0 %2332
      %2334 = vrot.lane.b32.xlu0 %v2281, 8
      %v2335 = vpop.permute.xlu0 %2334
      %2336 = vrot.lane.b32.xlu0 %v2283, 8
      %v2337 = vpop.permute.xlu0 %2336
      %2338 = vrot.lane.b32.xlu0 %v2285, 8
      %v2339 = vpop.permute.xlu0 %2338
      %2340 = vrot.lane.b32.xlu0 %v2287, 8
      %v2341 = vpop.permute.xlu0 %2340
      %2342 = vrot.lane.b32.xlu0 %v2289, 8
      %v2343 = vpop.permute.xlu0 %2342
      %2344 = vrot.lane.b32.xlu0 %v2291, 8
      %v2345 = vpop.permute.xlu0 %2344
      %2346 = vrot.lane.b32.xlu0 %v2293, 8
      %v2347 = vpop.permute.xlu0 %2346
      %2348 = vrot.lane.b32.xlu0 %v2295, 8
      %v2349 = vpop.permute.xlu0 %2348
      %2350 = vrot.lane.b32.xlu0 %v2297, 8
      %v2351 = vpop.permute.xlu0 %2350
      %2352 = vrot.lane.b32.xlu0 %v2299, 8
      %v2353 = vpop.permute.xlu0 %2352
      %2354 = vrot.lane.b32.xlu0 %v2301, 8
      %v2355 = vpop.permute.xlu0 %2354
      %2356 = vrot.lane.b32.xlu0 %v2303, 8
      %v2357 = vpop.permute.xlu0 %2356
      %2358 = vrot.lane.b32.xlu0 %v2305, 8
      %v2359 = vpop.permute.xlu0 %2358
      %2360 = vrot.lane.b32.xlu0 %v2307, 8
      %v2361 = vpop.permute.xlu0 %2360
      %2362 = vrot.lane.b32.xlu0 %v2309, 8
      %v2363 = vpop.permute.xlu0 %2362
      %2364 = vrot.lane.b32.xlu0 %v2311, 8
      %v2365 = vpop.permute.xlu0 %2364
      %v2367 = vsel %vm646, %v1925, %v2175
      %v2369 = vsel %vm646, %v1926, %v2177
      %v2371 = vsel %vm646, %v1927, %v2179
      %v2373 = vsel %vm646, %v1928, %v2181
      %v2375 = vsel %vm646, %v1929, %v2183
      %v2377 = vsel %vm646, %v1930, %v2185
      %v2379 = vsel %vm646, %v1931, %v2187
      %v2381 = vsel %vm646, %v1932, %v2189
      %v2383 = vsel %vm646, %v1933, %v2191
      %v2385 = vsel %vm646, %v1934, %v2193
      %v2387 = vsel %vm646, %v1935, %v2195
      %v2389 = vsel %vm646, %v1936, %v2197
      %v2391 = vsel %vm646, %v1937, %v2199
      %v2393 = vsel %vm646, %v1938, %v2201
      %v2395 = vsel %vm646, %v1939, %v2203
      %v2397 = vsel %vm646, %v1940, %v2205
      %v2399 = vsel %vm646, %v1941, %v2207
      %v2401 = vsel %vm646, %v1942, %v2209
      %v2403 = vsel %vm646, %v1943, %v2211
      %v2405 = vsel %vm646, %v1944, %v2213
      %v2407 = vsel %vm646, %v1945, %v2215
      %v2409 = vsel %vm646, %v1946, %v2217
      %v2411 = vsel %vm646, %v1947, %v2219
      %v2413 = vsel %vm646, %v1948, %v2221
      %v2415 = vsel %vm646, %v1949, %v2223
      %v2417 = vsel %vm646, %v1950, %v2225
      %v2419 = vsel %vm646, %v1951, %v2227
      %vm2420 = vcmask 64512
      %v2422 = vsel %vm2420, %v2367, %v2313
      %v2424 = vsel %vm2420, %v2369, %v2315
      %v2426 = vsel %vm2420, %v2371, %v2317
      %v2428 = vsel %vm2420, %v2373, %v2319
      %v2430 = vsel %vm2420, %v2375, %v2321
      %v2432 = vsel %vm2420, %v2377, %v2323
      %v2434 = vsel %vm2420, %v2379, %v2325
      %v2436 = vsel %vm2420, %v2381, %v2327
      %v2438 = vsel %vm2420, %v2383, %v2329
      %v2440 = vsel %vm2420, %v2385, %v2331
      %v2442 = vsel %vm2420, %v2387, %v2333
      %v2444 = vsel %vm2420, %v2389, %v2335
      %v2446 = vsel %vm2420, %v2391, %v2337
      %v2448 = vsel %vm2420, %v2393, %v2339
      %v2450 = vsel %vm2420, %v2395, %v2341
      %v2452 = vsel %vm2420, %v2397, %v2343
      %v2454 = vsel %vm2420, %v2399, %v2345
      %v2456 = vsel %vm2420, %v2401, %v2347
      %v2458 = vsel %vm2420, %v2403, %v2349
      %v2460 = vsel %vm2420, %v2405, %v2351
      %v2462 = vsel %vm2420, %v2407, %v2353
      %v2464 = vsel %vm2420, %v2409, %v2355
      %v2466 = vsel %vm2420, %v2411, %v2357
      %v2468 = vsel %vm2420, %v2413, %v2359
      %v2470 = vsel %vm2420, %v2415, %v2361
      %v2472 = vsel %vm2420, %v2417, %v2363
      %v2474 = vsel %vm2420, %v2419, %v2365
      %v2475 = vld [vmem:[%s5] sm:$0xf]
      %v2476 = vld [vmem:[%s5 + $0x4] sm:$0x3]
      %s2477 = scalar_lea.vmem %s5, 8
      %v2478 = vld [vmem:[%s2477] sm:$0xf]
      %v2479 = vld [vmem:[%s2477 + $0x4] sm:$0x3]
      %vm2505 = vcmask 1043456
      %v2506 = vrot.slane %v2424, 4
      %v2507 = vrot.slane %v2426, 4
      %v2508 = vsel %vm2505, %v2506, %v2507
      %v2509 = vrot.slane %v2428, 4
      %v2510 = vsel %vm2505, %v2507, %v2509
      %v2511 = vrot.slane %v2430, 4
      %v2512 = vsel %vm2505, %v2509, %v2511
      %v2513 = vrot.slane %v2432, 4
      %v2514 = vsel %vm2505, %v2511, %v2513
      %v2515 = vrot.slane %v2434, 4
      %v2516 = vsel %vm2505, %v2513, %v2515
      %v2517 = vrot.slane %v2436, 4
      %v2518 = vsel %vm2505, %v2515, %v2517
      %v2519 = vrot.slane %v2438, 4
      %v2520 = vsel %vm2505, %v2517, %v2519
      %v2521 = vrot.slane %v2440, 4
      %v2522 = vsel %vm2505, %v2519, %v2521
      %v2523 = vrot.slane %v2442, 4
      %v2524 = vsel %vm2505, %v2521, %v2523
      %v2525 = vrot.slane %v2444, 4
      %v2526 = vsel %vm2505, %v2523, %v2525
      %v2527 = vrot.slane %v2446, 4
      %v2528 = vsel %vm2505, %v2525, %v2527
      %v2529 = vrot.slane %v2448, 4
      %v2530 = vsel %vm2505, %v2527, %v2529
      %v2531 = vrot.slane %v2450, 4
      %v2532 = vsel %vm2505, %v2529, %v2531
      %v2533 = vrot.slane %v2452, 4
      %v2534 = vsel %vm2505, %v2531, %v2533
      %v2535 = vrot.slane %v2454, 4
      %v2536 = vsel %vm2505, %v2533, %v2535
      %v2537 = vrot.slane %v2456, 4
      %v2538 = vsel %vm2505, %v2535, %v2537
      %v2539 = vrot.slane %v2458, 4
      %v2540 = vsel %vm2505, %v2537, %v2539
      %v2541 = vrot.slane %v2460, 4
      %v2542 = vsel %vm2505, %v2539, %v2541
      %v2543 = vrot.slane %v2462, 4
      %v2544 = vsel %vm2505, %v2541, %v2543
      %v2545 = vrot.slane %v2464, 4
      %v2546 = vsel %vm2505, %v2543, %v2545
      %v2547 = vrot.slane %v2466, 4
      %v2548 = vsel %vm2505, %v2545, %v2547
      %v2549 = vrot.slane %v2468, 4
      %v2550 = vsel %vm2505, %v2547, %v2549
      %v2551 = vrot.slane %v2470, 4
      %v2552 = vsel %vm2505, %v2549, %v2551
      %v2553 = vrot.slane %v2472, 4
      %v2554 = vsel %vm2505, %v2551, %v2553
      %v2557 = vunpack.c.l.b16 %v2478
      %v2558 = vunpack.c.l.b16 %v2479
      %v2559 = vpack.c.b16 %v2558, %v2557
      %vm2560 = vcmask 97280
      %v2562 = vsel %vm2560, %v2508, 0
      %v2565 = vsel %vm2560, %v2510, 0
      %v2568 = vsel %vm2560, %v2512, 0
      %v2571 = vsel %vm2560, %v2514, 0
      %v2574 = vsel %vm2560, %v2516, 0
      %v2577 = vsel %vm2560, %v2518, 0
      %v2580 = vsel %vm2560, %v2520, 0
      %v2583 = vsel %vm2560, %v2522, 0
      %v2586 = vsel %vm2560, %v2524, 0
      %v2589 = vsel %vm2560, %v2526, 0
      %v2592 = vsel %vm2560, %v2528, 0
      %v2595 = vsel %vm2560, %v2530, 0
      %v2598 = vsel %vm2560, %v2532, 0
      %v2601 = vsel %vm2560, %v2534, 0
      %v2604 = vsel %vm2560, %v2536, 0
      %v2607 = vsel %vm2560, %v2538, 0
      %v2610 = vsel %vm2560, %v2540, 0
      %v2613 = vsel %vm2560, %v2542, 0
      %v2616 = vsel %vm2560, %v2544, 0
      %v2619 = vsel %vm2560, %v2546, 0
      %v2622 = vsel %vm2560, %v2548, 0
      %v2625 = vsel %vm2560, %v2550, 0
      %v2628 = vsel %vm2560, %v2552, 0
      %v2631 = vsel %vm2560, %v2554, 0
      %vm2633 = vcmask 1045504
      %v2635 = vsel %vm2633, %v2559, 0
      %2637 = vmatprep.subr.bf16.mxu0 0
      %2638 = vmatpush1.bf16.msra.mxu0 %v2635
      %2639 = vmatprep.subr.bf16.mxu0 0
      %2640 = vmatpush1.bf16.msra.mxu0 0
      %2641 = vmatprep.subr.bf16.mxu0 0
      %2642 = vmatpush1.bf16.msra.mxu0 0
      %2643 = vmatprep.subr.bf16.mxu0 0
      %2644 = vmatpush1.bf16.msra.mxu0 0
      %2645 = vmatprep.subr.bf16.mxu0 0
      %2646 = vmatpush1.bf16.msra.mxu0 0
      %2647 = vmatprep.subr.bf16.mxu0 0
      %2648 = vmatpush1.bf16.msra.mxu0 0
      %2649 = vmatprep.subr.bf16.mxu0 0
      %2650 = vmatpush1.bf16.msra.mxu0 0
      %2651 = vmatprep.subr.bf16.mxu0 0
      %2652 = vmatpush1.bf16.msra.mxu0 0
      %2653 = vmatprep.subr.bf16.mxu0 0
      %2654 = vmatpush1.bf16.msra.mxu0 0
      %2655 = vmatprep.subr.bf16.mxu0 0
      %2656 = vmatpush1.bf16.msra.mxu0 0
      %2657 = vmatprep.subr.bf16.mxu0 0
      %2658 = vmatpush1.bf16.msra.mxu0 0
      %2659 = vmatprep.subr.bf16.mxu0 0
      %2660 = vmatpush1.bf16.msra.mxu0 0
      %2661 = vmatprep.subr.bf16.mxu0 0
      %2662 = vmatpush1.bf16.msra.mxu0 0
      %2663 = vmatprep.subr.bf16.mxu0 0
      %2664 = vmatpush1.bf16.msra.mxu0 0
      %2665 = vmatprep.subr.bf16.mxu0 0
      %2666 = vmatpush1.bf16.msra.mxu0 0
      %2667 = vmatprep.subr.bf16.mxu0 0
      %2668 = vmatpush1.bf16.msra.mxu0 0
      %2669 = vmatprep.mubr.bf16.mxu0 0
      %2670 = vmatmul.mubr.bf16.gmra.mrb[0].mxu0 %v2562
      %v2671 = vpop.f32.mrb[0].mxu0
      %v2672 = vadd.f32 0.0, %v2671
      %v2673 = vpop.f32.mrb[0].mxu0
      %v2674 = vpop.f32.mrb[0].mxu0
      %v2675 = vadd.f32 0.0, %v2674
      %v2676 = vpop.f32.mrb[0].mxu0
      %2677 = vmatprep.mubr.bf16.mxu0 0
      %2678 = vmatmul.mubr.bf16.gmra.mrb[0].mxu0 %v2565
      %v2679 = vpop.f32.mrb[0].mxu0
      %v2680 = vpop.f32.mrb[0].mxu0
      %v2681 = vpop.f32.mrb[0].mxu0
      %v2682 = vadd.f32 0.0, %v2681
      %v2683 = vpop.f32.mrb[0].mxu0
      %2684 = vmatprep.mubr.bf16.mxu0 0
      %2685 = vmatmul.mubr.bf16.gmra.mrb[0].mxu0 %v2568
      %v2686 = vpop.f32.mrb[0].mxu0
      %v2687 = vadd.f32 0.0, %v2686
      %v2688 = vpop.f32.mrb[0].mxu0
      %v2689 = vpop.f32.mrb[0].mxu0
      %v2690 = vpop.f32.mrb[0].mxu0
      %2691 = vmatprep.mubr.bf16.mxu0 0
      %2692 = vmatmul.mubr.bf16.gmra.mrb[0].mxu0 %v2571
      %v2693 = vpop.f32.mrb[0].mxu0
      %v2694 = vadd.f32 0.0, %v2693
      %v2695 = vpop.f32.mrb[0].mxu0
      %v2696 = vpop.f32.mrb[0].mxu0
      %v2697 = vadd.f32 0.0, %v2696
      %v2698 = vpop.f32.mrb[0].mxu0
      %2699 = vmatprep.mubr.bf16.mxu0 0
      %2700 = vmatmul.mubr.bf16.gmra.mrb[0].mxu0 %v2574
      %v2701 = vpop.f32.mrb[0].mxu0
      %v2702 = vpop.f32.mrb[0].mxu0
      %v2703 = vpop.f32.mrb[0].mxu0
      %v2704 = vadd.f32 0.0, %v2703
      %v2705 = vpop.f32.mrb[0].mxu0
      %2706 = vmatprep.mubr.bf16.mxu0 0
      %2707 = vmatmul.mubr.bf16.gmra.mrb[0].mxu0 %v2577
      %v2708 = vpop.f32.mrb[0].mxu0
      %v2709 = vadd.f32 0.0, %v2708
      %v2710 = vpop.f32.mrb[0].mxu0
      %v2711 = vpop.f32.mrb[0].mxu0
      %v2712 = vpop.f32.mrb[0].mxu0
      %2713 = vmatprep.mubr.bf16.mxu0 0
      %2714 = vmatmul.mubr.bf16.gmra.mrb[0].mxu0 %v2580
      %v2715 = vpop.f32.mrb[0].mxu0
      %v2716 = vadd.f32 0.0, %v2715
      %v2717 = vpop.f32.mrb[0].mxu0
      %v2718 = vpop.f32.mrb[0].mxu0
      %v2719 = vadd.f32 0.0, %v2718
      %v2720 = vpop.f32.mrb[0].mxu0
      %2721 = vmatprep.mubr.bf16.mxu0 0
      %2722 = vmatmul.mubr.bf16.gmra.mrb[0].mxu0 %v2583
      %v2723 = vpop.f32.mrb[0].mxu0
      %v2724 = vpop.f32.mrb[0].mxu0
      %v2725 = vpop.f32.mrb[0].mxu0
      %v2726 = vadd.f32 0.0, %v2725
      %v2727 = vpop.f32.mrb[0].mxu0
      %2728 = vmatprep.mubr.bf16.mxu0 0
      %2729 = vmatmul.mubr.bf16.gmra.mrb[0].mxu0 %v2586
      %v2730 = vpop.f32.mrb[0].mxu0
      %v2731 = vadd.f32 0.0, %v2730
      %v2732 = vpop.f32.mrb[0].mxu0
      %v2733 = vpop.f32.mrb[0].mxu0
      %v2734 = vpop.f32.mrb[0].mxu0
      %2735 = vmatprep.mubr.bf16.mxu0 0
      %2736 = vmatmul.mubr.bf16.gmra.mrb[0].mxu0 %v2589
      %v2737 = vpop.f32.mrb[0].mxu0
      %v2738 = vadd.f32 0.0, %v2737
      %v2739 = vpop.f32.mrb[0].mxu0
      %v2740 = vpop.f32.mrb[0].mxu0
      %v2741 = vadd.f32 0.0, %v2740
      %v2742 = vpop.f32.mrb[0].mxu0
      %2743 = vmatprep.mubr.bf16.mxu0 0
      %2744 = vmatmul.mubr.bf16.gmra.mrb[0].mxu0 %v2592
      %v2745 = vpop.f32.mrb[0].mxu0
      %v2746 = vpop.f32.mrb[0].mxu0
      %v2747 = vpop.f32.mrb[0].mxu0
      %v2748 = vadd.f32 0.0, %v2747
      %v2749 = vpop.f32.mrb[0].mxu0
      %2750 = vmatprep.mubr.bf16.mxu0 0
      %2751 = vmatmul.mubr.bf16.gmra.mrb[0].mxu0 %v2595
      %v2752 = vpop.f32.mrb[0].mxu0
      %v2753 = vadd.f32 0.0, %v2752
      %v2754 = vpop.f32.mrb[0].mxu0
      %v2755 = vpop.f32.mrb[0].mxu0
      %v2756 = vpop.f32.mrb[0].mxu0
      %2757 = vmatprep.mubr.bf16.mxu0 0
      %2758 = vmatmul.mubr.bf16.gmra.mrb[0].mxu0 %v2598
      %v2759 = vpop.f32.mrb[0].mxu0
      %v2760 = vadd.f32 0.0, %v2759
      %v2761 = vpop.f32.mrb[0].mxu0
      %v2762 = vpop.f32.mrb[0].mxu0
      %v2763 = vadd.f32 0.0, %v2762
      %v2764 = vpop.f32.mrb[0].mxu0
      %2765 = vmatprep.mubr.bf16.mxu0 0
      %2766 = vmatmul.mubr.bf16.gmra.mrb[0].mxu0 %v2601
      %v2767 = vpop.f32.mrb[0].mxu0
      %v2768 = vpop.f32.mrb[0].mxu0
      %v2769 = vpop.f32.mrb[0].mxu0
      %v2770 = vadd.f32 0.0, %v2769
      %v2771 = vpop.f32.mrb[0].mxu0
      %2772 = vmatprep.mubr.bf16.mxu0 0
      %2773 = vmatmul.mubr.bf16.gmra.mrb[0].mxu0 %v2604
      %v2774 = vpop.f32.mrb[0].mxu0
      %v2775 = vadd.f32 0.0, %v2774
      %v2776 = vpop.f32.mrb[0].mxu0
      %v2777 = vpop.f32.mrb[0].mxu0
      %v2778 = vpop.f32.mrb[0].mxu0
      %2779 = vmatprep.mubr.bf16.mxu0 0
      %2780 = vmatmul.mubr.bf16.gmra.mrb[0].mxu0 %v2607
      %v2781 = vpop.f32.mrb[0].mxu0
      %v2782 = vadd.f32 0.0, %v2781
      %v2783 = vpop.f32.mrb[0].mxu0
      %v2784 = vpop.f32.mrb[0].mxu0
      %v2785 = vadd.f32 0.0, %v2784
      %v2786 = vpop.f32.mrb[0].mxu0
      %2787 = vmatprep.mubr.bf16.mxu0 0
      %2788 = vmatmul.mubr.bf16.gmra.mrb[0].mxu0 %v2610
      %v2789 = vpop.f32.mrb[0].mxu0
      %v2790 = vpop.f32.mrb[0].mxu0
      %v2791 = vpop.f32.mrb[0].mxu0
      %v2792 = vadd.f32 0.0, %v2791
      %v2793 = vpop.f32.mrb[0].mxu0
      %2794 = vmatprep.mubr.bf16.mxu0 0
      %2795 = vmatmul.mubr.bf16.gmra.mrb[0].mxu0 %v2613
      %v2796 = vpop.f32.mrb[0].mxu0
      %v2797 = vadd.f32 0.0, %v2796
      %v2798 = vpop.f32.mrb[0].mxu0
      %v2799 = vpop.f32.mrb[0].mxu0
      %v2800 = vpop.f32.mrb[0].mxu0
      %2801 = vmatprep.mubr.bf16.mxu0 0
      %2802 = vmatmul.mubr.bf16.gmra.mrb[0].mxu0 %v2616
      %v2803 = vpop.f32.mrb[0].mxu0
      %v2804 = vadd.f32 0.0, %v2803
      %v2805 = vpop.f32.mrb[0].mxu0
      %v2806 = vpop.f32.mrb[0].mxu0
      %v2807 = vadd.f32 0.0, %v2806
      %v2808 = vpop.f32.mrb[0].mxu0
      %2809 = vmatprep.mubr.bf16.mxu0 0
      %2810 = vmatmul.mubr.bf16.gmra.mrb[0].mxu0 %v2619
      %v2811 = vpop.f32.mrb[0].mxu0
      %v2812 = vpop.f32.mrb[0].mxu0
      %v2813 = vpop.f32.mrb[0].mxu0
      %v2814 = vadd.f32 0.0, %v2813
      %v2815 = vpop.f32.mrb[0].mxu0
      %2816 = vmatprep.mubr.bf16.mxu0 0
      %2817 = vmatmul.mubr.bf16.gmra.mrb[0].mxu0 %v2622
      %v2818 = vpop.f32.mrb[0].mxu0
      %v2819 = vadd.f32 0.0, %v2818
      %v2820 = vpop.f32.mrb[0].mxu0
      %v2821 = vpop.f32.mrb[0].mxu0
      %v2822 = vpop.f32.mrb[0].mxu0
      %2823 = vmatprep.mubr.bf16.mxu0 0
      %2824 = vmatmul.mubr.bf16.gmra.mrb[0].mxu0 %v2625
      %v2825 = vpop.f32.mrb[0].mxu0
      %v2826 = vadd.f32 0.0, %v2825
      %v2827 = vpop.f32.mrb[0].mxu0
      %v2828 = vpop.f32.mrb[0].mxu0
      %v2829 = vadd.f32 0.0, %v2828
      %v2830 = vpop.f32.mrb[0].mxu0
      %2831 = vmatprep.mubr.bf16.mxu0 0
      %2832 = vmatmul.mubr.bf16.gmra.mrb[0].mxu0 %v2628
      %v2833 = vpop.f32.mrb[0].mxu0
      %v2834 = vpop.f32.mrb[0].mxu0
      %v2835 = vpop.f32.mrb[0].mxu0
      %v2836 = vadd.f32 0.0, %v2835
      %v2837 = vpop.f32.mrb[0].mxu0
      %2838 = vmatprep.mubr.bf16.mxu0 0
      %2839 = vmatmul.mubr.bf16.gmra.mrb[0].mxu0 %v2631
      %v2840 = vpop.f32.mrb[0].mxu0
      %v2841 = vadd.f32 0.0, %v2840
      %v2842 = vpop.f32.mrb[0].mxu0
      %v2843 = vpop.f32.mrb[0].mxu0
      %v2844 = vpop.f32.mrb[0].mxu0
      %2845 = vdwg.mxu0
      %v2848 = vunpack.c.l.b16 %v2475
      %v2849 = vunpack.c.l.b16 %v2476
      %v2850 = vpack.c.b16 %v2849, %v2848
      %v2851 = vsel %vm2560, %v2422, 0
      %v2853 = vsel %vm2560, %v2424, 0
      %v2855 = vsel %vm2560, %v2426, 0
      %v2857 = vsel %vm2560, %v2428, 0
      %v2859 = vsel %vm2560, %v2430, 0
      %v2861 = vsel %vm2560, %v2432, 0
      %v2863 = vsel %vm2560, %v2434, 0
      %v2865 = vsel %vm2560, %v2436, 0
      %v2867 = vsel %vm2560, %v2438, 0
      %v2869 = vsel %vm2560, %v2440, 0
      %v2871 = vsel %vm2560, %v2442, 0
      %v2873 = vsel %vm2560, %v2444, 0
      %v2875 = vsel %vm2560, %v2446, 0
      %v2877 = vsel %vm2560, %v2448, 0
      %v2879 = vsel %vm2560, %v2450, 0
      %v2881 = vsel %vm2560, %v2452, 0
      %v2883 = vsel %vm2560, %v2454, 0
      %v2885 = vsel %vm2560, %v2456, 0
      %v2887 = vsel %vm2560, %v2458, 0
      %v2889 = vsel %vm2560, %v2460, 0
      %v2891 = vsel %vm2560, %v2462, 0
      %v2893 = vsel %vm2560, %v2464, 0
      %v2895 = vsel %vm2560, %v2466, 0
      %v2897 = vsel %vm2560, %v2468, 0
      %v2900 = vsel %vm2633, %v2850, 0
      %2902 = vmatprep.subr.bf16.mxu0 0
      %2903 = vmatpush1.bf16.msra.mxu0 %v2900
      %2904 = vmatprep.subr.bf16.mxu0 0
      %2905 = vmatpush1.bf16.msra.mxu0 0
      %2906 = vmatprep.subr.bf16.mxu0 0
      %2907 = vmatpush1.bf16.msra.mxu0 0
      %2908 = vmatprep.subr.bf16.mxu0 0
      %2909 = vmatpush1.bf16.msra.mxu0 0
      %2910 = vmatprep.subr.bf16.mxu0 0
      %2911 = vmatpush1.bf16.msra.mxu0 0
      %2912 = vmatprep.subr.bf16.mxu0 0
      %2913 = vmatpush1.bf16.msra.mxu0 0
      %2914 = vmatprep.subr.bf16.mxu0 0
      %2915 = vmatpush1.bf16.msra.mxu0 0
      %2916 = vmatprep.subr.bf16.mxu0 0
      %2917 = vmatpush1.bf16.msra.mxu0 0
      %2918 = vmatprep.subr.bf16.mxu0 0
      %2919 = vmatpush1.bf16.msra.mxu0 0
      %2920 = vmatprep.subr.bf16.mxu0 0
      %2921 = vmatpush1.bf16.msra.mxu0 0
      %2922 = vmatprep.subr.bf16.mxu0 0
      %2923 = vmatpush1.bf16.msra.mxu0 0
      %2924 = vmatprep.subr.bf16.mxu0 0
      %2925 = vmatpush1.bf16.msra.mxu0 0
      %2926 = vmatprep.subr.bf16.mxu0 0
      %2927 = vmatpush1.bf16.msra.mxu0 0
      %2928 = vmatprep.subr.bf16.mxu0 0
      %2929 = vmatpush1.bf16.msra.mxu0 0
      %2930 = vmatprep.subr.bf16.mxu0 0
      %2931 = vmatpush1.bf16.msra.mxu0 0
      %2932 = vmatprep.subr.bf16.mxu0 0
      %2933 = vmatpush1.bf16.msra.mxu0 0
      %2934 = vmatprep.mubr.bf16.mxu0 0
      %2935 = vmatmul.mubr.bf16.gmra.mrb[0].mxu0 %v2851
      %v2936 = vpop.f32.mrb[0].mxu0
      %v2937 = vadd.f32 %v2672, %v2936
      %v2938 = vpop.f32.mrb[0].mxu0
      %v2939 = vpop.f32.mrb[0].mxu0
      %v2940 = vadd.f32 %v2675, %v2939
      %v2941 = vpop.f32.mrb[0].mxu0
      %2942 = vmatprep.mubr.bf16.mxu0 0
      %2943 = vmatmul.mubr.bf16.gmra.mrb[0].mxu0 %v2853
      %v2944 = vpop.f32.mrb[0].mxu0
      %v2945 = vpop.f32.mrb[0].mxu0
      %v2946 = vpop.f32.mrb[0].mxu0
      %v2947 = vadd.f32 %v2682, %v2946
      %v2948 = vpop.f32.mrb[0].mxu0
      %2949 = vmatprep.mubr.bf16.mxu0 0
      %2950 = vmatmul.mubr.bf16.gmra.mrb[0].mxu0 %v2855
      %v2951 = vpop.f32.mrb[0].mxu0
      %v2952 = vadd.f32 %v2687, %v2951
      %v2953 = vpop.f32.mrb[0].mxu0
      %v2954 = vpop.f32.mrb[0].mxu0
      %v2955 = vpop.f32.mrb[0].mxu0
      %2956 = vmatprep.mubr.bf16.mxu0 0
      %2957 = vmatmul.mubr.bf16.gmra.mrb[0].mxu0 %v2857
      %v2958 = vpop.f32.mrb[0].mxu0
      %v2959 = vadd.f32 %v2694, %v2958
      %v2960 = vpop.f32.mrb[0].mxu0
      %v2961 = vpop.f32.mrb[0].mxu0
      %v2962 = vadd.f32 %v2697, %v2961
      %v2963 = vpop.f32.mrb[0].mxu0
      %2964 = vmatprep.mubr.bf16.mxu0 0
      %2965 = vmatmul.mubr.bf16.gmra.mrb[0].mxu0 %v2859
      %v2966 = vpop.f32.mrb[0].mxu0
      %v2967 = vpop.f32.mrb[0].mxu0
      %v2968 = vpop.f32.mrb[0].mxu0
      %v2969 = vadd.f32 %v2704, %v2968
      %v2970 = vpop.f32.mrb[0].mxu0
      %2971 = vmatprep.mubr.bf16.mxu0 0
      %2972 = vmatmul.mubr.bf16.gmra.mrb[0].mxu0 %v2861
      %v2973 = vpop.f32.mrb[0].mxu0
      %v2974 = vadd.f32 %v2709, %v2973
      %v2975 = vpop.f32.mrb[0].mxu0
      %v2976 = vpop.f32.mrb[0].mxu0
      %v2977 = vpop.f32.mrb[0].mxu0
      %2978 = vmatprep.mubr.bf16.mxu0 0
      %2979 = vmatmul.mubr.bf16.gmra.mrb[0].mxu0 %v2863
      %v2980 = vpop.f32.mrb[0].mxu0
      %v2981 = vadd.f32 %v2716, %v2980
      %v2982 = vpop.f32.mrb[0].mxu0
      %v2983 = vpop.f32.mrb[0].mxu0
      %v2984 = vadd.f32 %v2719, %v2983
      %v2985 = vpop.f32.mrb[0].mxu0
      %2986 = vmatprep.mubr.bf16.mxu0 0
      %2987 = vmatmul.mubr.bf16.gmra.mrb[0].mxu0 %v2865
      %v2988 = vpop.f32.mrb[0].mxu0
      %v2989 = vpop.f32.mrb[0].mxu0
      %v2990 = vpop.f32.mrb[0].mxu0
      %v2991 = vadd.f32 %v2726, %v2990
      %v2992 = vpop.f32.mrb[0].mxu0
      %2993 = vmatprep.mubr.bf16.mxu0 0
      %2994 = vmatmul.mubr.bf16.gmra.mrb[0].mxu0 %v2867
      %v2995 = vpop.f32.mrb[0].mxu0
      %v2996 = vadd.f32 %v2731, %v2995
      %v2997 = vpop.f32.mrb[0].mxu0
      %v2998 = vpop.f32.mrb[0].mxu0
      %v2999 = vpop.f32.mrb[0].mxu0
      %3000 = vmatprep.mubr.bf16.mxu0 0
      %3001 = vmatmul.mubr.bf16.gmra.mrb[0].mxu0 %v2869
      %v3002 = vpop.f32.mrb[0].mxu0
      %v3003 = vadd.f32 %v2738, %v3002
      %v3004 = vpop.f32.mrb[0].mxu0
      %v3005 = vpop.f32.mrb[0].mxu0
      %v3006 = vadd.f32 %v2741, %v3005
      %v3007 = vpop.f32.mrb[0].mxu0
      %3008 = vmatprep.mubr.bf16.mxu0 0
      %3009 = vmatmul.mubr.bf16.gmra.mrb[0].mxu0 %v2871
      %v3010 = vpop.f32.mrb[0].mxu0
      %v3011 = vpop.f32.mrb[0].mxu0
      %v3012 = vpop.f32.mrb[0].mxu0
      %v3013 = vadd.f32 %v2748, %v3012
      %v3014 = vpop.f32.mrb[0].mxu0
      %3015 = vmatprep.mubr.bf16.mxu0 0
      %3016 = vmatmul.mubr.bf16.gmra.mrb[0].mxu0 %v2873
      %v3017 = vpop.f32.mrb[0].mxu0
      %v3018 = vadd.f32 %v2753, %v3017
      %v3019 = vpop.f32.mrb[0].mxu0
      %v3020 = vpop.f32.mrb[0].mxu0
      %v3021 = vpop.f32.mrb[0].mxu0
      %3022 = vmatprep.mubr.bf16.mxu0 0
      %3023 = vmatmul.mubr.bf16.gmra.mrb[0].mxu0 %v2875
      %v3024 = vpop.f32.mrb[0].mxu0
      %v3025 = vadd.f32 %v2760, %v3024
      %v3026 = vpop.f32.mrb[0].mxu0
      %v3027 = vpop.f32.mrb[0].mxu0
      %v3028 = vadd.f32 %v2763, %v3027
      %v3029 = vpop.f32.mrb[0].mxu0
      %3030 = vmatprep.mubr.bf16.mxu0 0
      %3031 = vmatmul.mubr.bf16.gmra.mrb[0].mxu0 %v2877
      %v3032 = vpop.f32.mrb[0].mxu0
      %v3033 = vpop.f32.mrb[0].mxu0
      %v3034 = vpop.f32.mrb[0].mxu0
      %v3035 = vadd.f32 %v2770, %v3034
      %v3036 = vpop.f32.mrb[0].mxu0
      %3037 = vmatprep.mubr.bf16.mxu0 0
      %3038 = vmatmul.mubr.bf16.gmra.mrb[0].mxu0 %v2879
      %v3039 = vpop.f32.mrb[0].mxu0
      %v3040 = vadd.f32 %v2775, %v3039
      %v3041 = vpop.f32.mrb[0].mxu0
      %v3042 = vpop.f32.mrb[0].mxu0
      %v3043 = vpop.f32.mrb[0].mxu0
      %3044 = vmatprep.mubr.bf16.mxu0 0
      %3045 = vmatmul.mubr.bf16.gmra.mrb[0].mxu0 %v2881
      %v3046 = vpop.f32.mrb[0].mxu0
      %v3047 = vadd.f32 %v2782, %v3046
      %v3048 = vpop.f32.mrb[0].mxu0
      %v3049 = vpop.f32.mrb[0].mxu0
      %v3050 = vadd.f32 %v2785, %v3049
      %v3051 = vpop.f32.mrb[0].mxu0
      %3052 = vmatprep.mubr.bf16.mxu0 0
      %3053 = vmatmul.mubr.bf16.gmra.mrb[0].mxu0 %v2883
      %v3054 = vpop.f32.mrb[0].mxu0
      %v3055 = vpop.f32.mrb[0].mxu0
      %v3056 = vpop.f32.mrb[0].mxu0
      %v3057 = vadd.f32 %v2792, %v3056
      %v3058 = vpop.f32.mrb[0].mxu0
      %3059 = vmatprep.mubr.bf16.mxu0 0
      %3060 = vmatmul.mubr.bf16.gmra.mrb[0].mxu0 %v2885
      %v3061 = vpop.f32.mrb[0].mxu0
      %v3062 = vadd.f32 %v2797, %v3061
      %v3063 = vpop.f32.mrb[0].mxu0
      %v3064 = vpop.f32.mrb[0].mxu0
      %v3065 = vpop.f32.mrb[0].mxu0
      %3066 = vmatprep.mubr.bf16.mxu0 0
      %3067 = vmatmul.mubr.bf16.gmra.mrb[0].mxu0 %v2887
      %v3068 = vpop.f32.mrb[0].mxu0
      %v3069 = vadd.f32 %v2804, %v3068
      %v3070 = vpop.f32.mrb[0].mxu0
      %v3071 = vpop.f32.mrb[0].mxu0
      %v3072 = vadd.f32 %v2807, %v3071
      %v3073 = vpop.f32.mrb[0].mxu0
      %3074 = vmatprep.mubr.bf16.mxu0 0
      %3075 = vmatmul.mubr.bf16.gmra.mrb[0].mxu0 %v2889
      %v3076 = vpop.f32.mrb[0].mxu0
      %v3077 = vpop.f32.mrb[0].mxu0
      %v3078 = vpop.f32.mrb[0].mxu0
      %v3079 = vadd.f32 %v2814, %v3078
      %v3080 = vpop.f32.mrb[0].mxu0
      %3081 = vmatprep.mubr.bf16.mxu0 0
      %3082 = vmatmul.mubr.bf16.gmra.mrb[0].mxu0 %v2891
      %v3083 = vpop.f32.mrb[0].mxu0
      %v3084 = vadd.f32 %v2819, %v3083
      %v3085 = vpop.f32.mrb[0].mxu0
      %v3086 = vpop.f32.mrb[0].mxu0
      %v3087 = vpop.f32.mrb[0].mxu0
      %3088 = vmatprep.mubr.bf16.mxu0 0
      %3089 = vmatmul.mubr.bf16.gmra.mrb[0].mxu0 %v2893
      %v3090 = vpop.f32.mrb[0].mxu0
      %v3091 = vadd.f32 %v2826, %v3090
      %v3092 = vpop.f32.mrb[0].mxu0
      %v3093 = vpop.f32.mrb[0].mxu0
      %v3094 = vadd.f32 %v2829, %v3093
      %v3095 = vpop.f32.mrb[0].mxu0
      %3096 = vmatprep.mubr.bf16.mxu0 0
      %3097 = vmatmul.mubr.bf16.gmra.mrb[0].mxu0 %v2895
      %v3098 = vpop.f32.mrb[0].mxu0
      %v3099 = vpop.f32.mrb[0].mxu0
      %v3100 = vpop.f32.mrb[0].mxu0
      %v3101 = vadd.f32 %v2836, %v3100
      %v3102 = vpop.f32.mrb[0].mxu0
      %3103 = vmatprep.mubr.bf16.mxu0 0
      %3104 = vmatmul.mubr.bf16.gmra.mrb[0].mxu0 %v2897
      %v3105 = vpop.f32.mrb[0].mxu0
      %v3106 = vadd.f32 %v2841, %v3105
      %v3107 = vpop.f32.mrb[0].mxu0
      %v3108 = vpop.f32.mrb[0].mxu0
      %v3109 = vpop.f32.mrb[0].mxu0
      %3110 = vdwg.mxu0
      %s3111 = scalar_lea.vmem %s5, 16
      %v3112 = vld [vmem:[%s3111] sm:$0xf]
      %v3113 = vld [vmem:[%s3111 + $0x4] sm:$0x3]
      %v3116 = vunpack.c.l.b16 %v3112
      %v3117 = vunpack.c.l.b16 %v3113
      %v3118 = vpack.c.b16 %v3117, %v3116
      %v3119 = vsel %vm2560, %v2470, 0
      %v3121 = vsel %vm2560, %v2472, 0
      %v3123 = vsel %vm2560, %v2474, 0
      %v3126 = vsel %vm2633, %v3118, 0
      %3128 = vmatprep.subr.bf16.mxu0 0
      %3129 = vmatpush1.bf16.msra.mxu0 %v3126
      %3130 = vmatprep.subr.bf16.mxu0 0
      %3131 = vmatpush1.bf16.msra.mxu0 0
      %3132 = vmatprep.subr.bf16.mxu0 0
      %3133 = vmatpush1.bf16.msra.mxu0 0
      %3134 = vmatprep.subr.bf16.mxu0 0
      %3135 = vmatpush1.bf16.msra.mxu0 0
      %3136 = vmatprep.subr.bf16.mxu0 0
      %3137 = vmatpush1.bf16.msra.mxu0 0
      %3138 = vmatprep.subr.bf16.mxu0 0
      %3139 = vmatpush1.bf16.msra.mxu0 0
      %3140 = vmatprep.subr.bf16.mxu0 0
      %3141 = vmatpush1.bf16.msra.mxu0 0
      %3142 = vmatprep.subr.bf16.mxu0 0
      %3143 = vmatpush1.bf16.msra.mxu0 0
      %3144 = vmatprep.subr.bf16.mxu0 0
      %3145 = vmatpush1.bf16.msra.mxu0 0
      %3146 = vmatprep.subr.bf16.mxu0 0
      %3147 = vmatpush1.bf16.msra.mxu0 0
      %3148 = vmatprep.subr.bf16.mxu0 0
      %3149 = vmatpush1.bf16.msra.mxu0 0
      %3150 = vmatprep.subr.bf16.mxu0 0
      %3151 = vmatpush1.bf16.msra.mxu0 0
      %3152 = vmatprep.subr.bf16.mxu0 0
      %3153 = vmatpush1.bf16.msra.mxu0 0
      %3154 = vmatprep.subr.bf16.mxu0 0
      %3155 = vmatpush1.bf16.msra.mxu0 0
      %3156 = vmatprep.subr.bf16.mxu0 0
      %3157 = vmatpush1.bf16.msra.mxu0 0
      %3158 = vmatprep.subr.bf16.mxu0 0
      %3159 = vmatpush1.bf16.msra.mxu0 0
      %3160 = vmatprep.mubr.bf16.mxu0 0
      %3161 = vmatmul.mubr.bf16.gmra.mrb[0].mxu0 %v2857
      %v3162 = vpop.f32.mrb[0].mxu0
      %v3163 = vadd.f32 0.0, %v3162
      %v3164 = vpop.f32.mrb[0].mxu0
      %v3165 = vpop.f32.mrb[0].mxu0
      %v3166 = vadd.f32 0.0, %v3165
      %v3167 = vpop.f32.mrb[0].mxu0
      %3168 = vmatprep.mubr.bf16.mxu0 0
      %3169 = vmatmul.mubr.bf16.gmra.mrb[0].mxu0 %v2859
      %v3170 = vpop.f32.mrb[0].mxu0
      %v3171 = vpop.f32.mrb[0].mxu0
      %v3172 = vpop.f32.mrb[0].mxu0
      %v3173 = vadd.f32 0.0, %v3172
      %v3174 = vpop.f32.mrb[0].mxu0
      %3175 = vmatprep.mubr.bf16.mxu0 0
      %3176 = vmatmul.mubr.bf16.gmra.mrb[0].mxu0 %v2861
      %v3177 = vpop.f32.mrb[0].mxu0
      %v3178 = vadd.f32 0.0, %v3177
      %v3179 = vpop.f32.mrb[0].mxu0
      %v3180 = vpop.f32.mrb[0].mxu0
      %v3181 = vpop.f32.mrb[0].mxu0
      %3182 = vmatprep.mubr.bf16.mxu0 0
      %3183 = vmatmul.mubr.bf16.gmra.mrb[0].mxu0 %v2863
      %v3184 = vpop.f32.mrb[0].mxu0
      %v3185 = vadd.f32 0.0, %v3184
      %v3186 = vpop.f32.mrb[0].mxu0
      %v3187 = vpop.f32.mrb[0].mxu0
      %v3188 = vadd.f32 0.0, %v3187
      %v3189 = vpop.f32.mrb[0].mxu0
      %3190 = vmatprep.mubr.bf16.mxu0 0
      %3191 = vmatmul.mubr.bf16.gmra.mrb[0].mxu0 %v2865
      %v3192 = vpop.f32.mrb[0].mxu0
      %v3193 = vpop.f32.mrb[0].mxu0
      %v3194 = vpop.f32.mrb[0].mxu0
      %v3195 = vadd.f32 0.0, %v3194
      %v3196 = vpop.f32.mrb[0].mxu0
      %3197 = vmatprep.mubr.bf16.mxu0 0
      %3198 = vmatmul.mubr.bf16.gmra.mrb[0].mxu0 %v2867
      %v3199 = vpop.f32.mrb[0].mxu0
      %v3200 = vadd.f32 0.0, %v3199
      %v3201 = vpop.f32.mrb[0].mxu0
      %v3202 = vpop.f32.mrb[0].mxu0
      %v3203 = vpop.f32.mrb[0].mxu0
      %3204 = vmatprep.mubr.bf16.mxu0 0
      %3205 = vmatmul.mubr.bf16.gmra.mrb[0].mxu0 %v2869
      %v3206 = vpop.f32.mrb[0].mxu0
      %v3207 = vadd.f32 0.0, %v3206
      %v3208 = vpop.f32.mrb[0].mxu0
      %v3209 = vpop.f32.mrb[0].mxu0
      %v3210 = vadd.f32 0.0, %v3209
      %v3211 = vpop.f32.mrb[0].mxu0
      %3212 = vmatprep.mubr.bf16.mxu0 0
      %3213 = vmatmul.mubr.bf16.gmra.mrb[0].mxu0 %v2871
      %v3214 = vpop.f32.mrb[0].mxu0
      %v3215 = vpop.f32.mrb[0].mxu0
      %v3216 = vpop.f32.mrb[0].mxu0
      %v3217 = vadd.f32 0.0, %v3216
      %v3218 = vpop.f32.mrb[0].mxu0
      %3219 = vmatprep.mubr.bf16.mxu0 0
      %3220 = vmatmul.mubr.bf16.gmra.mrb[0].mxu0 %v2873
      %v3221 = vpop.f32.mrb[0].mxu0
      %v3222 = vadd.f32 0.0, %v3221
      %v3223 = vpop.f32.mrb[0].mxu0
      %v3224 = vpop.f32.mrb[0].mxu0
      %v3225 = vpop.f32.mrb[0].mxu0
      %3226 = vmatprep.mubr.bf16.mxu0 0
      %3227 = vmatmul.mubr.bf16.gmra.mrb[0].mxu0 %v2875
      %v3228 = vpop.f32.mrb[0].mxu0
      %v3229 = vadd.f32 0.0, %v3228
      %v3230 = vpop.f32.mrb[0].mxu0
      %v3231 = vpop.f32.mrb[0].mxu0
      %v3232 = vadd.f32 0.0, %v3231
      %v3233 = vpop.f32.mrb[0].mxu0
      %3234 = vmatprep.mubr.bf16.mxu0 0
      %3235 = vmatmul.mubr.bf16.gmra.mrb[0].mxu0 %v2877
      %v3236 = vpop.f32.mrb[0].mxu0
      %v3237 = vpop.f32.mrb[0].mxu0
      %v3238 = vpop.f32.mrb[0].mxu0
      %v3239 = vadd.f32 0.0, %v3238
      %v3240 = vpop.f32.mrb[0].mxu0
      %3241 = vmatprep.mubr.bf16.mxu0 0
      %3242 = vmatmul.mubr.bf16.gmra.mrb[0].mxu0 %v2879
      %v3243 = vpop.f32.mrb[0].mxu0
      %v3244 = vadd.f32 0.0, %v3243
      %v3245 = vpop.f32.mrb[0].mxu0
      %v3246 = vpop.f32.mrb[0].mxu0
      %v3247 = vpop.f32.mrb[0].mxu0
      %3248 = vmatprep.mubr.bf16.mxu0 0
      %3249 = vmatmul.mubr.bf16.gmra.mrb[0].mxu0 %v2881
      %v3250 = vpop.f32.mrb[0].mxu0
      %v3251 = vadd.f32 0.0, %v3250
      %v3252 = vpop.f32.mrb[0].mxu0
      %v3253 = vpop.f32.mrb[0].mxu0
      %v3254 = vadd.f32 0.0, %v3253
      %v3255 = vpop.f32.mrb[0].mxu0
      %3256 = vmatprep.mubr.bf16.mxu0 0
      %3257 = vmatmul.mubr.bf16.gmra.mrb[0].mxu0 %v2883
      %v3258 = vpop.f32.mrb[0].mxu0
      %v3259 = vpop.f32.mrb[0].mxu0
      %v3260 = vpop.f32.mrb[0].mxu0
      %v3261 = vadd.f32 0.0, %v3260
      %v3262 = vpop.f32.mrb[0].mxu0
      %3263 = vmatprep.mubr.bf16.mxu0 0
      %3264 = vmatmul.mubr.bf16.gmra.mrb[0].mxu0 %v2885
      %v3265 = vpop.f32.mrb[0].mxu0
      %v3266 = vadd.f32 0.0, %v3265
      %v3267 = vpop.f32.mrb[0].mxu0
      %v3268 = vpop.f32.mrb[0].mxu0
      %v3269 = vpop.f32.mrb[0].mxu0
      %3270 = vmatprep.mubr.bf16.mxu0 0
      %3271 = vmatmul.mubr.bf16.gmra.mrb[0].mxu0 %v2887
      %v3272 = vpop.f32.mrb[0].mxu0
      %v3273 = vadd.f32 0.0, %v3272
      %v3274 = vpop.f32.mrb[0].mxu0
      %v3275 = vpop.f32.mrb[0].mxu0
      %v3276 = vadd.f32 0.0, %v3275
      %v3277 = vpop.f32.mrb[0].mxu0
      %3278 = vmatprep.mubr.bf16.mxu0 0
      %3279 = vmatmul.mubr.bf16.gmra.mrb[0].mxu0 %v2889
      %v3280 = vpop.f32.mrb[0].mxu0
      %v3281 = vpop.f32.mrb[0].mxu0
      %v3282 = vpop.f32.mrb[0].mxu0
      %v3283 = vadd.f32 0.0, %v3282
      %v3284 = vpop.f32.mrb[0].mxu0
      %3285 = vmatprep.mubr.bf16.mxu0 0
      %3286 = vmatmul.mubr.bf16.gmra.mrb[0].mxu0 %v2891
      %v3287 = vpop.f32.mrb[0].mxu0
      %v3288 = vadd.f32 0.0, %v3287
      %v3289 = vpop.f32.mrb[0].mxu0
      %v3290 = vpop.f32.mrb[0].mxu0
      %v3291 = vpop.f32.mrb[0].mxu0
      %3292 = vmatprep.mubr.bf16.mxu0 0
      %3293 = vmatmul.mubr.bf16.gmra.mrb[0].mxu0 %v2893
      %v3294 = vpop.f32.mrb[0].mxu0
      %v3295 = vadd.f32 0.0, %v3294
      %v3296 = vpop.f32.mrb[0].mxu0
      %v3297 = vpop.f32.mrb[0].mxu0
      %v3298 = vadd.f32 0.0, %v3297
      %v3299 = vpop.f32.mrb[0].mxu0
      %3300 = vmatprep.mubr.bf16.mxu0 0
      %3301 = vmatmul.mubr.bf16.gmra.mrb[0].mxu0 %v2895
      %v3302 = vpop.f32.mrb[0].mxu0
      %v3303 = vpop.f32.mrb[0].mxu0
      %v3304 = vpop.f32.mrb[0].mxu0
      %v3305 = vadd.f32 0.0, %v3304
      %v3306 = vpop.f32.mrb[0].mxu0
      %3307 = vmatprep.mubr.bf16.mxu0 0
      %3308 = vmatmul.mubr.bf16.gmra.mrb[0].mxu0 %v2897
      %v3309 = vpop.f32.mrb[0].mxu0
      %v3310 = vadd.f32 0.0, %v3309
      %v3311 = vpop.f32.mrb[0].mxu0
      %v3312 = vpop.f32.mrb[0].mxu0
      %v3313 = vpop.f32.mrb[0].mxu0
      %3314 = vmatprep.mubr.bf16.mxu0 0
      %3315 = vmatmul.mubr.bf16.gmra.mrb[0].mxu0 %v3119
      %v3316 = vpop.f32.mrb[0].mxu0
      %v3317 = vadd.f32 0.0, %v3316
      %v3318 = vpop.f32.mrb[0].mxu0
      %v3319 = vpop.f32.mrb[0].mxu0
      %v3320 = vadd.f32 0.0, %v3319
      %v3321 = vpop.f32.mrb[0].mxu0
      %3322 = vmatprep.mubr.bf16.mxu0 0
      %3323 = vmatmul.mubr.bf16.gmra.mrb[0].mxu0 %v3121
      %v3324 = vpop.f32.mrb[0].mxu0
      %v3325 = vpop.f32.mrb[0].mxu0
      %v3326 = vpop.f32.mrb[0].mxu0
      %v3327 = vadd.f32 0.0, %v3326
      %v3328 = vpop.f32.mrb[0].mxu0
      %3329 = vmatprep.mubr.bf16.mxu0 0
      %3330 = vmatmul.mubr.bf16.gmra.mrb[0].mxu0 %v3123
      %v3331 = vpop.f32.mrb[0].mxu0
      %v3332 = vadd.f32 0.0, %v3331
      %v3333 = vpop.f32.mrb[0].mxu0
      %v3334 = vpop.f32.mrb[0].mxu0
      %v3335 = vpop.f32.mrb[0].mxu0
      %3336 = vdwg.mxu0
      %v3337 = vadd.f32 %v2937, %v3163
      %v3338 = vadd.f32 %v2940, %v3166
      %v3339 = vadd.f32 %v2947, %v3173
      %v3340 = vadd.f32 %v2952, %v3178
      %v3341 = vadd.f32 %v2959, %v3185
      %v3342 = vadd.f32 %v2962, %v3188
      %v3343 = vadd.f32 %v2969, %v3195
      %v3344 = vadd.f32 %v2974, %v3200
      %v3345 = vadd.f32 %v2981, %v3207
      %v3346 = vadd.f32 %v2984, %v3210
      %v3347 = vadd.f32 %v2991, %v3217
      %v3348 = vadd.f32 %v2996, %v3222
      %v3349 = vadd.f32 %v3003, %v3229
      %v3350 = vadd.f32 %v3006, %v3232
      %v3351 = vadd.f32 %v3013, %v3239
      %v3352 = vadd.f32 %v3018, %v3244
      %v3353 = vadd.f32 %v3025, %v3251
      %v3354 = vadd.f32 %v3028, %v3254
      %v3355 = vadd.f32 %v3035, %v3261
      %v3356 = vadd.f32 %v3040, %v3266
      %v3357 = vadd.f32 %v3047, %v3273
      %v3358 = vadd.f32 %v3050, %v3276
      %v3359 = vadd.f32 %v3057, %v3283
      %v3360 = vadd.f32 %v3062, %v3288
      %v3361 = vadd.f32 %v3069, %v3295
      %v3362 = vadd.f32 %v3072, %v3298
      %v3363 = vadd.f32 %v3079, %v3305
      %v3364 = vadd.f32 %v3084, %v3310
      %v3365 = vadd.f32 %v3091, %v3317
      %v3366 = vadd.f32 %v3094, %v3320
      %v3367 = vadd.f32 %v3101, %v3327
      %v3368 = vadd.f32 %v3106, %v3332
      %v3370 = vlaneseq
      %v3371 = vshrl.u32 %v3370, 7
      %v3372 = vsub.s32 0, %v3371
      %v3373 = vrot.slane %v496, %v3372
      %v3375 = vadd.f32 %v3337, %v3373
      %v3376 = vadd.f32 %v3338, %v3373
      %v3377 = vadd.f32 %v3339, %v3373
      %v3378 = vadd.f32 %v3340, %v3373
      %v3379 = vadd.f32 %v3341, %v3373
      %v3380 = vadd.f32 %v3342, %v3373
      %v3381 = vadd.f32 %v3343, %v3373
      %v3382 = vadd.f32 %v3344, %v3373
      %v3383 = vadd.f32 %v3345, %v3373
      %v3384 = vadd.f32 %v3346, %v3373
      %v3385 = vadd.f32 %v3347, %v3373
      %v3386 = vadd.f32 %v3348, %v3373
      %v3387 = vadd.f32 %v3349, %v3373
      %v3388 = vadd.f32 %v3350, %v3373
      %v3389 = vadd.f32 %v3351, %v3373
      %v3390 = vadd.f32 %v3352, %v3373
      %v3391 = vadd.f32 %v3353, %v3373
      %v3392 = vadd.f32 %v3354, %v3373
      %v3393 = vadd.f32 %v3355, %v3373
      %v3394 = vadd.f32 %v3356, %v3373
      %v3395 = vadd.f32 %v3357, %v3373
      %v3396 = vadd.f32 %v3358, %v3373
      %v3397 = vadd.f32 %v3359, %v3373
      %v3398 = vadd.f32 %v3360, %v3373
      %v3399 = vadd.f32 %v3361, %v3373
      %v3400 = vadd.f32 %v3362, %v3373
      %v3401 = vadd.f32 %v3363, %v3373
      %v3402 = vadd.f32 %v3364, %v3373
      %v3403 = vadd.f32 %v3365, %v3373
      %v3404 = vadd.f32 %v3366, %v3373
      %v3405 = vadd.f32 %v3367, %v3373
      %v3406 = vadd.f32 %v3368, %v3373
      %v3407 = vmax.f32 %v3375, 0.0
      %v3408 = vmax.f32 %v3376, 0.0
      %v3409 = vmax.f32 %v3377, 0.0
      %v3410 = vmax.f32 %v3378, 0.0
      %v3411 = vmax.f32 %v3379, 0.0
      %v3412 = vmax.f32 %v3380, 0.0
      %v3413 = vmax.f32 %v3381, 0.0
      %v3414 = vmax.f32 %v3382, 0.0
      %v3415 = vmax.f32 %v3383, 0.0
      %v3416 = vmax.f32 %v3384, 0.0
      %v3417 = vmax.f32 %v3385, 0.0
      %v3418 = vmax.f32 %v3386, 0.0
      %v3419 = vmax.f32 %v3387, 0.0
      %v3420 = vmax.f32 %v3388, 0.0
      %v3421 = vmax.f32 %v3389, 0.0
      %v3422 = vmax.f32 %v3390, 0.0
      %v3423 = vmax.f32 %v3391, 0.0
      %v3424 = vmax.f32 %v3392, 0.0
      %v3425 = vmax.f32 %v3393, 0.0
      %v3426 = vmax.f32 %v3394, 0.0
      %v3427 = vmax.f32 %v3395, 0.0
      %v3428 = vmax.f32 %v3396, 0.0
      %v3429 = vmax.f32 %v3397, 0.0
      %v3430 = vmax.f32 %v3398, 0.0
      %v3431 = vmax.f32 %v3399, 0.0
      %v3432 = vmax.f32 %v3400, 0.0
      %v3433 = vmax.f32 %v3401, 0.0
      %v3434 = vmax.f32 %v3402, 0.0
      %v3435 = vmax.f32 %v3403, 0.0
      %v3436 = vmax.f32 %v3404, 0.0
      %v3437 = vmax.f32 %v3405, 0.0
      %v3438 = vmax.f32 %v3406, 0.0
      %v3439 = vpack.c.bf16 %v3408, %v3407
      %v3440 = vpack.c.bf16 %v3410, %v3409
      %v3441 = vpack.c.bf16 %v3412, %v3411
      %v3442 = vpack.c.bf16 %v3414, %v3413
      %v3443 = vpack.c.bf16 %v3416, %v3415
      %v3444 = vpack.c.bf16 %v3418, %v3417
      %v3445 = vpack.c.bf16 %v3420, %v3419
      %v3446 = vpack.c.bf16 %v3422, %v3421
      %v3447 = vpack.c.bf16 %v3424, %v3423
      %v3448 = vpack.c.bf16 %v3426, %v3425
      %v3449 = vpack.c.bf16 %v3428, %v3427
      %v3450 = vpack.c.bf16 %v3430, %v3429
      %v3451 = vpack.c.bf16 %v3432, %v3431
      %v3452 = vpack.c.bf16 %v3434, %v3433
      %v3453 = vpack.c.bf16 %v3436, %v3435
      %v3454 = vpack.c.bf16 %v3438, %v3437
      %v3455 = vld [vmem:[%s7] sm:$0x3]
      %v3456 = vld [vmem:[%s374] sm:$0xf]
      %v3457 = vld [vmem:[%s374 + $0x4] sm:$0xf]
      %v3458 = vld [vmem:[%s374 + $0x8] sm:$0xf]
      %v3459 = vld [vmem:[%s374 + $0xc] sm:$0xf]
      %v3460 = vld [vmem:[%s374 + $0x10] sm:$0xf]
      %v3461 = vld [vmem:[%s374 + $0x14] sm:$0xf]
      %v3462 = vld [vmem:[%s374 + $0x18] sm:$0xf]
      %v3463 = vld [vmem:[%s374 + $0x1c] sm:$0xf]
      %v3464 = vld [vmem:[%s374 + $0x20] sm:$0xf]
      %v3465 = vld [vmem:[%s374 + $0x24] sm:$0xf]
      %v3466 = vld [vmem:[%s374 + $0x28] sm:$0xf]
      %v3467 = vld [vmem:[%s374 + $0x2c] sm:$0xf]
      %v3468 = vld [vmem:[%s374 + $0x30] sm:$0xf]
      %v3469 = vld [vmem:[%s374 + $0x34] sm:$0xf]
      %v3470 = vld [vmem:[%s374 + $0x38] sm:$0xf]
      %v3471 = vld [vmem:[%s374 + $0x3c] sm:$0xf]
      %v3472 = vld [vmem:[%s374 + $0x40] sm:$0xf]
      %v3473 = vld [vmem:[%s374 + $0x44] sm:$0xf]
      %v3474 = vld [vmem:[%s374 + $0x48] sm:$0xf]
      %v3475 = vld [vmem:[%s374 + $0x4c] sm:$0xf]
      %v3476 = vld [vmem:[%s374 + $0x50] sm:$0xf]
      %v3477 = vld [vmem:[%s374 + $0x54] sm:$0xf]
      %v3478 = vld [vmem:[%s374 + $0x58] sm:$0xf]
      %v3479 = vld [vmem:[%s374 + $0x5c] sm:$0xf]
      %v3480 = vld [vmem:[%s374 + $0x60] sm:$0xf]
      %v3481 = vld [vmem:[%s374 + $0x64] sm:$0xf]
      %v3482 = vld [vmem:[%s374 + $0x68] sm:$0xf]
      %v3483 = vld [vmem:[%s374 + $0x6c] sm:$0xf]
      %v3484 = vld [vmem:[%s374 + $0x70] sm:$0xf]
      %v3485 = vld [vmem:[%s374 + $0x74] sm:$0xf]
      %v3486 = vld [vmem:[%s374 + $0x78] sm:$0xf]
      %v3487 = vld [vmem:[%s374 + $0x7c] sm:$0xf]
      %v3488 = vld [vmem:[%s8] sm:$0x3]
      %v3521 = vunpack.c.l.b16 %v3456
      %v3522 = vunpack.c.l.b16 %v3457
      %v3523 = vunpack.c.l.b16 %v3458
      %v3524 = vunpack.c.l.b16 %v3459
      %v3525 = vunpack.c.l.b16 %v3460
      %v3526 = vunpack.c.l.b16 %v3461
      %v3527 = vunpack.c.l.b16 %v3462
      %v3528 = vunpack.c.l.b16 %v3463
      %v3529 = vunpack.c.l.b16 %v3464
      %v3530 = vunpack.c.l.b16 %v3465
      %v3531 = vunpack.c.l.b16 %v3466
      %v3532 = vunpack.c.l.b16 %v3467
      %v3533 = vunpack.c.l.b16 %v3468
      %v3534 = vunpack.c.l.b16 %v3469
      %v3535 = vunpack.c.l.b16 %v3470
      %v3536 = vunpack.c.l.b16 %v3471
      %v3537 = vunpack.c.l.b16 %v3472
      %v3538 = vunpack.c.l.b16 %v3473
      %v3539 = vunpack.c.l.b16 %v3474
      %v3540 = vunpack.c.l.b16 %v3475
      %v3541 = vunpack.c.l.b16 %v3476
      %v3542 = vunpack.c.l.b16 %v3477
      %v3543 = vunpack.c.l.b16 %v3478
      %v3544 = vunpack.c.l.b16 %v3479
      %v3545 = vunpack.c.l.b16 %v3480
      %v3546 = vunpack.c.l.b16 %v3481
      %v3547 = vunpack.c.l.b16 %v3482
      %v3548 = vunpack.c.l.b16 %v3483
      %v3549 = vunpack.c.l.b16 %v3484
      %v3550 = vunpack.c.l.b16 %v3485
      %v3551 = vunpack.c.l.b16 %v3486
      %v3552 = vunpack.c.l.b16 %v3487
      %v3553 = vpack.c.b16 %v3522, %v3521
      %v3554 = vpack.c.b16 %v3524, %v3523
      %v3555 = vpack.c.b16 %v3526, %v3525
      %v3556 = vpack.c.b16 %v3528, %v3527
      %v3557 = vpack.c.b16 %v3530, %v3529
      %v3558 = vpack.c.b16 %v3532, %v3531
      %v3559 = vpack.c.b16 %v3534, %v3533
      %v3560 = vpack.c.b16 %v3536, %v3535
      %v3561 = vpack.c.b16 %v3538, %v3537
      %v3562 = vpack.c.b16 %v3540, %v3539
      %v3563 = vpack.c.b16 %v3542, %v3541
      %v3564 = vpack.c.b16 %v3544, %v3543
      %v3565 = vpack.c.b16 %v3546, %v3545
      %v3566 = vpack.c.b16 %v3548, %v3547
      %v3567 = vpack.c.b16 %v3550, %v3549
      %v3568 = vpack.c.b16 %v3552, %v3551
      %v3570 = vsel %vm646, %v3553, 0
      %v3573 = vsel %vm646, %v3554, 0
      %v3576 = vsel %vm646, %v3555, 0
      %v3579 = vsel %vm646, %v3556, 0
      %v3582 = vsel %vm646, %v3557, 0
      %v3585 = vsel %vm646, %v3558, 0
      %v3588 = vsel %vm646, %v3559, 0
      %v3591 = vsel %vm646, %v3560, 0
      %v3594 = vsel %vm646, %v3561, 0
      %v3597 = vsel %vm646, %v3562, 0
      %v3600 = vsel %vm646, %v3563, 0
      %v3603 = vsel %vm646, %v3564, 0
      %v3606 = vsel %vm646, %v3565, 0
      %v3609 = vsel %vm646, %v3566, 0
      %v3612 = vsel %vm646, %v3567, 0
      %v3615 = vsel %vm646, %v3568, 0
      %v3618 = vsel %vm734, %v3488, 0
      %3620 = vmatprep.subr.bf16.mxu0 0
      %3621 = vmatpush1.bf16.msra.mxu0 %v3618
      %3622 = vmatprep.subr.bf16.mxu0 0
      %3623 = vmatpush1.bf16.msra.mxu0 0
      %3624 = vmatprep.subr.bf16.mxu0 0
      %3625 = vmatpush1.bf16.msra.mxu0 0
      %3626 = vmatprep.subr.bf16.mxu0 0
      %3627 = vmatpush1.bf16.msra.mxu0 0
      %3628 = vmatprep.subr.bf16.mxu0 0
      %3629 = vmatpush1.bf16.msra.mxu0 0
      %3630 = vmatprep.subr.bf16.mxu0 0
      %3631 = vmatpush1.bf16.msra.mxu0 0
      %3632 = vmatprep.subr.bf16.mxu0 0
      %3633 = vmatpush1.bf16.msra.mxu0 0
      %3634 = vmatprep.subr.bf16.mxu0 0
      %3635 = vmatpush1.bf16.msra.mxu0 0
      %3636 = vmatprep.subr.bf16.mxu0 0
      %3637 = vmatpush1.bf16.msra.mxu0 0
      %3638 = vmatprep.subr.bf16.mxu0 0
      %3639 = vmatpush1.bf16.msra.mxu0 0
      %3640 = vmatprep.subr.bf16.mxu0 0
      %3641 = vmatpush1.bf16.msra.mxu0 0
      %3642 = vmatprep.subr.bf16.mxu0 0
      %3643 = vmatpush1.bf16.msra.mxu0 0
      %3644 = vmatprep.subr.bf16.mxu0 0
      %3645 = vmatpush1.bf16.msra.mxu0 0
      %3646 = vmatprep.subr.bf16.mxu0 0
      %3647 = vmatpush1.bf16.msra.mxu0 0
      %3648 = vmatprep.subr.bf16.mxu0 0
      %3649 = vmatpush1.bf16.msra.mxu0 0
      %3650 = vmatprep.subr.bf16.mxu0 0
      %3651 = vmatpush1.bf16.msra.mxu0 0
      %3652 = vmatprep.mubr.bf16.mxu0 0
      %3653 = vmatmul.mubr.bf16.gmra.mrb[0].mxu0 %v3570
      %v3654 = vpop.f32.mrb[0].mxu0
      %v3655 = vadd.f32 0.0, %v3654
      %v3656 = vpop.f32.mrb[0].mxu0
      %v3657 = vpop.f32.mrb[0].mxu0
      %v3658 = vadd.f32 0.0, %v3657
      %v3659 = vpop.f32.mrb[0].mxu0
      %3660 = vmatprep.mubr.bf16.mxu0 0
      %3661 = vmatmul.mubr.bf16.gmra.mrb[0].mxu0 %v3573
      %v3662 = vpop.f32.mrb[0].mxu0
      %v3663 = vadd.f32 0.0, %v3662
      %v3664 = vpop.f32.mrb[0].mxu0
      %v3665 = vpop.f32.mrb[0].mxu0
      %v3666 = vadd.f32 0.0, %v3665
      %v3667 = vpop.f32.mrb[0].mxu0
      %3668 = vmatprep.mubr.bf16.mxu0 0
      %3669 = vmatmul.mubr.bf16.gmra.mrb[0].mxu0 %v3576
      %v3670 = vpop.f32.mrb[0].mxu0
      %v3671 = vadd.f32 0.0, %v3670
      %v3672 = vpop.f32.mrb[0].mxu0
      %v3673 = vpop.f32.mrb[0].mxu0
      %v3674 = vadd.f32 0.0, %v3673
      %v3675 = vpop.f32.mrb[0].mxu0
      %3676 = vmatprep.mubr.bf16.mxu0 0
      %3677 = vmatmul.mubr.bf16.gmra.mrb[0].mxu0 %v3579
      %v3678 = vpop.f32.mrb[0].mxu0
      %v3679 = vadd.f32 0.0, %v3678
      %v3680 = vpop.f32.mrb[0].mxu0
      %v3681 = vpop.f32.mrb[0].mxu0
      %v3682 = vadd.f32 0.0, %v3681
      %v3683 = vpop.f32.mrb[0].mxu0
      %3684 = vmatprep.mubr.bf16.mxu0 0
      %3685 = vmatmul.mubr.bf16.gmra.mrb[0].mxu0 %v3582
      %v3686 = vpop.f32.mrb[0].mxu0
      %v3687 = vadd.f32 0.0, %v3686
      %v3688 = vpop.f32.mrb[0].mxu0
      %v3689 = vpop.f32.mrb[0].mxu0
      %v3690 = vadd.f32 0.0, %v3689
      %v3691 = vpop.f32.mrb[0].mxu0
      %3692 = vmatprep.mubr.bf16.mxu0 0
      %3693 = vmatmul.mubr.bf16.gmra.mrb[0].mxu0 %v3585
      %v3694 = vpop.f32.mrb[0].mxu0
      %v3695 = vadd.f32 0.0, %v3694
      %v3696 = vpop.f32.mrb[0].mxu0
      %v3697 = vpop.f32.mrb[0].mxu0
      %v3698 = vadd.f32 0.0, %v3697
      %v3699 = vpop.f32.mrb[0].mxu0
      %3700 = vmatprep.mubr.bf16.mxu0 0
      %3701 = vmatmul.mubr.bf16.gmra.mrb[0].mxu0 %v3588
      %v3702 = vpop.f32.mrb[0].mxu0
      %v3703 = vadd.f32 0.0, %v3702
      %v3704 = vpop.f32.mrb[0].mxu0
      %v3705 = vpop.f32.mrb[0].mxu0
      %v3706 = vadd.f32 0.0, %v3705
      %v3707 = vpop.f32.mrb[0].mxu0
      %3708 = vmatprep.mubr.bf16.mxu0 0
      %3709 = vmatmul.mubr.bf16.gmra.mrb[0].mxu0 %v3591
      %v3710 = vpop.f32.mrb[0].mxu0
      %v3711 = vadd.f32 0.0, %v3710
      %v3712 = vpop.f32.mrb[0].mxu0
      %v3713 = vpop.f32.mrb[0].mxu0
      %v3714 = vadd.f32 0.0, %v3713
      %v3715 = vpop.f32.mrb[0].mxu0
      %3716 = vmatprep.mubr.bf16.mxu0 0
      %3717 = vmatmul.mubr.bf16.gmra.mrb[0].mxu0 %v3594
      %v3718 = vpop.f32.mrb[0].mxu0
      %v3719 = vadd.f32 0.0, %v3718
      %v3720 = vpop.f32.mrb[0].mxu0
      %v3721 = vpop.f32.mrb[0].mxu0
      %v3722 = vadd.f32 0.0, %v3721
      %v3723 = vpop.f32.mrb[0].mxu0
      %3724 = vmatprep.mubr.bf16.mxu0 0
      %3725 = vmatmul.mubr.bf16.gmra.mrb[0].mxu0 %v3597
      %v3726 = vpop.f32.mrb[0].mxu0
      %v3727 = vadd.f32 0.0, %v3726
      %v3728 = vpop.f32.mrb[0].mxu0
      %v3729 = vpop.f32.mrb[0].mxu0
      %v3730 = vadd.f32 0.0, %v3729
      %v3731 = vpop.f32.mrb[0].mxu0
      %3732 = vmatprep.mubr.bf16.mxu0 0
      %3733 = vmatmul.mubr.bf16.gmra.mrb[0].mxu0 %v3600
      %v3734 = vpop.f32.mrb[0].mxu0
      %v3735 = vadd.f32 0.0, %v3734
      %v3736 = vpop.f32.mrb[0].mxu0
      %v3737 = vpop.f32.mrb[0].mxu0
      %v3738 = vadd.f32 0.0, %v3737
      %v3739 = vpop.f32.mrb[0].mxu0
      %3740 = vmatprep.mubr.bf16.mxu0 0
      %3741 = vmatmul.mubr.bf16.gmra.mrb[0].mxu0 %v3603
      %v3742 = vpop.f32.mrb[0].mxu0
      %v3743 = vadd.f32 0.0, %v3742
      %v3744 = vpop.f32.mrb[0].mxu0
      %v3745 = vpop.f32.mrb[0].mxu0
      %v3746 = vadd.f32 0.0, %v3745
      %v3747 = vpop.f32.mrb[0].mxu0
      %3748 = vmatprep.mubr.bf16.mxu0 0
      %3749 = vmatmul.mubr.bf16.gmra.mrb[0].mxu0 %v3606
      %v3750 = vpop.f32.mrb[0].mxu0
      %v3751 = vadd.f32 0.0, %v3750
      %v3752 = vpop.f32.mrb[0].mxu0
      %v3753 = vpop.f32.mrb[0].mxu0
      %v3754 = vadd.f32 0.0, %v3753
      %v3755 = vpop.f32.mrb[0].mxu0
      %3756 = vmatprep.mubr.bf16.mxu0 0
      %3757 = vmatmul.mubr.bf16.gmra.mrb[0].mxu0 %v3609
      %v3758 = vpop.f32.mrb[0].mxu0
      %v3759 = vadd.f32 0.0, %v3758
      %v3760 = vpop.f32.mrb[0].mxu0
      %v3761 = vpop.f32.mrb[0].mxu0
      %v3762 = vadd.f32 0.0, %v3761
      %v3763 = vpop.f32.mrb[0].mxu0
      %3764 = vmatprep.mubr.bf16.mxu0 0
      %3765 = vmatmul.mubr.bf16.gmra.mrb[0].mxu0 %v3612
      %v3766 = vpop.f32.mrb[0].mxu0
      %v3767 = vadd.f32 0.0, %v3766
      %v3768 = vpop.f32.mrb[0].mxu0
      %v3769 = vpop.f32.mrb[0].mxu0
      %v3770 = vadd.f32 0.0, %v3769
      %v3771 = vpop.f32.mrb[0].mxu0
      %3772 = vmatprep.mubr.bf16.mxu0 0
      %3773 = vmatmul.mubr.bf16.gmra.mrb[0].mxu0 %v3615
      %v3774 = vpop.f32.mrb[0].mxu0
      %v3775 = vadd.f32 0.0, %v3774
      %v3776 = vpop.f32.mrb[0].mxu0
      %v3777 = vpop.f32.mrb[0].mxu0
      %v3778 = vadd.f32 0.0, %v3777
      %v3779 = vpop.f32.mrb[0].mxu0
      %3780 = vdwg.mxu0
      %v3782 = vsel %vm646, %v3439, 0
      %v3785 = vsel %vm646, %v3440, 0
      %v3788 = vsel %vm646, %v3441, 0
      %v3791 = vsel %vm646, %v3442, 0
      %v3794 = vsel %vm646, %v3443, 0
      %v3797 = vsel %vm646, %v3444, 0
      %v3800 = vsel %vm646, %v3445, 0
      %v3803 = vsel %vm646, %v3446, 0
      %v3806 = vsel %vm646, %v3447, 0
      %v3809 = vsel %vm646, %v3448, 0
      %v3812 = vsel %vm646, %v3449, 0
      %v3815 = vsel %vm646, %v3450, 0
      %v3818 = vsel %vm646, %v3451, 0
      %v3821 = vsel %vm646, %v3452, 0
      %v3824 = vsel %vm646, %v3453, 0
      %v3827 = vsel %vm646, %v3454, 0
      %v3830 = vsel %vm734, %v3455, 0
      %3832 = vmatprep.subr.bf16.mxu0 0
      %3833 = vmatpush1.bf16.msra.mxu0 %v3830
      %3834 = vmatprep.subr.bf16.mxu0 0
      %3835 = vmatpush1.bf16.msra.mxu0 0
      %3836 = vmatprep.subr.bf16.mxu0 0
      %3837 = vmatpush1.bf16.msra.mxu0 0
      %3838 = vmatprep.subr.bf16.mxu0 0
      %3839 = vmatpush1.bf16.msra.mxu0 0
      %3840 = vmatprep.subr.bf16.mxu0 0
      %3841 = vmatpush1.bf16.msra.mxu0 0
      %3842 = vmatprep.subr.bf16.mxu0 0
      %3843 = vmatpush1.bf16.msra.mxu0 0
      %3844 = vmatprep.subr.bf16.mxu0 0
      %3845 = vmatpush1.bf16.msra.mxu0 0
      %3846 = vmatprep.subr.bf16.mxu0 0
      %3847 = vmatpush1.bf16.msra.mxu0 0
      %3848 = vmatprep.subr.bf16.mxu0 0
      %3849 = vmatpush1.bf16.msra.mxu0 0
      %3850 = vmatprep.subr.bf16.mxu0 0
      %3851 = vmatpush1.bf16.msra.mxu0 0
      %3852 = vmatprep.subr.bf16.mxu0 0
      %3853 = vmatpush1.bf16.msra.mxu0 0
      %3854 = vmatprep.subr.bf16.mxu0 0
      %3855 = vmatpush1.bf16.msra.mxu0 0
      %3856 = vmatprep.subr.bf16.mxu0 0
      %3857 = vmatpush1.bf16.msra.mxu0 0
      %3858 = vmatprep.subr.bf16.mxu0 0
      %3859 = vmatpush1.bf16.msra.mxu0 0
      %3860 = vmatprep.subr.bf16.mxu0 0
      %3861 = vmatpush1.bf16.msra.mxu0 0
      %3862 = vmatprep.subr.bf16.mxu0 0
      %3863 = vmatpush1.bf16.msra.mxu0 0
      %3864 = vmatprep.mubr.bf16.mxu0 0
      %3865 = vmatmul.mubr.bf16.gmra.mrb[0].mxu0 %v3782
      %v3866 = vpop.f32.mrb[0].mxu0
      %v3867 = vadd.f32 %v3655, %v3866
      %v3868 = vpop.f32.mrb[0].mxu0
      %v3869 = vpop.f32.mrb[0].mxu0
      %v3870 = vadd.f32 %v3658, %v3869
      %v3871 = vpop.f32.mrb[0].mxu0
      %3872 = vmatprep.mubr.bf16.mxu0 0
      %3873 = vmatmul.mubr.bf16.gmra.mrb[0].mxu0 %v3785
      %v3874 = vpop.f32.mrb[0].mxu0
      %v3875 = vadd.f32 %v3663, %v3874
      %v3876 = vpop.f32.mrb[0].mxu0
      %v3877 = vpop.f32.mrb[0].mxu0
      %v3878 = vadd.f32 %v3666, %v3877
      %v3879 = vpop.f32.mrb[0].mxu0
      %3880 = vmatprep.mubr.bf16.mxu0 0
      %3881 = vmatmul.mubr.bf16.gmra.mrb[0].mxu0 %v3788
      %v3882 = vpop.f32.mrb[0].mxu0
      %v3883 = vadd.f32 %v3671, %v3882
      %v3884 = vpop.f32.mrb[0].mxu0
      %v3885 = vpop.f32.mrb[0].mxu0
      %v3886 = vadd.f32 %v3674, %v3885
      %v3887 = vpop.f32.mrb[0].mxu0
      %3888 = vmatprep.mubr.bf16.mxu0 0
      %3889 = vmatmul.mubr.bf16.gmra.mrb[0].mxu0 %v3791
      %v3890 = vpop.f32.mrb[0].mxu0
      %v3891 = vadd.f32 %v3679, %v3890
      %v3892 = vpop.f32.mrb[0].mxu0
      %v3893 = vpop.f32.mrb[0].mxu0
      %v3894 = vadd.f32 %v3682, %v3893
      %v3895 = vpop.f32.mrb[0].mxu0
      %3896 = vmatprep.mubr.bf16.mxu0 0
      %3897 = vmatmul.mubr.bf16.gmra.mrb[0].mxu0 %v3794
      %v3898 = vpop.f32.mrb[0].mxu0
      %v3899 = vadd.f32 %v3687, %v3898
      %v3900 = vpop.f32.mrb[0].mxu0
      %v3901 = vpop.f32.mrb[0].mxu0
      %v3902 = vadd.f32 %v3690, %v3901
      %v3903 = vpop.f32.mrb[0].mxu0
      %3904 = vmatprep.mubr.bf16.mxu0 0
      %3905 = vmatmul.mubr.bf16.gmra.mrb[0].mxu0 %v3797
      %v3906 = vpop.f32.mrb[0].mxu0
      %v3907 = vadd.f32 %v3695, %v3906
      %v3908 = vpop.f32.mrb[0].mxu0
      %v3909 = vpop.f32.mrb[0].mxu0
      %v3910 = vadd.f32 %v3698, %v3909
      %v3911 = vpop.f32.mrb[0].mxu0
      %3912 = vmatprep.mubr.bf16.mxu0 0
      %3913 = vmatmul.mubr.bf16.gmra.mrb[0].mxu0 %v3800
      %v3914 = vpop.f32.mrb[0].mxu0
      %v3915 = vadd.f32 %v3703, %v3914
      %v3916 = vpop.f32.mrb[0].mxu0
      %v3917 = vpop.f32.mrb[0].mxu0
      %v3918 = vadd.f32 %v3706, %v3917
      %v3919 = vpop.f32.mrb[0].mxu0
      %3920 = vmatprep.mubr.bf16.mxu0 0
      %3921 = vmatmul.mubr.bf16.gmra.mrb[0].mxu0 %v3803
      %v3922 = vpop.f32.mrb[0].mxu0
      %v3923 = vadd.f32 %v3711, %v3922
      %v3924 = vpop.f32.mrb[0].mxu0
      %v3925 = vpop.f32.mrb[0].mxu0
      %v3926 = vadd.f32 %v3714, %v3925
      %v3927 = vpop.f32.mrb[0].mxu0
      %3928 = vmatprep.mubr.bf16.mxu0 0
      %3929 = vmatmul.mubr.bf16.gmra.mrb[0].mxu0 %v3806
      %v3930 = vpop.f32.mrb[0].mxu0
      %v3931 = vadd.f32 %v3719, %v3930
      %v3932 = vpop.f32.mrb[0].mxu0
      %v3933 = vpop.f32.mrb[0].mxu0
      %v3934 = vadd.f32 %v3722, %v3933
      %v3935 = vpop.f32.mrb[0].mxu0
      %3936 = vmatprep.mubr.bf16.mxu0 0
      %3937 = vmatmul.mubr.bf16.gmra.mrb[0].mxu0 %v3809
      %v3938 = vpop.f32.mrb[0].mxu0
      %v3939 = vadd.f32 %v3727, %v3938
      %v3940 = vpop.f32.mrb[0].mxu0
      %v3941 = vpop.f32.mrb[0].mxu0
      %v3942 = vadd.f32 %v3730, %v3941
      %v3943 = vpop.f32.mrb[0].mxu0
      %3944 = vmatprep.mubr.bf16.mxu0 0
      %3945 = vmatmul.mubr.bf16.gmra.mrb[0].mxu0 %v3812
      %v3946 = vpop.f32.mrb[0].mxu0
      %v3947 = vadd.f32 %v3735, %v3946
      %v3948 = vpop.f32.mrb[0].mxu0
      %v3949 = vpop.f32.mrb[0].mxu0
      %v3950 = vadd.f32 %v3738, %v3949
      %v3951 = vpop.f32.mrb[0].mxu0
      %3952 = vmatprep.mubr.bf16.mxu0 0
      %3953 = vmatmul.mubr.bf16.gmra.mrb[0].mxu0 %v3815
      %v3954 = vpop.f32.mrb[0].mxu0
      %v3955 = vadd.f32 %v3743, %v3954
      %v3956 = vpop.f32.mrb[0].mxu0
      %v3957 = vpop.f32.mrb[0].mxu0
      %v3958 = vadd.f32 %v3746, %v3957
      %v3959 = vpop.f32.mrb[0].mxu0
      %3960 = vmatprep.mubr.bf16.mxu0 0
      %3961 = vmatmul.mubr.bf16.gmra.mrb[0].mxu0 %v3818
      %v3962 = vpop.f32.mrb[0].mxu0
      %v3963 = vadd.f32 %v3751, %v3962
      %v3964 = vpop.f32.mrb[0].mxu0
      %v3965 = vpop.f32.mrb[0].mxu0
      %v3966 = vadd.f32 %v3754, %v3965
      %v3967 = vpop.f32.mrb[0].mxu0
      %3968 = vmatprep.mubr.bf16.mxu0 0
      %3969 = vmatmul.mubr.bf16.gmra.mrb[0].mxu0 %v3821
      %v3970 = vpop.f32.mrb[0].mxu0
      %v3971 = vadd.f32 %v3759, %v3970
      %v3972 = vpop.f32.mrb[0].mxu0
      %v3973 = vpop.f32.mrb[0].mxu0
      %v3974 = vadd.f32 %v3762, %v3973
      %v3975 = vpop.f32.mrb[0].mxu0
      %3976 = vmatprep.mubr.bf16.mxu0 0
      %3977 = vmatmul.mubr.bf16.gmra.mrb[0].mxu0 %v3824
      %v3978 = vpop.f32.mrb[0].mxu0
      %v3979 = vadd.f32 %v3767, %v3978
      %v3980 = vpop.f32.mrb[0].mxu0
      %v3981 = vpop.f32.mrb[0].mxu0
      %v3982 = vadd.f32 %v3770, %v3981
      %v3983 = vpop.f32.mrb[0].mxu0
      %3984 = vmatprep.mubr.bf16.mxu0 0
      %3985 = vmatmul.mubr.bf16.gmra.mrb[0].mxu0 %v3827
      %v3986 = vpop.f32.mrb[0].mxu0
      %v3987 = vadd.f32 %v3775, %v3986
      %v3988 = vpop.f32.mrb[0].mxu0
      %v3989 = vpop.f32.mrb[0].mxu0
      %v3990 = vadd.f32 %v3778, %v3989
      %v3991 = vpop.f32.mrb[0].mxu0
      %3992 = vdwg.mxu0
      %v3993 = vld [vmem:[%s9] sm:$0x1]
      %v3995 = vlaneseq
      %v3996 = vshrl.u32 %v3995, 7
      %v3997 = vsub.s32 0, %v3996
      %v3998 = vrot.slane %v3993, %v3997
      %v4000 = vadd.f32 %v3867, %v3998
      %v4001 = vadd.f32 %v3870, %v3998
      %v4002 = vadd.f32 %v3875, %v3998
      %v4003 = vadd.f32 %v3878, %v3998
      %v4004 = vadd.f32 %v3883, %v3998
      %v4005 = vadd.f32 %v3886, %v3998
      %v4006 = vadd.f32 %v3891, %v3998
      %v4007 = vadd.f32 %v3894, %v3998
      %v4008 = vadd.f32 %v3899, %v3998
      %v4009 = vadd.f32 %v3902, %v3998
      %v4010 = vadd.f32 %v3907, %v3998
      %v4011 = vadd.f32 %v3910, %v3998
      %v4012 = vadd.f32 %v3915, %v3998
      %v4013 = vadd.f32 %v3918, %v3998
      %v4014 = vadd.f32 %v3923, %v3998
      %v4015 = vadd.f32 %v3926, %v3998
      %v4016 = vadd.f32 %v3931, %v3998
      %v4017 = vadd.f32 %v3934, %v3998
      %v4018 = vadd.f32 %v3939, %v3998
      %v4019 = vadd.f32 %v3942, %v3998
      %v4020 = vadd.f32 %v3947, %v3998
      %v4021 = vadd.f32 %v3950, %v3998
      %v4022 = vadd.f32 %v3955, %v3998
      %v4023 = vadd.f32 %v3958, %v3998
      %v4024 = vadd.f32 %v3963, %v3998
      %v4025 = vadd.f32 %v3966, %v3998
      %v4026 = vadd.f32 %v3971, %v3998
      %v4027 = vadd.f32 %v3974, %v3998
      %v4028 = vadd.f32 %v3979, %v3998
      %v4029 = vadd.f32 %v3982, %v3998
      %v4030 = vadd.f32 %v3987, %v3998
      %v4031 = vadd.f32 %v3990, %v3998
      %v4032 = vmax.f32 %v4000, 0.0
      %v4033 = vmax.f32 %v4001, 0.0
      %v4034 = vmax.f32 %v4002, 0.0
      %v4035 = vmax.f32 %v4003, 0.0
      %v4036 = vmax.f32 %v4004, 0.0
      %v4037 = vmax.f32 %v4005, 0.0
      %v4038 = vmax.f32 %v4006, 0.0
      %v4039 = vmax.f32 %v4007, 0.0
      %v4040 = vmax.f32 %v4008, 0.0
      %v4041 = vmax.f32 %v4009, 0.0
      %v4042 = vmax.f32 %v4010, 0.0
      %v4043 = vmax.f32 %v4011, 0.0
      %v4044 = vmax.f32 %v4012, 0.0
      %v4045 = vmax.f32 %v4013, 0.0
      %v4046 = vmax.f32 %v4014, 0.0
      %v4047 = vmax.f32 %v4015, 0.0
      %v4048 = vmax.f32 %v4016, 0.0
      %v4049 = vmax.f32 %v4017, 0.0
      %v4050 = vmax.f32 %v4018, 0.0
      %v4051 = vmax.f32 %v4019, 0.0
      %v4052 = vmax.f32 %v4020, 0.0
      %v4053 = vmax.f32 %v4021, 0.0
      %v4054 = vmax.f32 %v4022, 0.0
      %v4055 = vmax.f32 %v4023, 0.0
      %v4056 = vmax.f32 %v4024, 0.0
      %v4057 = vmax.f32 %v4025, 0.0
      %v4058 = vmax.f32 %v4026, 0.0
      %v4059 = vmax.f32 %v4027, 0.0
      %v4060 = vmax.f32 %v4028, 0.0
      %v4061 = vmax.f32 %v4029, 0.0
      %v4062 = vmax.f32 %v4030, 0.0
      %v4063 = vmax.f32 %v4031, 0.0
      %vm4064 = vcmask 130048
      %4065 = vst.msk [vmem:[%s379] sm:$0xff] %vm4064, %v4032
      %4066 = vst.msk [vmem:[%s379 + $0x8] sm:$0xff] %vm4064, %v4033
      %4067 = vst.msk [vmem:[%s379 + $0x10] sm:$0xff] %vm4064, %v4034
      %4068 = vst.msk [vmem:[%s379 + $0x18] sm:$0xff] %vm4064, %v4035
      %4069 = vst.msk [vmem:[%s379 + $0x20] sm:$0xff] %vm4064, %v4036
      %4070 = vst.msk [vmem:[%s379 + $0x28] sm:$0xff] %vm4064, %v4037
      %4071 = vst.msk [vmem:[%s379 + $0x30] sm:$0xff] %vm4064, %v4038
      %4072 = vst.msk [vmem:[%s379 + $0x38] sm:$0xff] %vm4064, %v4039
      %4073 = vst.msk [vmem:[%s379 + $0x40] sm:$0xff] %vm4064, %v4040
      %4074 = vst.msk [vmem:[%s379 + $0x48] sm:$0xff] %vm4064, %v4041
      %4075 = vst.msk [vmem:[%s379 + $0x50] sm:$0xff] %vm4064, %v4042
      %4076 = vst.msk [vmem:[%s379 + $0x58] sm:$0xff] %vm4064, %v4043
      %4077 = vst.msk [vmem:[%s379 + $0x60] sm:$0xff] %vm4064, %v4044
      %4078 = vst.msk [vmem:[%s379 + $0x68] sm:$0xff] %vm4064, %v4045
      %4079 = vst.msk [vmem:[%s379 + $0x70] sm:$0xff] %vm4064, %v4046
      %4080 = vst.msk [vmem:[%s379 + $0x78] sm:$0xff] %vm4064, %v4047
      %4081 = vst.msk [vmem:[%s379 + $0x80] sm:$0xff] %vm4064, %v4048
      %4082 = vst.msk [vmem:[%s379 + $0x88] sm:$0xff] %vm4064, %v4049
      %4083 = vst.msk [vmem:[%s379 + $0x90] sm:$0xff] %vm4064, %v4050
      %4084 = vst.msk [vmem:[%s379 + $0x98] sm:$0xff] %vm4064, %v4051
      %4085 = vst.msk [vmem:[%s379 + $0xa0] sm:$0xff] %vm4064, %v4052
      %4086 = vst.msk [vmem:[%s379 + $0xa8] sm:$0xff] %vm4064, %v4053
      %4087 = vst.msk [vmem:[%s379 + $0xb0] sm:$0xff] %vm4064, %v4054
      %4088 = vst.msk [vmem:[%s379 + $0xb8] sm:$0xff] %vm4064, %v4055
      %4089 = vst.msk [vmem:[%s379 + $0xc0] sm:$0xff] %vm4064, %v4056
      %4090 = vst.msk [vmem:[%s379 + $0xc8] sm:$0xff] %vm4064, %v4057
      %4091 = vst.msk [vmem:[%s379 + $0xd0] sm:$0xff] %vm4064, %v4058
      %4092 = vst.msk [vmem:[%s379 + $0xd8] sm:$0xff] %vm4064, %v4059
      %4093 = vst.msk [vmem:[%s379 + $0xe0] sm:$0xff] %vm4064, %v4060
      %4094 = vst.msk [vmem:[%s379 + $0xe8] sm:$0xff] %vm4064, %v4061
      %4095 = vst.msk [vmem:[%s379 + $0xf0] sm:$0xff] %vm4064, %v4062
      %4096 = vst.msk [vmem:[%s379 + $0xf8] sm:$0xff] %vm4064, %v4063
      %p4097 = scmp.lt.s32.totalorder %s21, 1
      %s4098 = scalar_select %p4097, %s21, 1
      %s4099 = smul.addr %s4098, 32
      %s4100 = smul.addr %s4099, 8
      %s4101 = scalar_lea.vmem %s10, %s4100
      // Predicated region
      $region61: #{bottleneck_forward.1} parent=59 // pred_check
        %p4102 = pneg %p259
      $region62: #{bottleneck_forward.1} parent=59 // pred_check_branch
        %4104 = sbr.rel (%p4102) target = $region64
      $region63: #{bottleneck_forward.1} parent=59 // pred_region
        _
      $region64: #{bottleneck_forward.1} parent=59 // pred_fallthru
        _
    $region60: #{bottleneck_forward.1} parent=5 // pred_fallthru
      _
    %p4105 = scmp.le.s32.totalorder 2, %s16
    // Predicated region
    $region65: #{bottleneck_forward.1} parent=5 // pred_check
      %p4106 = pneg %p4105
    $region66: #{bottleneck_forward.1} parent=5 // pred_check_branch
      %4108 = sbr.rel (%p4106) target = $region68
    $region67: #{bottleneck_forward.1} parent=5 // pred_region
      %s4109 = ssub.s32 %s16, 2
      // Predicated region
      $region69: #{bottleneck_forward.1} parent=67 // pred_check
        %p4110 = pneg %p265
      $region70: #{bottleneck_forward.1} parent=67 // pred_check_branch
        %4112 = sbr.rel (%p4110) target = $region72
      $region71: #{bottleneck_forward.1} parent=67 // pred_region
        %p4113 = scmp.lt.s32.totalorder %s22, 1
        %s4114 = scalar_select %p4113, %s22, 1
        %s4115 = smul.addr %s4114, 32
        %s4116 = smul.addr %s4115, 8
        %s4117 = scalar_lea.vmem %s10, %s4116
      $region72: #{bottleneck_forward.1} parent=67 // pred_fallthru
        _
    $region68: #{bottleneck_forward.1} parent=5 // pred_fallthru
      _
  $region6: #{bottleneck_forward.1} parent=0 // loop_footer
    %s20 = sadd.s32 1, %s16
  $region7: #{bottleneck_forward.1} parent=0 // loop_footer_branch
    %15 = sbr.rel target = $region3
  $region8: #{bottleneck_forward.1} parent=0 // loop_exit
    _

</llo_original>
